<compile_context>
chip_gen: v7x
topology: tpu7x:2x2x1
jax: 0.10.0
libtpu: 0.0.40
codegen_flags: <defaults>
</compile_context>

<pallas_src>
import functools

import jax
import jax.numpy as jnp
from jax import lax
from jax.experimental import pallas as pl
from jax.experimental.pallas import tpu as pltpu

LRELU_SLOPE = 0.2  # matches the reference module


# ---------------------------------------------------------------------------
# VMEM budgeting (per generation: v5e/v6e 128 MiB physical, v7x 64 MiB)
# ---------------------------------------------------------------------------
@functools.lru_cache(maxsize=None)
def _vmem_limit_bytes():
    try:
        cap = pltpu.get_tpu_info().vmem_capacity_bytes
        return int(min(cap // 2, 64 * 1024 * 1024))
    except Exception:
        return 32 * 1024 * 1024


def _pick_cout_tile(K, Cin, Cout):
    """Weight-stationary: keep the full (K,Cin,Cout) bf16 panel resident when it
    fits a conservative slice of the VMEM budget; otherwise tile Cout."""
    budget = _vmem_limit_bytes() // 4
    if Cout % 128 != 0 or K * Cin * Cout * 2 <= budget:
        return Cout
    tn = Cout
    while tn > 128 and K * Cin * tn * 2 > budget:
        tn //= 2
    return tn if Cout % tn == 0 else Cout


# ---------------------------------------------------------------------------
# Input prep: conv zero-padding + phase packing (replaces im2col)
# ---------------------------------------------------------------------------
def _prep_x(x, K, stride, pad):
    """x: (N, H, Cin) -> phase-packed (N, Hq, stride*Cin), plus Hout.

    Packed row h' holds original padded rows [h'*stride, h'*stride + stride)
    channel-concatenated, so the tap-k window of the whole output block is the
    contiguous slice  rows [k//stride, k//stride + Hout) x lanes
    [(k%stride)*Cin, (k%stride+1)*Cin).  Every input element is stored once
    (no K-fold duplication); the reshape is a free row-major reshape in XLA.
    """
    N, H, Cin = x.shape
    Hp = H + 2 * pad
    Hout = (Hp - K) // stride + 1
    Hq = Hout + (K - 1) // stride
    Hpr = stride * Hq                      # rows actually needed by the taps
    right = max(0, Hpr - H - pad)
    xp = jnp.pad(x, ((0, 0), (pad, right), (0, 0)))
    xp = xp[:, :Hpr, :]                    # trailing rows past Hpr are never read
    return xp.reshape(N, Hq, stride * Cin), Hout


# ---------------------------------------------------------------------------
# Pallas kernel 1: one conv layer (layers 1-4), in-kernel tap accumulation
# ---------------------------------------------------------------------------
def _conv_layer_kernel_factory(K, stride, Cin, Hout, apply_input_act):
    """Per (batch, period-column) sequence: K shifted-window taps, each a small
    MXU dot (VPU outer product when Cin==1), f32 accumulation, bf16 pre-act out.
    leaky_relu of the previous layer's fmap is fused into the tap reads."""

    def kernel(x_ref, w_ref, b_ref, fmap_ref):
        acc = None
        for k in range(K):
            d, p = divmod(k, stride)
            win = x_ref[0, d:d + Hout, p * Cin:(p + 1) * Cin]       # (Hout, Cin)
            if apply_input_act:
                win = jnp.maximum(win, LRELU_SLOPE * win)           # leaky(prev fmap); pad rows stay 0
            if Cin == 1:
                # degenerate contraction: VPU outer product, keeps the MXU out of it
                t = win.astype(jnp.float32) * w_ref[k].astype(jnp.float32)
            else:
                t = jnp.dot(win, w_ref[k], preferred_element_type=jnp.float32)
            acc = t if acc is None else acc + t
        pre = acc + b_ref[...]                                      # (Hout, tn) f32
        fmap_ref[0] = pre.astype(fmap_ref.dtype)                    # pre-activation fmap (bf16)

    return kernel


def _conv_layer(x, w, b, K, stride, pad, apply_input_act):
    """x: (N, H, Cin) bf16; w: (K, Cin, Cout) bf16; b: (1, Cout) f32.
    Returns the pre-activation feature map (N, Hout, Cout) bf16."""
    N, _, Cin = x.shape
    Cout = w.shape[2]
    xr, Hout = _prep_x(x, K, stride, pad)
    Hq = xr.shape[1]
    tn = _pick_cout_tile(K, Cin, Cout)
    nj = Cout // tn
    # TODO(synk): for very long waveforms, the Cin=1 first layer's packed input
    # has a 3-lane last dim (lane-sparse VMEM tiles); pack H onto lanes there.
    kernel = _conv_layer_kernel_factory(K, stride, Cin, Hout, apply_input_act)
    return pl.pallas_call(
        kernel,
        out_shape=jax.ShapeDtypeStruct((N, Hout, Cout), jnp.bfloat16),
        grid_spec=pltpu.PrefetchScalarGridSpec(
            num_scalar_prefetch=0,
            grid=(N, nj),
            in_specs=[
                pl.BlockSpec((1, Hq, stride * Cin), lambda n, j: (n, 0, 0)),
                # weight / bias block indices are constant in n -> fetched once
                # per panel and kept VMEM-resident (weight-stationary).
                pl.BlockSpec((K, Cin, tn), lambda n, j: (0, 0, j)),
                pl.BlockSpec((1, tn), lambda n, j: (0, j)),
            ],
            out_specs=pl.BlockSpec((1, Hout, tn), lambda n, j: (n, 0, j)),
        ),
        compiler_params=pltpu.CompilerParams(
            dimension_semantics=("parallel", "parallel"),
            vmem_limit_bytes=_vmem_limit_bytes(),
        ),
    )(xr, w, b)


# ---------------------------------------------------------------------------
# Pallas kernel 2: layer 5 (stride 1) fused with conv_post (K=3, pad=1, Cout=1)
# ---------------------------------------------------------------------------
def _fused_last_kernel_factory(K5, Hout, Cin):
    def kernel(x_ref, w5_ref, b5_ref, wp_ref, bp_ref, fmap_ref, post_ref):
        # ---- conv layer 5 ('same' zero padding already baked into x) ----
        acc = None
        for k in range(K5):
            win = x_ref[0, k:k + Hout, :]                           # (Hout, Cin) bf16
            win = jnp.maximum(win, LRELU_SLOPE * win)               # leaky(layer-4 fmap)
            t = jnp.dot(win, w5_ref[k], preferred_element_type=jnp.float32)
            acc = t if acc is None else acc + t
        pre = acc + b5_ref[...]                                     # (Hout, Cout) f32
        fmap_ref[0] = pre.astype(fmap_ref.dtype)                    # pre-activation fmap
        # ---- conv_post fused (no HBM round-trip of the widest activation) ----
        a = jnp.maximum(pre, LRELU_SLOPE * pre)                     # (Hout, Cout) f32
        # Cout=1 output: VPU multiply + lane reduction, one per tap (no MXU lane waste)
        taps = [jnp.sum(a * wp_ref[j], axis=-1, keepdims=True) for j in range(3)]
        post_ref[0] = taps[1] + bp_ref[...]                         # centre tap + bias
        if Hout > 1:                                                # shifted taps; OOB rows are zero pad
            post_ref[0, 1:, :] = post_ref[0, 1:, :] + taps[0][:Hout - 1, :]
            post_ref[0, :Hout - 1, :] = post_ref[0, :Hout - 1, :] + taps[2][1:, :]

    return kernel


def _fused_last_layers(x, w5, b5, wp, bp, K5, pad5):
    """x: (N, H, Cin) bf16 (layer-4 fmap).  Returns (layer-5 fmap bf16, conv_post f32)."""
    N, _, Cin = x.shape
    Cout = w5.shape[2]
    xr, Hout = _prep_x(x, K5, 1, pad5)      # stride 1: phase packing is the identity
    Hq = xr.shape[1]
    # TODO(synk): if K5*Cin*Cout bf16 ever exceeds the VMEM budget, tile Cout and
    # turn the conv_post accumulation into a reduction grid axis.
    kernel = _fused_last_kernel_factory(K5, Hout, Cin)
    fmap, post = pl.pallas_call(
        kernel,
        out_shape=(
            jax.ShapeDtypeStruct((N, Hout, Cout), jnp.bfloat16),
            jax.ShapeDtypeStruct((N, Hout, 1), jnp.float32),
        ),
        grid_spec=pltpu.PrefetchScalarGridSpec(
            num_scalar_prefetch=0,
            grid=(N,),
            in_specs=[
                pl.BlockSpec((1, Hq, Cin), lambda n: (n, 0, 0)),
                pl.BlockSpec((K5, Cin, Cout), lambda n: (0, 0, 0)),
                pl.BlockSpec((1, Cout), lambda n: (0, 0)),
                pl.BlockSpec((3, 1, Cout), lambda n: (0, 0, 0)),
                pl.BlockSpec((1, 1), lambda n: (0, 0)),
            ],
            out_specs=(
                pl.BlockSpec((1, Hout, Cout), lambda n: (n, 0, 0)),
                pl.BlockSpec((1, Hout, 1), lambda n: (n, 0, 0)),
            ),
        ),
        compiler_params=pltpu.CompilerParams(
            dimension_semantics=("parallel",),
            vmem_limit_bytes=_vmem_limit_bytes(),
        ),
    )(xr, w5, b5, wp, bp)
    return fmap, post


# ---------------------------------------------------------------------------
# DiscriminatorP / MultiPeriodDiscriminator forward (jitted per period)
# ---------------------------------------------------------------------------
def _to_nchw(y, b, period):
    # (b*period, Hout, C) -> (b, C, Hout, period)   (torch fmap layout)
    N, Hout, C = y.shape
    return jnp.transpose(y.reshape(b, period, Hout, C), (0, 3, 2, 1))


@functools.partial(jax.jit, static_argnums=(0, 1))
def _disc_p_forward(period, layer_meta, y, conv_ws, conv_bs, post_w, post_b):
    b, c, t = y.shape
    if t % period != 0:
        n_pad = period - t % period
        y = jnp.pad(y, ((0, 0), (0, 0), (0, n_pad)), mode="reflect")
        t = t + n_pad
    # NCHW view (b, 1, t//period, period) -> per period-column sequences
    x = y.reshape(b, c, t // period, period)
    xk = jnp.transpose(x, (0, 3, 2, 1)).reshape(b * period, t // period, c)
    xk = xk.astype(jnp.bfloat16)

    fmap = []
    n_layers = len(conv_ws)
    for li in range(n_layers - 1):                       # convs 1..4
        K, stride, pad = layer_meta[li]
        fm = _conv_layer(xk, conv_ws[li], conv_bs[li], K, stride, pad,
                         apply_input_act=(li > 0))
        # spec: fmap.append(conv_out) BEFORE leaky_relu -> pre-activation fmap
        fmap.append(_to_nchw(fm, b, period))
        xk = fm                                          # leaky_relu fused into next kernel
    K5, _, p5 = layer_meta[n_layers - 1]                 # conv 5 (stride 1) + conv_post fused
    fm5, post = _fused_last_layers(xk, conv_ws[-1], conv_bs[-1], post_w, post_b, K5, p5)
    fmap.append(_to_nchw(fm5, b, period))
    # spec: conv_post output is NOT appended to fmap and gets no activation.
    # torch.flatten(x, 1, -1) on (b, 1, Hl, period): index = h*period + w
    Hl = post.shape[1]
    out = jnp.transpose(post.reshape(b, period, Hl), (0, 2, 1)).reshape(b, Hl * period)
    return out, fmap


def multi_period_discriminator_forward(y, all_params, periods):
    outputs, fmaps = [], []
    for p, params in zip(periods, all_params):
        o, f = _disc_p_forward(
            p, params["meta"], y,
            params["conv_ws"], params["conv_bs"],
            params["post_w"], params["post_b"],
        )
        outputs.append(o)
        fmaps.append(f)
    return outputs, fmaps


# ---------------------------------------------------------------------------
# Deterministic parameter init (shapes follow DiscriminatorP.__init__)
# ---------------------------------------------------------------------------
def init_disc_p_params(key, ch=32, max_ch=1024, kernel_size=5, stride=3):
    ch1, ch2, ch3, ch4 = ch, ch * 4, min(max_ch, ch * 16), min(max_ch, ch * 32)
    layer_defs = [
        (1,   ch1, kernel_size, stride, (kernel_size - 1) // 2),
        (ch1, ch2, kernel_size, stride, (kernel_size - 1) // 2),
        (ch2, ch3, kernel_size, stride, (kernel_size - 1) // 2),
        (ch3, ch4, kernel_size, stride, (kernel_size - 1) // 2),
        (ch4, ch4, 5, 1, 2),
    ]
    keys = jax.random.split(key, 2 * len(layer_defs) + 2)
    conv_ws, conv_bs, meta = [], [], []
    for i, (cin, cout, k, s, p) in enumerate(layer_defs):
        w = 0.1 * jax.random.normal(keys[2 * i], (k, cin, cout), jnp.float32)
        bias = 0.1 * jax.random.normal(keys[2 * i + 1], (cout,), jnp.float32)
        conv_ws.append(w.astype(jnp.bfloat16))            # (K, Cin, Cout), tap-major
        conv_bs.append(bias.reshape(1, cout))              # f32 bias row
        meta.append((k, s, p))
    # conv_post: Conv2d(ch4, 1, (3,1), stride 1, padding (1,0))
    wpost = 0.1 * jax.random.normal(keys[-2], (3, 1, ch4), jnp.float32)   # (Kp, 1, Cin)
    bpost = 0.1 * jax.random.normal(keys[-1], (1, 1), jnp.float32)
    meta.append((3, 1, 1))
    return {"conv_ws": conv_ws, "conv_bs": conv_bs,
            "post_w": wpost, "post_b": bpost, "meta": tuple(meta)}


# ---------------------------------------------------------------------------
# Pure-JAX f32 reference (mirrors the torch forward) for the self-test
# ---------------------------------------------------------------------------
def _reference_disc_p(y, params, period):
    b, c, t = y.shape
    if t % period != 0:
        y = jnp.pad(y, ((0, 0), (0, 0), (0, period - t % period)), mode="reflect")
        t = y.shape[-1]
    x = y.reshape(b, c, t // period, period).astype(jnp.float32)
    fmap = []
    metas = params["meta"]
    for w, bias, (K, s, pad) in zip(params["conv_ws"], params["conv_bs"], metas[:-1]):
        w4 = jnp.transpose(w.astype(jnp.float32), (2, 1, 0))[..., None]   # OIHW
        x = lax.conv_general_dilated(x, w4, (s, 1), ((pad, pad), (0, 0)),
                                     dimension_numbers=("NCHW", "OIHW", "NCHW"),
                                     precision=lax.Precision.HIGHEST)
        x = x + bias.reshape(1, -1, 1, 1)
        fmap.append(x)                                   # pre-activation (as in the spec)
        x = jnp.where(x >= 0, x, LRELU_SLOPE * x)
    Kp, sp, pp = metas[-1]
    wp4 = jnp.transpose(params["post_w"].astype(jnp.float32), (1, 2, 0))[..., None]
    x = lax.conv_general_dilated(x, wp4, (sp, 1), ((pp, pp), (0, 0)),
                                 dimension_numbers=("NCHW", "OIHW", "NCHW"),
                                 precision=lax.Precision.HIGHEST)
    x = x + params["post_b"].reshape(1, 1, 1, 1)
    return x.reshape(b, -1), fmap


if __name__ == "__main__":
    import numpy as np

    periods = [2, 3, 5, 7, 11]
    channels, max_channels = 4, 16                      # small synthetic config
    key = jax.random.PRNGKey(0)
    k_in, k_par = jax.random.split(key)

    # Input: (batch=2, channels=1, t=64) — a raw waveform as in HiFi-GAN.
    y = jax.random.normal(k_in, (2, 1, 64), jnp.float32)

    par_keys = jax.random.split(k_par, len(periods))
    all_params = [init_disc_p_params(pk, ch=channels, max_ch=max_channels)
                  for pk in par_keys]

    outputs, fmaps = multi_period_discriminator_forward(y, all_params, periods)
    jax.block_until_ready((outputs, fmaps))

    # Correctness check against the pure-JAX f32 reference (loose tolerance:
    # the Pallas path runs bf16 weights/activations with f32 accumulation).
    for p, params, o, f in zip(periods, all_params, outputs, fmaps):
        o_ref, f_ref = _reference_disc_p(y, params, p)
        assert o.shape == o_ref.shape
        np.testing.assert_allclose(np.array(o.astype(jnp.float32)),
                                   np.array(o_ref), rtol=0.15, atol=0.08)
        assert len(f) == len(f_ref) == 5                 # 5 pre-activation fmaps (spec)
        for a_, r_ in zip(f, f_ref):
            assert a_.shape == r_.shape
            np.testing.assert_allclose(np.array(a_.astype(jnp.float32)),
                                       np.array(r_), rtol=0.15, atol=0.08)
    print("KERNEL_OK")
</pallas_src>

<mosaic_0001>
module attributes {stable_mosaic.version = 11 : i64} {
  func.func @kernel(%arg0: i32, %arg1: i32, %arg2: memref<1x12x3xbf16, #tpu.memory_space<vmem>>, %arg3: memref<5x1x4xbf16, #tpu.memory_space<vmem>>, %arg4: memref<1x4xf32, #tpu.memory_space<vmem>>, %arg5: memref<1x11x4xbf16, #tpu.memory_space<vmem>>) attributes {dimension_semantics = [#tpu.dimension_semantics<parallel>, #tpu.dimension_semantics<parallel>], iteration_bounds = array<i64: 4, 1>, scalar_prefetch = 0 : i64, scratch_operands = 0 : i64, tpu.core_type = #tpu.core_type<tc>, window_params = [{transform_indices = @transform_0, window_bounds = array<i64: 1, 12, 3>}, {transform_indices = @transform_1, window_bounds = array<i64: 5, 1, 4>}, {transform_indices = @transform_2, window_bounds = array<i64: 1, 4>}, {transform_indices = @transform_3, window_bounds = array<i64: 1, 11, 4>}]} {
    %c0 = arith.constant 0 : index
    %c0_0 = arith.constant 0 : index
    %c0_1 = arith.constant 0 : index
    %0 = vector.load %arg2[%c0, %c0_0, %c0_1] : memref<1x12x3xbf16, #tpu.memory_space<vmem>>, vector<1x11x1xbf16>
    %1 = vector.shape_cast %0 : vector<1x11x1xbf16> to vector<11x1xbf16>
    %2 = arith.extf %1 : vector<11x1xbf16> to vector<11x1xf32>
    %c0_2 = arith.constant 0 : index
    %c0_3 = arith.constant 0 : index
    %c0_4 = arith.constant 0 : index
    %3 = vector.load %arg3[%c0_2, %c0_3, %c0_4] : memref<5x1x4xbf16, #tpu.memory_space<vmem>>, vector<1x1x4xbf16>
    %4 = vector.shape_cast %3 : vector<1x1x4xbf16> to vector<1x4xbf16>
    %5 = arith.extf %4 : vector<1x4xbf16> to vector<1x4xf32>
    %6 = vector.broadcast %2 : vector<11x1xf32> to vector<11x4xf32>
    %7 = vector.broadcast %5 : vector<1x4xf32> to vector<11x4xf32>
    %8 = arith.mulf %6, %7 : vector<11x4xf32>
    %c0_5 = arith.constant 0 : index
    %c0_6 = arith.constant 0 : index
    %c1 = arith.constant 1 : index
    %9 = vector.load %arg2[%c0_5, %c0_6, %c1] : memref<1x12x3xbf16, #tpu.memory_space<vmem>>, vector<1x11x1xbf16>
    %10 = vector.shape_cast %9 : vector<1x11x1xbf16> to vector<11x1xbf16>
    %11 = arith.extf %10 : vector<11x1xbf16> to vector<11x1xf32>
    %c1_7 = arith.constant 1 : index
    %c0_8 = arith.constant 0 : index
    %c0_9 = arith.constant 0 : index
    %12 = vector.load %arg3[%c1_7, %c0_8, %c0_9] : memref<5x1x4xbf16, #tpu.memory_space<vmem>>, vector<1x1x4xbf16>
    %13 = vector.shape_cast %12 : vector<1x1x4xbf16> to vector<1x4xbf16>
    %14 = arith.extf %13 : vector<1x4xbf16> to vector<1x4xf32>
    %15 = vector.broadcast %11 : vector<11x1xf32> to vector<11x4xf32>
    %16 = vector.broadcast %14 : vector<1x4xf32> to vector<11x4xf32>
    %17 = arith.mulf %15, %16 : vector<11x4xf32>
    %18 = arith.addf %8, %17 : vector<11x4xf32>
    %c0_10 = arith.constant 0 : index
    %c0_11 = arith.constant 0 : index
    %c2 = arith.constant 2 : index
    %19 = vector.load %arg2[%c0_10, %c0_11, %c2] : memref<1x12x3xbf16, #tpu.memory_space<vmem>>, vector<1x11x1xbf16>
    %20 = vector.shape_cast %19 : vector<1x11x1xbf16> to vector<11x1xbf16>
    %21 = arith.extf %20 : vector<11x1xbf16> to vector<11x1xf32>
    %c2_12 = arith.constant 2 : index
    %c0_13 = arith.constant 0 : index
    %c0_14 = arith.constant 0 : index
    %22 = vector.load %arg3[%c2_12, %c0_13, %c0_14] : memref<5x1x4xbf16, #tpu.memory_space<vmem>>, vector<1x1x4xbf16>
    %23 = vector.shape_cast %22 : vector<1x1x4xbf16> to vector<1x4xbf16>
    %24 = arith.extf %23 : vector<1x4xbf16> to vector<1x4xf32>
    %25 = vector.broadcast %21 : vector<11x1xf32> to vector<11x4xf32>
    %26 = vector.broadcast %24 : vector<1x4xf32> to vector<11x4xf32>
    %27 = arith.mulf %25, %26 : vector<11x4xf32>
    %28 = arith.addf %18, %27 : vector<11x4xf32>
    %c0_15 = arith.constant 0 : index
    %c1_16 = arith.constant 1 : index
    %c0_17 = arith.constant 0 : index
    %29 = vector.load %arg2[%c0_15, %c1_16, %c0_17] : memref<1x12x3xbf16, #tpu.memory_space<vmem>>, vector<1x11x1xbf16>
    %30 = vector.shape_cast %29 : vector<1x11x1xbf16> to vector<11x1xbf16>
    %31 = arith.extf %30 : vector<11x1xbf16> to vector<11x1xf32>
    %c3 = arith.constant 3 : index
    %c0_18 = arith.constant 0 : index
    %c0_19 = arith.constant 0 : index
    %32 = vector.load %arg3[%c3, %c0_18, %c0_19] : memref<5x1x4xbf16, #tpu.memory_space<vmem>>, vector<1x1x4xbf16>
    %33 = vector.shape_cast %32 : vector<1x1x4xbf16> to vector<1x4xbf16>
    %34 = arith.extf %33 : vector<1x4xbf16> to vector<1x4xf32>
    %35 = vector.broadcast %31 : vector<11x1xf32> to vector<11x4xf32>
    %36 = vector.broadcast %34 : vector<1x4xf32> to vector<11x4xf32>
    %37 = arith.mulf %35, %36 : vector<11x4xf32>
    %38 = arith.addf %28, %37 : vector<11x4xf32>
    %c0_20 = arith.constant 0 : index
    %c1_21 = arith.constant 1 : index
    %c1_22 = arith.constant 1 : index
    %39 = vector.load %arg2[%c0_20, %c1_21, %c1_22] : memref<1x12x3xbf16, #tpu.memory_space<vmem>>, vector<1x11x1xbf16>
    %40 = vector.shape_cast %39 : vector<1x11x1xbf16> to vector<11x1xbf16>
    %41 = arith.extf %40 : vector<11x1xbf16> to vector<11x1xf32>
    %c4 = arith.constant 4 : index
    %c0_23 = arith.constant 0 : index
    %c0_24 = arith.constant 0 : index
    %42 = vector.load %arg3[%c4, %c0_23, %c0_24] : memref<5x1x4xbf16, #tpu.memory_space<vmem>>, vector<1x1x4xbf16>
    %43 = vector.shape_cast %42 : vector<1x1x4xbf16> to vector<1x4xbf16>
    %44 = arith.extf %43 : vector<1x4xbf16> to vector<1x4xf32>
    %45 = vector.broadcast %41 : vector<11x1xf32> to vector<11x4xf32>
    %46 = vector.broadcast %44 : vector<1x4xf32> to vector<11x4xf32>
    %47 = arith.mulf %45, %46 : vector<11x4xf32>
    %48 = arith.addf %38, %47 : vector<11x4xf32>
    %c0_25 = arith.constant 0 : index
    %c0_26 = arith.constant 0 : index
    %49 = vector.load %arg4[%c0_25, %c0_26] : memref<1x4xf32, #tpu.memory_space<vmem>>, vector<1x4xf32>
    %50 = vector.broadcast %49 : vector<1x4xf32> to vector<11x4xf32>
    %51 = arith.addf %48, %50 : vector<11x4xf32>
    %52 = arith.truncf %51 : vector<11x4xf32> to vector<11x4xbf16>
    %c0_27 = arith.constant 0 : index
    %c0_28 = arith.constant 0 : index
    %c0_29 = arith.constant 0 : index
    %53 = vector.load %arg5[%c0_27, %c0_28, %c0_29] : memref<1x11x4xbf16, #tpu.memory_space<vmem>>, vector<1x11x4xbf16>
    %54 = vector.shape_cast %53 : vector<1x11x4xbf16> to vector<11x4xbf16>
    %55 = vector.shape_cast %52 : vector<11x4xbf16> to vector<1x11x4xbf16>
    tpu.vector_store %arg5[%c0_27, %c0_28, %c0_29], %55 {strides = array<i32>} : memref<1x11x4xbf16, #tpu.memory_space<vmem>>, vector<1x11x4xbf16>,
    return
  }
  func.func @transform_0(%arg0: i32, %arg1: i32) -> (i32, i32, i32) {
    %c0_i32 = arith.constant 0 : i32
    %c0_i32_0 = arith.constant 0 : i32
    %c0_i32_1 = arith.constant 0 : i32
    return %arg0, %c0_i32, %c0_i32_0 : i32, i32, i32
  }
  func.func @transform_1(%arg0: i32, %arg1: i32) -> (i32, i32, i32) {
    %c0_i32 = arith.constant 0 : i32
    %c0_i32_0 = arith.constant 0 : i32
    %c0_i32_1 = arith.constant 0 : i32
    return %c0_i32, %c0_i32_0, %arg1 : i32, i32, i32
  }
  func.func @transform_2(%arg0: i32, %arg1: i32) -> (i32, i32) {
    %c0_i32 = arith.constant 0 : i32
    %c0_i32_0 = arith.constant 0 : i32
    return %c0_i32, %arg1 : i32, i32
  }
  func.func @transform_3(%arg0: i32, %arg1: i32) -> (i32, i32, i32) {
    %c0_i32 = arith.constant 0 : i32
    %c0_i32_0 = arith.constant 0 : i32
    return %arg0, %c0_i32, %arg1 : i32, i32, i32
  }
}

module attributes {stable_mosaic.version = 11 : i64} {
  func.func @kernel(%arg0: i32, %arg1: i32, %arg2: memref<1x5x12xbf16, #tpu.memory_space<vmem>>, %arg3: memref<5x4x16xbf16, #tpu.memory_space<vmem>>, %arg4: memref<1x16xf32, #tpu.memory_space<vmem>>, %arg5: memref<1x4x16xbf16, #tpu.memory_space<vmem>>) attributes {dimension_semantics = [#tpu.dimension_semantics<parallel>, #tpu.dimension_semantics<parallel>], iteration_bounds = array<i64: 4, 1>, scalar_prefetch = 0 : i64, scratch_operands = 0 : i64, tpu.core_type = #tpu.core_type<tc>, window_params = [{transform_indices = @transform_0, window_bounds = array<i64: 1, 5, 12>}, {transform_indices = @transform_1, window_bounds = array<i64: 5, 4, 16>}, {transform_indices = @transform_2, window_bounds = array<i64: 1, 16>}, {transform_indices = @transform_3, window_bounds = array<i64: 1, 4, 16>}]} {
    %c0 = arith.constant 0 : index
    %c0_0 = arith.constant 0 : index
    %c0_1 = arith.constant 0 : index
    %0 = vector.load %arg2[%c0, %c0_0, %c0_1] : memref<1x5x12xbf16, #tpu.memory_space<vmem>>, vector<1x4x4xbf16>
    %1 = vector.shape_cast %0 : vector<1x4x4xbf16> to vector<4x4xbf16>
    %cst = arith.constant 2.001950e-01 : bf16
    %2 = vector.broadcast %cst : bf16 to vector<4x4xbf16>
    %3 = arith.mulf %2, %1 : vector<4x4xbf16>
    %4 = arith.maximumf %1, %3 : vector<4x4xbf16>
    %c0_2 = arith.constant 0 : index
    %c0_3 = arith.constant 0 : index
    %c0_4 = arith.constant 0 : index
    %5 = vector.load %arg3[%c0_2, %c0_3, %c0_4] : memref<5x4x16xbf16, #tpu.memory_space<vmem>>, vector<1x4x16xbf16>
    %6 = vector.shape_cast %5 : vector<1x4x16xbf16> to vector<4x16xbf16>
    %cst_5 = arith.constant dense<0.000000e+00> : vector<4x16xf32>
    %7 = tpu.matmul %4, %6, %cst_5 {dimension_numbers = #tpu.dot_dimension_numbers<[1], [0], [0], [1], [0, 0, 1, 1], [], []>} : vector<4x4xbf16>, vector<4x16xbf16>, vector<4x16xf32> -> vector<4x16xf32>
    %c0_6 = arith.constant 0 : index
    %c0_7 = arith.constant 0 : index
    %c4 = arith.constant 4 : index
    %8 = vector.load %arg2[%c0_6, %c0_7, %c4] : memref<1x5x12xbf16, #tpu.memory_space<vmem>>, vector<1x4x4xbf16>
    %9 = vector.shape_cast %8 : vector<1x4x4xbf16> to vector<4x4xbf16>
    %cst_8 = arith.constant 2.001950e-01 : bf16
    %10 = vector.broadcast %cst_8 : bf16 to vector<4x4xbf16>
    %11 = arith.mulf %10, %9 : vector<4x4xbf16>
    %12 = arith.maximumf %9, %11 : vector<4x4xbf16>
    %c1 = arith.constant 1 : index
    %c0_9 = arith.constant 0 : index
    %c0_10 = arith.constant 0 : index
    %13 = vector.load %arg3[%c1, %c0_9, %c0_10] : memref<5x4x16xbf16, #tpu.memory_space<vmem>>, vector<1x4x16xbf16>
    %14 = vector.shape_cast %13 : vector<1x4x16xbf16> to vector<4x16xbf16>
    %cst_11 = arith.constant dense<0.000000e+00> : vector<4x16xf32>
    %15 = tpu.matmul %12, %14, %cst_11 {dimension_numbers = #tpu.dot_dimension_numbers<[1], [0], [0], [1], [0, 0, 1, 1], [], []>} : vector<4x4xbf16>, vector<4x16xbf16>, vector<4x16xf32> -> vector<4x16xf32>
    %16 = arith.addf %7, %15 : vector<4x16xf32>
    %c0_12 = arith.constant 0 : index
    %c0_13 = arith.constant 0 : index
    %c8 = arith.constant 8 : index
    %17 = vector.load %arg2[%c0_12, %c0_13, %c8] : memref<1x5x12xbf16, #tpu.memory_space<vmem>>, vector<1x4x4xbf16>
    %18 = vector.shape_cast %17 : vector<1x4x4xbf16> to vector<4x4xbf16>
    %cst_14 = arith.constant 2.001950e-01 : bf16
    %19 = vector.broadcast %cst_14 : bf16 to vector<4x4xbf16>
    %20 = arith.mulf %19, %18 : vector<4x4xbf16>
    %21 = arith.maximumf %18, %20 : vector<4x4xbf16>
    %c2 = arith.constant 2 : index
    %c0_15 = arith.constant 0 : index
    %c0_16 = arith.constant 0 : index
    %22 = vector.load %arg3[%c2, %c0_15, %c0_16] : memref<5x4x16xbf16, #tpu.memory_space<vmem>>, vector<1x4x16xbf16>
    %23 = vector.shape_cast %22 : vector<1x4x16xbf16> to vector<4x16xbf16>
    %cst_17 = arith.constant dense<0.000000e+00> : vector<4x16xf32>
    %24 = tpu.matmul %21, %23, %cst_17 {dimension_numbers = #tpu.dot_dimension_numbers<[1], [0], [0], [1], [0, 0, 1, 1], [], []>} : vector<4x4xbf16>, vector<4x16xbf16>, vector<4x16xf32> -> vector<4x16xf32>
    %25 = arith.addf %16, %24 : vector<4x16xf32>
    %c0_18 = arith.constant 0 : index
    %c1_19 = arith.constant 1 : index
    %c0_20 = arith.constant 0 : index
    %26 = vector.load %arg2[%c0_18, %c1_19, %c0_20] : memref<1x5x12xbf16, #tpu.memory_space<vmem>>, vector<1x4x4xbf16>
    %27 = vector.shape_cast %26 : vector<1x4x4xbf16> to vector<4x4xbf16>
    %cst_21 = arith.constant 2.001950e-01 : bf16
    %28 = vector.broadcast %cst_21 : bf16 to vector<4x4xbf16>
    %29 = arith.mulf %28, %27 : vector<4x4xbf16>
    %30 = arith.maximumf %27, %29 : vector<4x4xbf16>
    %c3 = arith.constant 3 : index
    %c0_22 = arith.constant 0 : index
    %c0_23 = arith.constant 0 : index
    %31 = vector.load %arg3[%c3, %c0_22, %c0_23] : memref<5x4x16xbf16, #tpu.memory_space<vmem>>, vector<1x4x16xbf16>
    %32 = vector.shape_cast %31 : vector<1x4x16xbf16> to vector<4x16xbf16>
    %cst_24 = arith.constant dense<0.000000e+00> : vector<4x16xf32>
    %33 = tpu.matmul %30, %32, %cst_24 {dimension_numbers = #tpu.dot_dimension_numbers<[1], [0], [0], [1], [0, 0, 1, 1], [], []>} : vector<4x4xbf16>, vector<4x16xbf16>, vector<4x16xf32> -> vector<4x16xf32>
    %34 = arith.addf %25, %33 : vector<4x16xf32>
    %c0_25 = arith.constant 0 : index
    %c1_26 = arith.constant 1 : index
    %c4_27 = arith.constant 4 : index
    %35 = vector.load %arg2[%c0_25, %c1_26, %c4_27] : memref<1x5x12xbf16, #tpu.memory_space<vmem>>, vector<1x4x4xbf16>
    %36 = vector.shape_cast %35 : vector<1x4x4xbf16> to vector<4x4xbf16>
    %cst_28 = arith.constant 2.001950e-01 : bf16
    %37 = vector.broadcast %cst_28 : bf16 to vector<4x4xbf16>
    %38 = arith.mulf %37, %36 : vector<4x4xbf16>
    %39 = arith.maximumf %36, %38 : vector<4x4xbf16>
    %c4_29 = arith.constant 4 : index
    %c0_30 = arith.constant 0 : index
    %c0_31 = arith.constant 0 : index
    %40 = vector.load %arg3[%c4_29, %c0_30, %c0_31] : memref<5x4x16xbf16, #tpu.memory_space<vmem>>, vector<1x4x16xbf16>
    %41 = vector.shape_cast %40 : vector<1x4x16xbf16> to vector<4x16xbf16>
    %cst_32 = arith.constant dense<0.000000e+00> : vector<4x16xf32>
    %42 = tpu.matmul %39, %41, %cst_32 {dimension_numbers = #tpu.dot_dimension_numbers<[1], [0], [0], [1], [0, 0, 1, 1], [], []>} : vector<4x4xbf16>, vector<4x16xbf16>, vector<4x16xf32> -> vector<4x16xf32>
    %43 = arith.addf %34, %42 : vector<4x16xf32>
    %c0_33 = arith.constant 0 : index
    %c0_34 = arith.constant 0 : index
    %44 = vector.load %arg4[%c0_33, %c0_34] : memref<1x16xf32, #tpu.memory_space<vmem>>, vector<1x16xf32>
    %45 = vector.broadcast %44 : vector<1x16xf32> to vector<4x16xf32>
    %46 = arith.addf %43, %45 : vector<4x16xf32>
    %47 = arith.truncf %46 : vector<4x16xf32> to vector<4x16xbf16>
    %c0_35 = arith.constant 0 : index
    %c0_36 = arith.constant 0 : index
    %c0_37 = arith.constant 0 : index
    %48 = vector.load %arg5[%c0_35, %c0_36, %c0_37] : memref<1x4x16xbf16, #tpu.memory_space<vmem>>, vector<1x4x16xbf16>
    %49 = vector.shape_cast %48 : vector<1x4x16xbf16> to vector<4x16xbf16>
    %50 = vector.shape_cast %47 : vector<4x16xbf16> to vector<1x4x16xbf16>
    tpu.vector_store %arg5[%c0_35, %c0_36, %c0_37], %50 {strides = array<i32>} : memref<1x4x16xbf16, #tpu.memory_space<vmem>>, vector<1x4x16xbf16>,
    return
  }
  func.func @transform_0(%arg0: i32, %arg1: i32) -> (i32, i32, i32) {
    %c0_i32 = arith.constant 0 : i32
    %c0_i32_0 = arith.constant 0 : i32
    %c0_i32_1 = arith.constant 0 : i32
    return %arg0, %c0_i32, %c0_i32_0 : i32, i32, i32
  }
  func.func @transform_1(%arg0: i32, %arg1: i32) -> (i32, i32, i32) {
    %c0_i32 = arith.constant 0 : i32
    %c0_i32_0 = arith.constant 0 : i32
    %c0_i32_1 = arith.constant 0 : i32
    return %c0_i32, %c0_i32_0, %arg1 : i32, i32, i32
  }
  func.func @transform_2(%arg0: i32, %arg1: i32) -> (i32, i32) {
    %c0_i32 = arith.constant 0 : i32
    %c0_i32_0 = arith.constant 0 : i32
    return %c0_i32, %arg1 : i32, i32
  }
  func.func @transform_3(%arg0: i32, %arg1: i32) -> (i32, i32, i32) {
    %c0_i32 = arith.constant 0 : i32
    %c0_i32_0 = arith.constant 0 : i32
    return %arg0, %c0_i32, %arg1 : i32, i32, i32
  }
}

module attributes {stable_mosaic.version = 11 : i64} {
  func.func @kernel(%arg0: i32, %arg1: i32, %arg2: memref<1x3x48xbf16, #tpu.memory_space<vmem>>, %arg3: memref<5x16x16xbf16, #tpu.memory_space<vmem>>, %arg4: memref<1x16xf32, #tpu.memory_space<vmem>>, %arg5: memref<1x2x16xbf16, #tpu.memory_space<vmem>>) attributes {dimension_semantics = [#tpu.dimension_semantics<parallel>, #tpu.dimension_semantics<parallel>], iteration_bounds = array<i64: 4, 1>, scalar_prefetch = 0 : i64, scratch_operands = 0 : i64, tpu.core_type = #tpu.core_type<tc>, window_params = [{transform_indices = @transform_0, window_bounds = array<i64: 1, 3, 48>}, {transform_indices = @transform_1, window_bounds = array<i64: 5, 16, 16>}, {transform_indices = @transform_2, window_bounds = array<i64: 1, 16>}, {transform_indices = @transform_3, window_bounds = array<i64: 1, 2, 16>}]} {
    %c0 = arith.constant 0 : index
    %c0_0 = arith.constant 0 : index
    %c0_1 = arith.constant 0 : index
    %0 = vector.load %arg2[%c0, %c0_0, %c0_1] : memref<1x3x48xbf16, #tpu.memory_space<vmem>>, vector<1x2x16xbf16>
    %1 = vector.shape_cast %0 : vector<1x2x16xbf16> to vector<2x16xbf16>
    %cst = arith.constant 2.001950e-01 : bf16
    %2 = vector.broadcast %cst : bf16 to vector<2x16xbf16>
    %3 = arith.mulf %2, %1 : vector<2x16xbf16>
    %4 = arith.maximumf %1, %3 : vector<2x16xbf16>
    %c0_2 = arith.constant 0 : index
    %c0_3 = arith.constant 0 : index
    %c0_4 = arith.constant 0 : index
    %5 = vector.load %arg3[%c0_2, %c0_3, %c0_4] : memref<5x16x16xbf16, #tpu.memory_space<vmem>>, vector<1x16x16xbf16>
    %6 = vector.shape_cast %5 : vector<1x16x16xbf16> to vector<16x16xbf16>
    %cst_5 = arith.constant dense<0.000000e+00> : vector<2x16xf32>
    %7 = tpu.matmul %4, %6, %cst_5 {dimension_numbers = #tpu.dot_dimension_numbers<[1], [0], [0], [1], [0, 0, 1, 1], [], []>} : vector<2x16xbf16>, vector<16x16xbf16>, vector<2x16xf32> -> vector<2x16xf32>
    %c0_6 = arith.constant 0 : index
    %c0_7 = arith.constant 0 : index
    %c16 = arith.constant 16 : index
    %8 = vector.load %arg2[%c0_6, %c0_7, %c16] : memref<1x3x48xbf16, #tpu.memory_space<vmem>>, vector<1x2x16xbf16>
    %9 = vector.shape_cast %8 : vector<1x2x16xbf16> to vector<2x16xbf16>
    %cst_8 = arith.constant 2.001950e-01 : bf16
    %10 = vector.broadcast %cst_8 : bf16 to vector<2x16xbf16>
    %11 = arith.mulf %10, %9 : vector<2x16xbf16>
    %12 = arith.maximumf %9, %11 : vector<2x16xbf16>
    %c1 = arith.constant 1 : index
    %c0_9 = arith.constant 0 : index
    %c0_10 = arith.constant 0 : index
    %13 = vector.load %arg3[%c1, %c0_9, %c0_10] : memref<5x16x16xbf16, #tpu.memory_space<vmem>>, vector<1x16x16xbf16>
    %14 = vector.shape_cast %13 : vector<1x16x16xbf16> to vector<16x16xbf16>
    %cst_11 = arith.constant dense<0.000000e+00> : vector<2x16xf32>
    %15 = tpu.matmul %12, %14, %cst_11 {dimension_numbers = #tpu.dot_dimension_numbers<[1], [0], [0], [1], [0, 0, 1, 1], [], []>} : vector<2x16xbf16>, vector<16x16xbf16>, vector<2x16xf32> -> vector<2x16xf32>
    %16 = arith.addf %7, %15 : vector<2x16xf32>
    %c0_12 = arith.constant 0 : index
    %c0_13 = arith.constant 0 : index
    %c32 = arith.constant 32 : index
    %17 = vector.load %arg2[%c0_12, %c0_13, %c32] : memref<1x3x48xbf16, #tpu.memory_space<vmem>>, vector<1x2x16xbf16>
    %18 = vector.shape_cast %17 : vector<1x2x16xbf16> to vector<2x16xbf16>
    %cst_14 = arith.constant 2.001950e-01 : bf16
    %19 = vector.broadcast %cst_14 : bf16 to vector<2x16xbf16>
    %20 = arith.mulf %19, %18 : vector<2x16xbf16>
    %21 = arith.maximumf %18, %20 : vector<2x16xbf16>
    %c2 = arith.constant 2 : index
    %c0_15 = arith.constant 0 : index
    %c0_16 = arith.constant 0 : index
    %22 = vector.load %arg3[%c2, %c0_15, %c0_16] : memref<5x16x16xbf16, #tpu.memory_space<vmem>>, vector<1x16x16xbf16>
    %23 = vector.shape_cast %22 : vector<1x16x16xbf16> to vector<16x16xbf16>
    %cst_17 = arith.constant dense<0.000000e+00> : vector<2x16xf32>
    %24 = tpu.matmul %21, %23, %cst_17 {dimension_numbers = #tpu.dot_dimension_numbers<[1], [0], [0], [1], [0, 0, 1, 1], [], []>} : vector<2x16xbf16>, vector<16x16xbf16>, vector<2x16xf32> -> vector<2x16xf32>
    %25 = arith.addf %16, %24 : vector<2x16xf32>
    %c0_18 = arith.constant 0 : index
    %c1_19 = arith.constant 1 : index
    %c0_20 = arith.constant 0 : index
    %26 = vector.load %arg2[%c0_18, %c1_19, %c0_20] : memref<1x3x48xbf16, #tpu.memory_space<vmem>>, vector<1x2x16xbf16>
    %27 = vector.shape_cast %26 : vector<1x2x16xbf16> to vector<2x16xbf16>
    %cst_21 = arith.constant 2.001950e-01 : bf16
    %28 = vector.broadcast %cst_21 : bf16 to vector<2x16xbf16>
    %29 = arith.mulf %28, %27 : vector<2x16xbf16>
    %30 = arith.maximumf %27, %29 : vector<2x16xbf16>
    %c3 = arith.constant 3 : index
    %c0_22 = arith.constant 0 : index
    %c0_23 = arith.constant 0 : index
    %31 = vector.load %arg3[%c3, %c0_22, %c0_23] : memref<5x16x16xbf16, #tpu.memory_space<vmem>>, vector<1x16x16xbf16>
    %32 = vector.shape_cast %31 : vector<1x16x16xbf16> to vector<16x16xbf16>
    %cst_24 = arith.constant dense<0.000000e+00> : vector<2x16xf32>
    %33 = tpu.matmul %30, %32, %cst_24 {dimension_numbers = #tpu.dot_dimension_numbers<[1], [0], [0], [1], [0, 0, 1, 1], [], []>} : vector<2x16xbf16>, vector<16x16xbf16>, vector<2x16xf32> -> vector<2x16xf32>
    %34 = arith.addf %25, %33 : vector<2x16xf32>
    %c0_25 = arith.constant 0 : index
    %c1_26 = arith.constant 1 : index
    %c16_27 = arith.constant 16 : index
    %35 = vector.load %arg2[%c0_25, %c1_26, %c16_27] : memref<1x3x48xbf16, #tpu.memory_space<vmem>>, vector<1x2x16xbf16>
    %36 = vector.shape_cast %35 : vector<1x2x16xbf16> to vector<2x16xbf16>
    %cst_28 = arith.constant 2.001950e-01 : bf16
    %37 = vector.broadcast %cst_28 : bf16 to vector<2x16xbf16>
    %38 = arith.mulf %37, %36 : vector<2x16xbf16>
    %39 = arith.maximumf %36, %38 : vector<2x16xbf16>
    %c4 = arith.constant 4 : index
    %c0_29 = arith.constant 0 : index
    %c0_30 = arith.constant 0 : index
    %40 = vector.load %arg3[%c4, %c0_29, %c0_30] : memref<5x16x16xbf16, #tpu.memory_space<vmem>>, vector<1x16x16xbf16>
    %41 = vector.shape_cast %40 : vector<1x16x16xbf16> to vector<16x16xbf16>
    %cst_31 = arith.constant dense<0.000000e+00> : vector<2x16xf32>
    %42 = tpu.matmul %39, %41, %cst_31 {dimension_numbers = #tpu.dot_dimension_numbers<[1], [0], [0], [1], [0, 0, 1, 1], [], []>} : vector<2x16xbf16>, vector<16x16xbf16>, vector<2x16xf32> -> vector<2x16xf32>
    %43 = arith.addf %34, %42 : vector<2x16xf32>
    %c0_32 = arith.constant 0 : index
    %c0_33 = arith.constant 0 : index
    %44 = vector.load %arg4[%c0_32, %c0_33] : memref<1x16xf32, #tpu.memory_space<vmem>>, vector<1x16xf32>
    %45 = vector.broadcast %44 : vector<1x16xf32> to vector<2x16xf32>
    %46 = arith.addf %43, %45 : vector<2x16xf32>
    %47 = arith.truncf %46 : vector<2x16xf32> to vector<2x16xbf16>
    %c0_34 = arith.constant 0 : index
    %c0_35 = arith.constant 0 : index
    %c0_36 = arith.constant 0 : index
    %48 = vector.load %arg5[%c0_34, %c0_35, %c0_36] : memref<1x2x16xbf16, #tpu.memory_space<vmem>>, vector<1x2x16xbf16>
    %49 = vector.shape_cast %48 : vector<1x2x16xbf16> to vector<2x16xbf16>
    %50 = vector.shape_cast %47 : vector<2x16xbf16> to vector<1x2x16xbf16>
    tpu.vector_store %arg5[%c0_34, %c0_35, %c0_36], %50 {strides = array<i32>} : memref<1x2x16xbf16, #tpu.memory_space<vmem>>, vector<1x2x16xbf16>,
    return
  }
  func.func @transform_0(%arg0: i32, %arg1: i32) -> (i32, i32, i32) {
    %c0_i32 = arith.constant 0 : i32
    %c0_i32_0 = arith.constant 0 : i32
    %c0_i32_1 = arith.constant 0 : i32
    return %arg0, %c0_i32, %c0_i32_0 : i32, i32, i32
  }
  func.func @transform_1(%arg0: i32, %arg1: i32) -> (i32, i32, i32) {
    %c0_i32 = arith.constant 0 : i32
    %c0_i32_0 = arith.constant 0 : i32
    %c0_i32_1 = arith.constant 0 : i32
    return %c0_i32, %c0_i32_0, %arg1 : i32, i32, i32
  }
  func.func @transform_2(%arg0: i32, %arg1: i32) -> (i32, i32) {
    %c0_i32 = arith.constant 0 : i32
    %c0_i32_0 = arith.constant 0 : i32
    return %c0_i32, %arg1 : i32, i32
  }
  func.func @transform_3(%arg0: i32, %arg1: i32) -> (i32, i32, i32) {
    %c0_i32 = arith.constant 0 : i32
    %c0_i32_0 = arith.constant 0 : i32
    return %arg0, %c0_i32, %arg1 : i32, i32, i32
  }
}

module attributes {stable_mosaic.version = 11 : i64} {
  func.func @kernel(%arg0: i32, %arg1: i32, %arg2: memref<1x2x48xbf16, #tpu.memory_space<vmem>>, %arg3: memref<5x16x16xbf16, #tpu.memory_space<vmem>>, %arg4: memref<1x16xf32, #tpu.memory_space<vmem>>, %arg5: memref<1x1x16xbf16, #tpu.memory_space<vmem>>) attributes {dimension_semantics = [#tpu.dimension_semantics<parallel>, #tpu.dimension_semantics<parallel>], iteration_bounds = array<i64: 4, 1>, scalar_prefetch = 0 : i64, scratch_operands = 0 : i64, tpu.core_type = #tpu.core_type<tc>, window_params = [{transform_indices = @transform_0, window_bounds = array<i64: 1, 2, 48>}, {transform_indices = @transform_1, window_bounds = array<i64: 5, 16, 16>}, {transform_indices = @transform_2, window_bounds = array<i64: 1, 16>}, {transform_indices = @transform_3, window_bounds = array<i64: 1, 1, 16>}]} {
    %c0 = arith.constant 0 : index
    %c0_0 = arith.constant 0 : index
    %c0_1 = arith.constant 0 : index
    %0 = vector.load %arg2[%c0, %c0_0, %c0_1] : memref<1x2x48xbf16, #tpu.memory_space<vmem>>, vector<1x1x16xbf16>
    %1 = vector.shape_cast %0 : vector<1x1x16xbf16> to vector<1x16xbf16>
    %cst = arith.constant 2.001950e-01 : bf16
    %2 = vector.broadcast %cst : bf16 to vector<1x16xbf16>
    %3 = arith.mulf %2, %1 : vector<1x16xbf16>
    %4 = arith.maximumf %1, %3 : vector<1x16xbf16>
    %c0_2 = arith.constant 0 : index
    %c0_3 = arith.constant 0 : index
    %c0_4 = arith.constant 0 : index
    %5 = vector.load %arg3[%c0_2, %c0_3, %c0_4] : memref<5x16x16xbf16, #tpu.memory_space<vmem>>, vector<1x16x16xbf16>
    %6 = vector.shape_cast %5 : vector<1x16x16xbf16> to vector<16x16xbf16>
    %cst_5 = arith.constant dense<0.000000e+00> : vector<1x16xf32>
    %7 = tpu.matmul %4, %6, %cst_5 {dimension_numbers = #tpu.dot_dimension_numbers<[1], [0], [0], [1], [0, 0, 1, 1], [], []>} : vector<1x16xbf16>, vector<16x16xbf16>, vector<1x16xf32> -> vector<1x16xf32>
    %c0_6 = arith.constant 0 : index
    %c0_7 = arith.constant 0 : index
    %c16 = arith.constant 16 : index
    %8 = vector.load %arg2[%c0_6, %c0_7, %c16] : memref<1x2x48xbf16, #tpu.memory_space<vmem>>, vector<1x1x16xbf16>
    %9 = vector.shape_cast %8 : vector<1x1x16xbf16> to vector<1x16xbf16>
    %cst_8 = arith.constant 2.001950e-01 : bf16
    %10 = vector.broadcast %cst_8 : bf16 to vector<1x16xbf16>
    %11 = arith.mulf %10, %9 : vector<1x16xbf16>
    %12 = arith.maximumf %9, %11 : vector<1x16xbf16>
    %c1 = arith.constant 1 : index
    %c0_9 = arith.constant 0 : index
    %c0_10 = arith.constant 0 : index
    %13 = vector.load %arg3[%c1, %c0_9, %c0_10] : memref<5x16x16xbf16, #tpu.memory_space<vmem>>, vector<1x16x16xbf16>
    %14 = vector.shape_cast %13 : vector<1x16x16xbf16> to vector<16x16xbf16>
    %cst_11 = arith.constant dense<0.000000e+00> : vector<1x16xf32>
    %15 = tpu.matmul %12, %14, %cst_11 {dimension_numbers = #tpu.dot_dimension_numbers<[1], [0], [0], [1], [0, 0, 1, 1], [], []>} : vector<1x16xbf16>, vector<16x16xbf16>, vector<1x16xf32> -> vector<1x16xf32>
    %16 = arith.addf %7, %15 : vector<1x16xf32>
    %c0_12 = arith.constant 0 : index
    %c0_13 = arith.constant 0 : index
    %c32 = arith.constant 32 : index
    %17 = vector.load %arg2[%c0_12, %c0_13, %c32] : memref<1x2x48xbf16, #tpu.memory_space<vmem>>, vector<1x1x16xbf16>
    %18 = vector.shape_cast %17 : vector<1x1x16xbf16> to vector<1x16xbf16>
    %cst_14 = arith.constant 2.001950e-01 : bf16
    %19 = vector.broadcast %cst_14 : bf16 to vector<1x16xbf16>
    %20 = arith.mulf %19, %18 : vector<1x16xbf16>
    %21 = arith.maximumf %18, %20 : vector<1x16xbf16>
    %c2 = arith.constant 2 : index
    %c0_15 = arith.constant 0 : index
    %c0_16 = arith.constant 0 : index
    %22 = vector.load %arg3[%c2, %c0_15, %c0_16] : memref<5x16x16xbf16, #tpu.memory_space<vmem>>, vector<1x16x16xbf16>
    %23 = vector.shape_cast %22 : vector<1x16x16xbf16> to vector<16x16xbf16>
    %cst_17 = arith.constant dense<0.000000e+00> : vector<1x16xf32>
    %24 = tpu.matmul %21, %23, %cst_17 {dimension_numbers = #tpu.dot_dimension_numbers<[1], [0], [0], [1], [0, 0, 1, 1], [], []>} : vector<1x16xbf16>, vector<16x16xbf16>, vector<1x16xf32> -> vector<1x16xf32>
    %25 = arith.addf %16, %24 : vector<1x16xf32>
    %c0_18 = arith.constant 0 : index
    %c1_19 = arith.constant 1 : index
    %c0_20 = arith.constant 0 : index
    %26 = vector.load %arg2[%c0_18, %c1_19, %c0_20] : memref<1x2x48xbf16, #tpu.memory_space<vmem>>, vector<1x1x16xbf16>
    %27 = vector.shape_cast %26 : vector<1x1x16xbf16> to vector<1x16xbf16>
    %cst_21 = arith.constant 2.001950e-01 : bf16
    %28 = vector.broadcast %cst_21 : bf16 to vector<1x16xbf16>
    %29 = arith.mulf %28, %27 : vector<1x16xbf16>
    %30 = arith.maximumf %27, %29 : vector<1x16xbf16>
    %c3 = arith.constant 3 : index
    %c0_22 = arith.constant 0 : index
    %c0_23 = arith.constant 0 : index
    %31 = vector.load %arg3[%c3, %c0_22, %c0_23] : memref<5x16x16xbf16, #tpu.memory_space<vmem>>, vector<1x16x16xbf16>
    %32 = vector.shape_cast %31 : vector<1x16x16xbf16> to vector<16x16xbf16>
    %cst_24 = arith.constant dense<0.000000e+00> : vector<1x16xf32>
    %33 = tpu.matmul %30, %32, %cst_24 {dimension_numbers = #tpu.dot_dimension_numbers<[1], [0], [0], [1], [0, 0, 1, 1], [], []>} : vector<1x16xbf16>, vector<16x16xbf16>, vector<1x16xf32> -> vector<1x16xf32>
    %34 = arith.addf %25, %33 : vector<1x16xf32>
    %c0_25 = arith.constant 0 : index
    %c1_26 = arith.constant 1 : index
    %c16_27 = arith.constant 16 : index
    %35 = vector.load %arg2[%c0_25, %c1_26, %c16_27] : memref<1x2x48xbf16, #tpu.memory_space<vmem>>, vector<1x1x16xbf16>
    %36 = vector.shape_cast %35 : vector<1x1x16xbf16> to vector<1x16xbf16>
    %cst_28 = arith.constant 2.001950e-01 : bf16
    %37 = vector.broadcast %cst_28 : bf16 to vector<1x16xbf16>
    %38 = arith.mulf %37, %36 : vector<1x16xbf16>
    %39 = arith.maximumf %36, %38 : vector<1x16xbf16>
    %c4 = arith.constant 4 : index
    %c0_29 = arith.constant 0 : index
    %c0_30 = arith.constant 0 : index
    %40 = vector.load %arg3[%c4, %c0_29, %c0_30] : memref<5x16x16xbf16, #tpu.memory_space<vmem>>, vector<1x16x16xbf16>
    %41 = vector.shape_cast %40 : vector<1x16x16xbf16> to vector<16x16xbf16>
    %cst_31 = arith.constant dense<0.000000e+00> : vector<1x16xf32>
    %42 = tpu.matmul %39, %41, %cst_31 {dimension_numbers = #tpu.dot_dimension_numbers<[1], [0], [0], [1], [0, 0, 1, 1], [], []>} : vector<1x16xbf16>, vector<16x16xbf16>, vector<1x16xf32> -> vector<1x16xf32>
    %43 = arith.addf %34, %42 : vector<1x16xf32>
    %c0_32 = arith.constant 0 : index
    %c0_33 = arith.constant 0 : index
    %44 = vector.load %arg4[%c0_32, %c0_33] : memref<1x16xf32, #tpu.memory_space<vmem>>, vector<1x16xf32>
    %45 = arith.addf %43, %44 : vector<1x16xf32>
    %46 = arith.truncf %45 : vector<1x16xf32> to vector<1x16xbf16>
    %c0_34 = arith.constant 0 : index
    %c0_35 = arith.constant 0 : index
    %c0_36 = arith.constant 0 : index
    %47 = vector.load %arg5[%c0_34, %c0_35, %c0_36] : memref<1x1x16xbf16, #tpu.memory_space<vmem>>, vector<1x1x16xbf16>
    %48 = vector.shape_cast %47 : vector<1x1x16xbf16> to vector<1x16xbf16>
    %49 = vector.shape_cast %46 : vector<1x16xbf16> to vector<1x1x16xbf16>
    tpu.vector_store %arg5[%c0_34, %c0_35, %c0_36], %49 {strides = array<i32>} : memref<1x1x16xbf16, #tpu.memory_space<vmem>>, vector<1x1x16xbf16>,
    return
  }
  func.func @transform_0(%arg0: i32, %arg1: i32) -> (i32, i32, i32) {
    %c0_i32 = arith.constant 0 : i32
    %c0_i32_0 = arith.constant 0 : i32
    %c0_i32_1 = arith.constant 0 : i32
    return %arg0, %c0_i32, %c0_i32_0 : i32, i32, i32
  }
  func.func @transform_1(%arg0: i32, %arg1: i32) -> (i32, i32, i32) {
    %c0_i32 = arith.constant 0 : i32
    %c0_i32_0 = arith.constant 0 : i32
    %c0_i32_1 = arith.constant 0 : i32
    return %c0_i32, %c0_i32_0, %arg1 : i32, i32, i32
  }
  func.func @transform_2(%arg0: i32, %arg1: i32) -> (i32, i32) {
    %c0_i32 = arith.constant 0 : i32
    %c0_i32_0 = arith.constant 0 : i32
    return %c0_i32, %arg1 : i32, i32
  }
  func.func @transform_3(%arg0: i32, %arg1: i32) -> (i32, i32, i32) {
    %c0_i32 = arith.constant 0 : i32
    %c0_i32_0 = arith.constant 0 : i32
    return %arg0, %c0_i32, %arg1 : i32, i32, i32
  }
}

module attributes {stable_mosaic.version = 11 : i64} {
  func.func @kernel(%arg0: i32, %arg1: memref<1x5x16xbf16, #tpu.memory_space<vmem>>, %arg2: memref<5x16x16xbf16, #tpu.memory_space<vmem>>, %arg3: memref<1x16xf32, #tpu.memory_space<vmem>>, %arg4: memref<3x1x16xf32, #tpu.memory_space<vmem>>, %arg5: memref<1x1xf32, #tpu.memory_space<vmem>>, %arg6: memref<1x1x16xbf16, #tpu.memory_space<vmem>>, %arg7: memref<1x1x1xf32, #tpu.memory_space<vmem>>) attributes {dimension_semantics = [#tpu.dimension_semantics<parallel>], iteration_bounds = array<i64: 4>, scalar_prefetch = 0 : i64, scratch_operands = 0 : i64, tpu.core_type = #tpu.core_type<tc>, window_params = [{transform_indices = @transform_0, window_bounds = array<i64: 1, 5, 16>}, {pipeline_mode = #tpu.pipeline_mode<synchronous>, transform_indices = @transform_1, window_bounds = array<i64: 5, 16, 16>}, {pipeline_mode = #tpu.pipeline_mode<synchronous>, transform_indices = @transform_2, window_bounds = array<i64: 1, 16>}, {pipeline_mode = #tpu.pipeline_mode<synchronous>, transform_indices = @transform_3, window_bounds = array<i64: 3, 1, 16>}, {pipeline_mode = #tpu.pipeline_mode<synchronous>, transform_indices = @transform_4, window_bounds = array<i64: 1, 1>}, {transform_indices = @transform_5, window_bounds = array<i64: 1, 1, 16>}, {transform_indices = @transform_6, window_bounds = array<i64: 1, 1, 1>}]} {
    %c0 = arith.constant 0 : index
    %c0_0 = arith.constant 0 : index
    %c0_1 = arith.constant 0 : index
    %0 = vector.load %arg1[%c0, %c0_0, %c0_1] : memref<1x5x16xbf16, #tpu.memory_space<vmem>>, vector<1x1x16xbf16>
    %1 = vector.shape_cast %0 : vector<1x1x16xbf16> to vector<1x16xbf16>
    %cst = arith.constant 2.001950e-01 : bf16
    %2 = vector.broadcast %cst : bf16 to vector<1x16xbf16>
    %3 = arith.mulf %2, %1 : vector<1x16xbf16>
    %4 = arith.maximumf %1, %3 : vector<1x16xbf16>
    %c0_2 = arith.constant 0 : index
    %c0_3 = arith.constant 0 : index
    %c0_4 = arith.constant 0 : index
    %5 = vector.load %arg2[%c0_2, %c0_3, %c0_4] : memref<5x16x16xbf16, #tpu.memory_space<vmem>>, vector<1x16x16xbf16>
    %6 = vector.shape_cast %5 : vector<1x16x16xbf16> to vector<16x16xbf16>
    %cst_5 = arith.constant dense<0.000000e+00> : vector<1x16xf32>
    %7 = tpu.matmul %4, %6, %cst_5 {dimension_numbers = #tpu.dot_dimension_numbers<[1], [0], [0], [1], [0, 0, 1, 1], [], []>} : vector<1x16xbf16>, vector<16x16xbf16>, vector<1x16xf32> -> vector<1x16xf32>
    %c0_6 = arith.constant 0 : index
    %c1 = arith.constant 1 : index
    %c0_7 = arith.constant 0 : index
    %8 = vector.load %arg1[%c0_6, %c1, %c0_7] : memref<1x5x16xbf16, #tpu.memory_space<vmem>>, vector<1x1x16xbf16>
    %9 = vector.shape_cast %8 : vector<1x1x16xbf16> to vector<1x16xbf16>
    %cst_8 = arith.constant 2.001950e-01 : bf16
    %10 = vector.broadcast %cst_8 : bf16 to vector<1x16xbf16>
    %11 = arith.mulf %10, %9 : vector<1x16xbf16>
    %12 = arith.maximumf %9, %11 : vector<1x16xbf16>
    %c1_9 = arith.constant 1 : index
    %c0_10 = arith.constant 0 : index
    %c0_11 = arith.constant 0 : index
    %13 = vector.load %arg2[%c1_9, %c0_10, %c0_11] : memref<5x16x16xbf16, #tpu.memory_space<vmem>>, vector<1x16x16xbf16>
    %14 = vector.shape_cast %13 : vector<1x16x16xbf16> to vector<16x16xbf16>
    %cst_12 = arith.constant dense<0.000000e+00> : vector<1x16xf32>
    %15 = tpu.matmul %12, %14, %cst_12 {dimension_numbers = #tpu.dot_dimension_numbers<[1], [0], [0], [1], [0, 0, 1, 1], [], []>} : vector<1x16xbf16>, vector<16x16xbf16>, vector<1x16xf32> -> vector<1x16xf32>
    %16 = arith.addf %7, %15 : vector<1x16xf32>
    %c0_13 = arith.constant 0 : index
    %c2 = arith.constant 2 : index
    %c0_14 = arith.constant 0 : index
    %17 = vector.load %arg1[%c0_13, %c2, %c0_14] : memref<1x5x16xbf16, #tpu.memory_space<vmem>>, vector<1x1x16xbf16>
    %18 = vector.shape_cast %17 : vector<1x1x16xbf16> to vector<1x16xbf16>
    %cst_15 = arith.constant 2.001950e-01 : bf16
    %19 = vector.broadcast %cst_15 : bf16 to vector<1x16xbf16>
    %20 = arith.mulf %19, %18 : vector<1x16xbf16>
    %21 = arith.maximumf %18, %20 : vector<1x16xbf16>
    %c2_16 = arith.constant 2 : index
    %c0_17 = arith.constant 0 : index
    %c0_18 = arith.constant 0 : index
    %22 = vector.load %arg2[%c2_16, %c0_17, %c0_18] : memref<5x16x16xbf16, #tpu.memory_space<vmem>>, vector<1x16x16xbf16>
    %23 = vector.shape_cast %22 : vector<1x16x16xbf16> to vector<16x16xbf16>
    %cst_19 = arith.constant dense<0.000000e+00> : vector<1x16xf32>
    %24 = tpu.matmul %21, %23, %cst_19 {dimension_numbers = #tpu.dot_dimension_numbers<[1], [0], [0], [1], [0, 0, 1, 1], [], []>} : vector<1x16xbf16>, vector<16x16xbf16>, vector<1x16xf32> -> vector<1x16xf32>
    %25 = arith.addf %16, %24 : vector<1x16xf32>
    %c0_20 = arith.constant 0 : index
    %c3 = arith.constant 3 : index
    %c0_21 = arith.constant 0 : index
    %26 = vector.load %arg1[%c0_20, %c3, %c0_21] : memref<1x5x16xbf16, #tpu.memory_space<vmem>>, vector<1x1x16xbf16>
    %27 = vector.shape_cast %26 : vector<1x1x16xbf16> to vector<1x16xbf16>
    %cst_22 = arith.constant 2.001950e-01 : bf16
    %28 = vector.broadcast %cst_22 : bf16 to vector<1x16xbf16>
    %29 = arith.mulf %28, %27 : vector<1x16xbf16>
    %30 = arith.maximumf %27, %29 : vector<1x16xbf16>
    %c3_23 = arith.constant 3 : index
    %c0_24 = arith.constant 0 : index
    %c0_25 = arith.constant 0 : index
    %31 = vector.load %arg2[%c3_23, %c0_24, %c0_25] : memref<5x16x16xbf16, #tpu.memory_space<vmem>>, vector<1x16x16xbf16>
    %32 = vector.shape_cast %31 : vector<1x16x16xbf16> to vector<16x16xbf16>
    %cst_26 = arith.constant dense<0.000000e+00> : vector<1x16xf32>
    %33 = tpu.matmul %30, %32, %cst_26 {dimension_numbers = #tpu.dot_dimension_numbers<[1], [0], [0], [1], [0, 0, 1, 1], [], []>} : vector<1x16xbf16>, vector<16x16xbf16>, vector<1x16xf32> -> vector<1x16xf32>
    %34 = arith.addf %25, %33 : vector<1x16xf32>
    %c0_27 = arith.constant 0 : index
    %c4 = arith.constant 4 : index
    %c0_28 = arith.constant 0 : index
    %35 = vector.load %arg1[%c0_27, %c4, %c0_28] : memref<1x5x16xbf16, #tpu.memory_space<vmem>>, vector<1x1x16xbf16>
    %36 = vector.shape_cast %35 : vector<1x1x16xbf16> to vector<1x16xbf16>
    %cst_29 = arith.constant 2.001950e-01 : bf16
    %37 = vector.broadcast %cst_29 : bf16 to vector<1x16xbf16>
    %38 = arith.mulf %37, %36 : vector<1x16xbf16>
    %39 = arith.maximumf %36, %38 : vector<1x16xbf16>
    %c4_30 = arith.constant 4 : index
    %c0_31 = arith.constant 0 : index
    %c0_32 = arith.constant 0 : index
    %40 = vector.load %arg2[%c4_30, %c0_31, %c0_32] : memref<5x16x16xbf16, #tpu.memory_space<vmem>>, vector<1x16x16xbf16>
    %41 = vector.shape_cast %40 : vector<1x16x16xbf16> to vector<16x16xbf16>
    %cst_33 = arith.constant dense<0.000000e+00> : vector<1x16xf32>
    %42 = tpu.matmul %39, %41, %cst_33 {dimension_numbers = #tpu.dot_dimension_numbers<[1], [0], [0], [1], [0, 0, 1, 1], [], []>} : vector<1x16xbf16>, vector<16x16xbf16>, vector<1x16xf32> -> vector<1x16xf32>
    %43 = arith.addf %34, %42 : vector<1x16xf32>
    %c0_34 = arith.constant 0 : index
    %c0_35 = arith.constant 0 : index
    %44 = vector.load %arg3[%c0_34, %c0_35] : memref<1x16xf32, #tpu.memory_space<vmem>>, vector<1x16xf32>
    %45 = arith.addf %43, %44 : vector<1x16xf32>
    %46 = arith.truncf %45 : vector<1x16xf32> to vector<1x16xbf16>
    %c0_36 = arith.constant 0 : index
    %c0_37 = arith.constant 0 : index
    %c0_38 = arith.constant 0 : index
    %47 = vector.load %arg6[%c0_36, %c0_37, %c0_38] : memref<1x1x16xbf16, #tpu.memory_space<vmem>>, vector<1x1x16xbf16>
    %48 = vector.shape_cast %47 : vector<1x1x16xbf16> to vector<1x16xbf16>
    %49 = vector.shape_cast %46 : vector<1x16xbf16> to vector<1x1x16xbf16>
    tpu.vector_store %arg6[%c0_36, %c0_37, %c0_38], %49 {strides = array<i32>} : memref<1x1x16xbf16, #tpu.memory_space<vmem>>, vector<1x1x16xbf16>,
    %cst_39 = arith.constant 2.000000e-01 : f32
    %50 = vector.broadcast %cst_39 : f32 to vector<1x16xf32>
    %51 = arith.mulf %50, %45 : vector<1x16xf32>
    %52 = arith.maximumf %45, %51 : vector<1x16xf32>
    %c1_40 = arith.constant 1 : index
    %c0_41 = arith.constant 0 : index
    %c0_42 = arith.constant 0 : index
    %53 = vector.load %arg4[%c1_40, %c0_41, %c0_42] : memref<3x1x16xf32, #tpu.memory_space<vmem>>, vector<1x1x16xf32>
    %54 = vector.shape_cast %53 : vector<1x1x16xf32> to vector<1x16xf32>
    %55 = arith.mulf %52, %54 : vector<1x16xf32>
    %cst_43 = arith.constant dense<0.000000e+00> : vector<1xf32>
    %56 = vector.multi_reduction <add>, %55, %cst_43 [1] : vector<1x16xf32> to vector<1xf32>
    %57 = vector.shape_cast %56 : vector<1xf32> to vector<1x1xf32>
    %c0_44 = arith.constant 0 : index
    %c0_45 = arith.constant 0 : index
    %58 = vector.load %arg5[%c0_44, %c0_45] : memref<1x1xf32, #tpu.memory_space<vmem>>, vector<1x1xf32>
    %59 = arith.addf %57, %58 : vector<1x1xf32>
    %c0_46 = arith.constant 0 : index
    %c0_47 = arith.constant 0 : index
    %c0_48 = arith.constant 0 : index
    %60 = vector.load %arg7[%c0_46, %c0_47, %c0_48] : memref<1x1x1xf32, #tpu.memory_space<vmem>>, vector<1x1x1xf32>
    %61 = vector.shape_cast %60 : vector<1x1x1xf32> to vector<1x1xf32>
    %62 = vector.shape_cast %59 : vector<1x1xf32> to vector<1x1x1xf32>
    tpu.vector_store %arg7[%c0_46, %c0_47, %c0_48], %62 {strides = array<i32>} : memref<1x1x1xf32, #tpu.memory_space<vmem>>, vector<1x1x1xf32>,
    return
  }
  func.func @transform_0(%arg0: i32) -> (i32, i32, i32) {
    %c0_i32 = arith.constant 0 : i32
    %c0_i32_0 = arith.constant 0 : i32
    %c0_i32_1 = arith.constant 0 : i32
    return %arg0, %c0_i32, %c0_i32_0 : i32, i32, i32
  }
  func.func @transform_1(%arg0: i32) -> (i32, i32, i32) {
    %c0_i32 = arith.constant 0 : i32
    %c0_i32_0 = arith.constant 0 : i32
    %c0_i32_1 = arith.constant 0 : i32
    %c0_i32_2 = arith.constant 0 : i32
    return %c0_i32, %c0_i32_0, %c0_i32_1 : i32, i32, i32
  }
  func.func @transform_2(%arg0: i32) -> (i32, i32) {
    %c0_i32 = arith.constant 0 : i32
    %c0_i32_0 = arith.constant 0 : i32
    %c0_i32_1 = arith.constant 0 : i32
    return %c0_i32, %c0_i32_0 : i32, i32
  }
  func.func @transform_3(%arg0: i32) -> (i32, i32, i32) {
    %c0_i32 = arith.constant 0 : i32
    %c0_i32_0 = arith.constant 0 : i32
    %c0_i32_1 = arith.constant 0 : i32
    %c0_i32_2 = arith.constant 0 : i32
    return %c0_i32, %c0_i32_0, %c0_i32_1 : i32, i32, i32
  }
  func.func @transform_4(%arg0: i32) -> (i32, i32) {
    %c0_i32 = arith.constant 0 : i32
    %c0_i32_0 = arith.constant 0 : i32
    %c0_i32_1 = arith.constant 0 : i32
    return %c0_i32, %c0_i32_0 : i32, i32
  }
  func.func @transform_5(%arg0: i32) -> (i32, i32, i32) {
    %c0_i32 = arith.constant 0 : i32
    %c0_i32_0 = arith.constant 0 : i32
    %c0_i32_1 = arith.constant 0 : i32
    return %arg0, %c0_i32, %c0_i32_0 : i32, i32, i32
  }
  func.func @transform_6(%arg0: i32) -> (i32, i32, i32) {
    %c0_i32 = arith.constant 0 : i32
    %c0_i32_0 = arith.constant 0 : i32
    %c0_i32_1 = arith.constant 0 : i32
    return %arg0, %c0_i32, %c0_i32_0 : i32, i32, i32
  }
}

</mosaic_0001>

<llo_original>
// kernel: _disc_p_forward.5
$region0: #{_disc_p_forward.5}
  #allocation0 [shape = 'u32[]', space=smem, size = 0x4, offset = 0x4, fixed_abs, tag = 'smem constant byte address 0x4 - core index']
  #allocation1 [shape = 'u32[144,128]{1,0:T(1,128)}', space=vmem, size = 0x12000, scoped, tag = 'internal scratch']
  %s0 = inlined_call_operand.vmem [shape: bf16[4,12,3], index: 0, kind: input, shape index: {}]
  %s1 = inlined_call_operand.vmem [shape: bf16[5,1,4], index: 1, kind: input, shape index: {}]
  %s2 = inlined_call_operand.vmem [shape: f32[1,4], index: 2, kind: input, shape index: {}]
  %s3 = inlined_call_operand.vmem [shape: bf16[4,11,4], index: 3, kind: output, shape index: {}]
  %s4 = sld [smem:[#allocation0]]
  $region45: #{_disc_p_forward.5} parent=0
    _
  %s6 = ssub.s32 1, %s4
  %s7 = scalar_select 0, %s6, %s4
  loop: start=0, step=1, limit=6
  $region2: #{_disc_p_forward.5} parent=0 // loop_pre_header
    _
  $region3: #{_disc_p_forward.5} parent=0 // loop_header
    %s9 = sphi 0, %s13
    %p10 = scmp.ge.s32.totalorder %s9, 6
    %s16 = sphi 0, %s28
    %s17 = sphi 0, %s24
    %s18 = sphi 0, %s16
    %s19 = sphi 0, %s17
    %s20 = sphi 0, %s18
    %s21 = sphi 0, %s19
    %s31 = sphi 0, %s33
    %s34 = sphi 0, %s31
    %s35 = sphi 0, %s34
    %s51 = sphi 0, %s35
    %s57 = sphi 0, %s59
    %s60 = sphi 0, %s57
    %s61 = sphi 0, %s60
    %s77 = sphi 0, %s61
    %s83 = sphi 0, %s85
    %s86 = sphi 0, %s83
    %s87 = sphi 0, %s86
    %s103 = sphi 0, %s87
    %s111 = sphi 0, %s113
    %s114 = sphi 0, %s111
    %s115 = sphi 0, %s114
    %s131 = sphi 0, %s115
  $region4: #{_disc_p_forward.5} parent=0 // loop_header_branch
    %12 = sbr.rel (%p10) target = $region8
  $region5: #{_disc_p_forward.5} parent=0 // loop_body
    %s14 = ssub.s32 %s9, 1
    %s15 = ssub.s32 %s9, 2
    %s22 = sadd.s32 1, %s17
    %p23 = scmp.ge.s32.totalorder %s22, 1
    %s24 = scalar_select %p23, 0, %s22
    %s25 = sadd.s32 1, %s16
    %s26 = scalar_select %p23, %s25, %s16
    %p27 = scmp.ge.s32.totalorder %s26, 4
    %s28 = scalar_select %p27, 0, %s26
    %s29 = ssub.s32 %s16, %s28
    %p30 = scmp.eq.s32.totalorder %s29, 0
    %s32 = sadd.s32 %s31, 1
    %s33 = scalar_select %p30, %s31, %s32
    %p36 = pneg %p30
    %p37 = scmp.eq.s32.totalorder %s9, 3
    %p38 = por %p36, %p37
    %p39 = scmp.ne.s32.totalorder %s31, %s34
    %p40 = scmp.eq.s32.totalorder %s9, 0
    %p41 = por %p39, %p40
    %p42 = scmp.ne.s32.totalorder %s31, %s34
    %p43 = scmp.eq.s32.totalorder %s14, 3
    %p44 = por %p42, %p43
    %p45 = scmp.ne.s32.totalorder %s34, %s35
    %p46 = scmp.eq.s32.totalorder %s14, 0
    %p47 = por %p45, %p46
    %p48 = scmp.ne.s32.totalorder %s34, %s35
    %p49 = scmp.eq.s32.totalorder %s15, 3
    %p50 = por %p48, %p49
    %p52 = scmp.ne.s32.totalorder %s35, %s51
    %p53 = scmp.eq.s32.totalorder %s15, 0
    %p54 = por %p52, %p53
    %s55 = ssub.s32 %s17, %s24
    %p56 = scmp.eq.s32.totalorder %s55, 0
    %s58 = sadd.s32 %s57, 1
    %s59 = scalar_select %p56, %s57, %s58
    %p62 = pneg %p56
    %p63 = scmp.eq.s32.totalorder %s9, 3
    %p64 = por %p62, %p63
    %p65 = scmp.ne.s32.totalorder %s57, %s60
    %p66 = scmp.eq.s32.totalorder %s9, 0
    %p67 = por %p65, %p66
    %p68 = scmp.ne.s32.totalorder %s57, %s60
    %p69 = scmp.eq.s32.totalorder %s14, 3
    %p70 = por %p68, %p69
    %p71 = scmp.ne.s32.totalorder %s60, %s61
    %p72 = scmp.eq.s32.totalorder %s14, 0
    %p73 = por %p71, %p72
    %p74 = scmp.ne.s32.totalorder %s60, %s61
    %p75 = scmp.eq.s32.totalorder %s15, 3
    %p76 = por %p74, %p75
    %p78 = scmp.ne.s32.totalorder %s61, %s77
    %p79 = scmp.eq.s32.totalorder %s15, 0
    %p80 = por %p78, %p79
    %s81 = ssub.s32 %s17, %s24
    %p82 = scmp.eq.s32.totalorder %s81, 0
    %s84 = sadd.s32 %s83, 1
    %s85 = scalar_select %p82, %s83, %s84
    %p88 = pneg %p82
    %p89 = scmp.eq.s32.totalorder %s9, 3
    %p90 = por %p88, %p89
    %p91 = scmp.ne.s32.totalorder %s83, %s86
    %p92 = scmp.eq.s32.totalorder %s9, 0
    %p93 = por %p91, %p92
    %p94 = scmp.ne.s32.totalorder %s83, %s86
    %p95 = scmp.eq.s32.totalorder %s14, 3
    %p96 = por %p94, %p95
    %p97 = scmp.ne.s32.totalorder %s86, %s87
    %p98 = scmp.eq.s32.totalorder %s14, 0
    %p99 = por %p97, %p98
    %p100 = scmp.ne.s32.totalorder %s86, %s87
    %p101 = scmp.eq.s32.totalorder %s15, 3
    %p102 = por %p100, %p101
    %p104 = scmp.ne.s32.totalorder %s87, %s103
    %p105 = scmp.eq.s32.totalorder %s15, 0
    %p106 = por %p104, %p105
    %s107 = ssub.s32 %s16, %s28
    %s108 = ssub.s32 %s17, %s24
    %s109 = sor.u32 %s107, %s108
    %p110 = scmp.eq.s32.totalorder %s109, 0
    %s112 = sadd.s32 %s111, 1
    %s113 = scalar_select %p110, %s111, %s112
    %p116 = pneg %p110
    %p117 = scmp.eq.s32.totalorder %s9, 3
    %p118 = por %p116, %p117
    %p119 = scmp.ne.s32.totalorder %s111, %s114
    %p120 = scmp.eq.s32.totalorder %s9, 0
    %p121 = por %p119, %p120
    %p122 = scmp.ne.s32.totalorder %s111, %s114
    %p123 = scmp.eq.s32.totalorder %s14, 3
    %p124 = por %p122, %p123
    %p125 = scmp.ne.s32.totalorder %s114, %s115
    %p126 = scmp.eq.s32.totalorder %s14, 0
    %p127 = por %p125, %p126
    %p128 = scmp.ne.s32.totalorder %s114, %s115
    %p129 = scmp.eq.s32.totalorder %s15, 3
    %p130 = por %p128, %p129
    %p132 = scmp.ne.s32.totalorder %s115, %s131
    %p133 = scmp.eq.s32.totalorder %s15, 0
    %p134 = por %p132, %p133
    %p135 = scmp.le.s32.totalorder 1, %s9
    %p136 = scmp.lt.s32.totalorder %s9, 5
    %p137 = pnand %p135, %p136
    %p138 = pneg %p137
    // Predicated region
    $region9: #{_disc_p_forward.5} parent=5 // pred_check
      _
    $region10: #{_disc_p_forward.5} parent=5 // pred_check_branch
      %140 = sbr.rel (%p137) target = $region12
    $region11: #{_disc_p_forward.5} parent=5 // pred_region
      %s141 = ssub.s32 %s9, 1
      // Predicated region
      $region13: #{_disc_p_forward.5} parent=11 // pred_check
        %p142 = pneg %p73
      $region14: #{_disc_p_forward.5} parent=11 // pred_check_branch
        %144 = sbr.rel (%p142) target = $region16
      $region15: #{_disc_p_forward.5} parent=11 // pred_region
        %p145 = scmp.lt.s32.totalorder %s19, 0
        %s146 = scalar_select %p145, %s19, 0
        %s147 = scalar_lea.vmem %s1, %s146
      $region16: #{_disc_p_forward.5} parent=11 // pred_fallthru
        _
      // Predicated region
      $region17: #{_disc_p_forward.5} parent=11 // pred_check
        %p148 = pneg %p99
      $region18: #{_disc_p_forward.5} parent=11 // pred_check_branch
        %150 = sbr.rel (%p148) target = $region20
      $region19: #{_disc_p_forward.5} parent=11 // pred_region
        %p151 = scmp.lt.s32.totalorder %s19, 0
        %s152 = scalar_select %p151, %s19, 0
        %s153 = scalar_lea.vmem %s2, %s152
      $region20: #{_disc_p_forward.5} parent=11 // pred_fallthru
        _
    $region12: #{_disc_p_forward.5} parent=5 // pred_fallthru
      _
    %p154 = scmp.lt.s32.totalorder %s9, 4
    // Predicated region
    $region21: #{_disc_p_forward.5} parent=5 // pred_check
      %p155 = pneg %p154
    $region22: #{_disc_p_forward.5} parent=5 // pred_check_branch
      %157 = sbr.rel (%p155) target = $region24
    $region23: #{_disc_p_forward.5} parent=5 // pred_region
      // Predicated region
      $region25: #{_disc_p_forward.5} parent=23 // pred_check
        %p158 = pneg %p41
      $region26: #{_disc_p_forward.5} parent=23 // pred_check_branch
        %160 = sbr.rel (%p158) target = $region28
      $region27: #{_disc_p_forward.5} parent=23 // pred_region
        %p161 = scmp.lt.s32.totalorder %s16, 3
        %s162 = scalar_select %p161, %s16, 3
        %s163 = smul.addr %s162, 2
        %s164 = smul.addr %s163, 4
        %s165 = scalar_lea.vmem %s0, %s164
      $region28: #{_disc_p_forward.5} parent=23 // pred_fallthru
        _
    $region24: #{_disc_p_forward.5} parent=5 // pred_fallthru
      _
    %p166 = scmp.le.s32.totalorder 1, %s9
    %p167 = scmp.lt.s32.totalorder %s9, 5
    %p168 = pnand %p166, %p167
    %p169 = pneg %p168
    // Predicated region
    $region29: #{_disc_p_forward.5} parent=5 // pred_check
      _
    $region30: #{_disc_p_forward.5} parent=5 // pred_check_branch
      %171 = sbr.rel (%p168) target = $region32
    $region31: #{_disc_p_forward.5} parent=5 // pred_region
      %s172 = ssub.s32 %s9, 1
      %p173 = scmp.lt.s32.totalorder %s18, 3
      %s174 = scalar_select %p173, %s18, 3
      %s175 = smul.addr %s174, 2
      %s176 = smul.addr %s175, 4
      %s177 = scalar_lea.vmem %s0, %s176
      %p178 = pneg %p47
      %p179 = pneg %p44
      %p180 = scmp.lt.s32.totalorder %s19, 0
      %s181 = scalar_select %p180, %s19, 0
      %s182 = scalar_lea.vmem %s1, %s181
      %p183 = pneg %p73
      %p184 = pneg %p70
      %p185 = scmp.lt.s32.totalorder %s19, 0
      %s186 = scalar_select %p185, %s19, 0
      %s187 = scalar_lea.vmem %s2, %s186
      %p188 = pneg %p99
      %p189 = pneg %p96
      %p190 = pneg %p127
      %p191 = pneg %p124
      %p192 = scmp.lt.s32.totalorder %s18, 3
      %s193 = scalar_select %p192, %s18, 3
      %p194 = scmp.lt.s32.totalorder %s19, 0
      %s195 = scalar_select %p194, %s19, 0
      %s196 = smul.addr %s193, 2
      %s197 = sadd.s32 %s195, %s196
      %s198 = smul.addr %s197, 4
      %s199 = scalar_lea.vmem %s3, %s198
      %p200 = scmp.lt.s32.totalorder %s18, 3
      %s201 = scalar_select %p200, %s18, 3
      %s202 = smul.addr %s201, 2
      %s203 = smul.addr %s202, 4
      %s204 = scalar_lea.vmem %s0, %s203
      %p205 = scmp.lt.s32.totalorder %s19, 0
      %s206 = scalar_select %p205, %s19, 0
      %s207 = scalar_lea.vmem %s1, %s206
      %p208 = scmp.lt.s32.totalorder %s19, 0
      %s209 = scalar_select %p208, %s19, 0
      %s210 = scalar_lea.vmem %s2, %s209
      %p211 = scmp.lt.s32.totalorder %s18, 3
      %s212 = scalar_select %p211, %s18, 3
      %p213 = scmp.lt.s32.totalorder %s19, 0
      %s214 = scalar_select %p213, %s19, 0
      %s215 = smul.addr %s212, 2
      %s216 = sadd.s32 %s214, %s215
      %s217 = smul.addr %s216, 4
      %s218 = scalar_lea.vmem %s3, %s217
      %v219 = vld [vmem:[%s204] sm:$0xf]
      %v220 = vld [vmem:[%s204 + $0x4] sm:$0x3]
      %v221 = vunpack.c.l.bf16 %v219
      %v222 = vunpack.c.l.bf16 %v220
      %v223 = vld [vmem:[%s207] sm:$0x1]
      %v224 = vunpack.c.l.bf16 %v223
      %226 = vset.pattern.permute.xlu0 0
      %227 = vperm.xlu0 %226, %v221
      %v228 = vpop.permute.xlu0 %227
      %231 = vset.pattern.permute.xlu0 0
      %232 = vperm.xlu0 %231, %v222
      %v233 = vpop.permute.xlu0 %232
      %v235 = vlaneseq
      %v236 = vshrl.u32 %v235, 7
      %v237 = vsub.s32 0, %v236
      %v238 = vrot.slane %v224, %v237
      %v239 = vmul.f32 %v228, %v238
      %v240 = vmul.f32 %v233, %v238
      %s241 = scalar_lea.vmem %s207, 1
      %v242 = vld [vmem:[%s241] sm:$0x1]
      %v243 = vunpack.c.l.bf16 %v242
      %244 = vset.pattern.permute.xlu0 1
      %245 = vperm.xlu0 %244, %v221
      %v246 = vpop.permute.xlu0 %245
      %248 = vset.pattern.permute.xlu0 1
      %249 = vperm.xlu0 %248, %v222
      %v250 = vpop.permute.xlu0 %249
      %v252 = vlaneseq
      %v253 = vshrl.u32 %v252, 7
      %v254 = vsub.s32 0, %v253
      %v255 = vrot.slane %v243, %v254
      %v256 = vmul.f32 %v246, %v255
      %v257 = vmul.f32 %v250, %v255
      %v258 = vadd.f32 %v239, %v256
      %v259 = vadd.f32 %v240, %v257
      %s260 = scalar_lea.vmem %s207, 2
      %v261 = vld [vmem:[%s260] sm:$0x1]
      %v262 = vunpack.c.l.bf16 %v261
      %263 = vset.pattern.permute.xlu0 2
      %264 = vperm.xlu0 %263, %v221
      %v265 = vpop.permute.xlu0 %264
      %267 = vset.pattern.permute.xlu0 2
      %268 = vperm.xlu0 %267, %v222
      %v269 = vpop.permute.xlu0 %268
      %v271 = vlaneseq
      %v272 = vshrl.u32 %v271, 7
      %v273 = vsub.s32 0, %v272
      %v274 = vrot.slane %v262, %v273
      %v275 = vmul.f32 %v265, %v274
      %v276 = vmul.f32 %v269, %v274
      %v277 = vadd.f32 %v258, %v275
      %v278 = vadd.f32 %v259, %v276
      %s279 = scalar_lea.vmem %s207, 3
      %v280 = vld [vmem:[%s279] sm:$0x1]
      %v281 = vunpack.c.l.bf16 %v280
      %v282 = vlaneseq
      %v283 = vshrl.u32 %v282, 7
      %v284 = vsub.s32 0, %v283
      %v285 = vrot.slane %v281, %v284
      %v286 = vmul.f32 %v228, %v285
      %v287 = vmul.f32 %v233, %v285
      %vm290 = vcmask 1046528
      %v291 = vrot.slane %v286, 1
      %v292 = vrot.slane %v287, 1
      %v293 = vsel %vm290, %v291, %v292
      %v296 = vadd.f32 %v277, %v293
      %v297 = vadd.f32 %v278, %v292
      %s298 = scalar_lea.vmem %s207, 4
      %v299 = vld [vmem:[%s298] sm:$0x1]
      %v300 = vunpack.c.l.bf16 %v299
      %v301 = vlaneseq
      %v302 = vshrl.u32 %v301, 7
      %v303 = vsub.s32 0, %v302
      %v304 = vrot.slane %v300, %v303
      %v305 = vmul.f32 %v246, %v304
      %v306 = vmul.f32 %v250, %v304
      %v309 = vrot.slane %v305, 1
      %v310 = vrot.slane %v306, 1
      %v311 = vsel %vm290, %v309, %v310
      %v314 = vadd.f32 %v296, %v311
      %v315 = vadd.f32 %v297, %v310
      %v316 = vld [vmem:[%s210] sm:$0x1]
      %v318 = vlaneseq
      %v319 = vshrl.u32 %v318, 7
      %v320 = vsub.s32 0, %v319
      %v321 = vrot.slane %v316, %v320
      %v323 = vadd.f32 %v314, %v321
      %v324 = vadd.f32 %v315, %v321
      %v325 = vpack.c.bf16 %v324, %v323
      %v327 = vunpack.c.l.b16 %v325
      %v328 = vunpack.c.h.b16 %v325
      %v329 = vpack.c.b16 %v327, %v327
      %v330 = vpack.c.b16 %v328, %v328
      %vm333 = vcmask 27648
      %334 = vst.msk [vmem:[%s218] sm:$0xf] %vm333, %v329
      %vm335 = vcmask 25600
      %vm336 = vsmask.f32 1280
      %vm337 = vmand %vm335, %vm336
      %v338 = vld [vmem:[%s218 + $0x4] sm:$0x3]
      %v339 = vsel %vm337, %v330, %v338
      %340 = vst [vmem:[%s218 + $0x4] sm:$0x3] %v339
      %p341 = scmp.lt.s32.totalorder %s18, 3
      %s342 = scalar_select %p341, %s18, 3
      %p343 = scmp.lt.s32.totalorder %s19, 0
      %s344 = scalar_select %p343, %s19, 0
      %s345 = smul.addr %s342, 2
      %s346 = sadd.s32 %s344, %s345
      %s347 = smul.addr %s346, 4
      %s348 = scalar_lea.vmem %s3, %s347
      // Predicated region
      $region33: #{_disc_p_forward.5} parent=31 // pred_check
        %p349 = pneg %p124
      $region34: #{_disc_p_forward.5} parent=31 // pred_check_branch
        %351 = sbr.rel (%p349) target = $region36
      $region35: #{_disc_p_forward.5} parent=31 // pred_region
        _
      $region36: #{_disc_p_forward.5} parent=31 // pred_fallthru
        _
    $region32: #{_disc_p_forward.5} parent=5 // pred_fallthru
      _
    %p352 = scmp.le.s32.totalorder 2, %s9
    // Predicated region
    $region37: #{_disc_p_forward.5} parent=5 // pred_check
      %p353 = pneg %p352
    $region38: #{_disc_p_forward.5} parent=5 // pred_check_branch
      %355 = sbr.rel (%p353) target = $region40
    $region39: #{_disc_p_forward.5} parent=5 // pred_region
      %s356 = ssub.s32 %s9, 2
      // Predicated region
      $region41: #{_disc_p_forward.5} parent=39 // pred_check
        %p357 = pneg %p130
      $region42: #{_disc_p_forward.5} parent=39 // pred_check_branch
        %359 = sbr.rel (%p357) target = $region44
      $region43: #{_disc_p_forward.5} parent=39 // pred_region
        %p360 = scmp.lt.s32.totalorder %s20, 3
        %s361 = scalar_select %p360, %s20, 3
        %p362 = scmp.lt.s32.totalorder %s21, 0
        %s363 = scalar_select %p362, %s21, 0
        %s364 = smul.addr %s361, 2
        %s365 = sadd.s32 %s363, %s364
        %s366 = smul.addr %s365, 4
        %s367 = scalar_lea.vmem %s3, %s366
      $region44: #{_disc_p_forward.5} parent=39 // pred_fallthru
        _
    $region40: #{_disc_p_forward.5} parent=5 // pred_fallthru
      _
  $region6: #{_disc_p_forward.5} parent=0 // loop_footer
    %s13 = sadd.s32 1, %s9
  $region7: #{_disc_p_forward.5} parent=0 // loop_footer_branch
    %8 = sbr.rel target = $region3
  $region8: #{_disc_p_forward.5} parent=0 // loop_exit
    _

// kernel: _disc_p_forward.6
$region0: #{_disc_p_forward.6}
  #allocation0 [shape = 'u32[]', space=smem, size = 0x4, offset = 0x4, fixed_abs, tag = 'smem constant byte address 0x4 - core index']
  #allocation1 [shape = 'u32[144,128]{1,0:T(1,128)}', space=vmem, size = 0x12000, scoped, tag = 'internal scratch']
  %s0 = inlined_call_operand.vmem [shape: bf16[4,5,12], index: 0, kind: input, shape index: {}]
  %s1 = inlined_call_operand.vmem [shape: bf16[5,4,16], index: 1, kind: input, shape index: {}]
  %s2 = inlined_call_operand.vmem [shape: f32[1,16], index: 2, kind: input, shape index: {}]
  %s3 = inlined_call_operand.vmem [shape: bf16[4,4,16], index: 3, kind: output, shape index: {}]
  %s4 = sld [smem:[#allocation0]]
  $region45: #{_disc_p_forward.6} parent=0
    _
  %s6 = ssub.s32 1, %s4
  %s7 = scalar_select 0, %s6, %s4
  loop: start=0, step=1, limit=6
  $region2: #{_disc_p_forward.6} parent=0 // loop_pre_header
    _
  $region3: #{_disc_p_forward.6} parent=0 // loop_header
    %s9 = sphi 0, %s13
    %p10 = scmp.ge.s32.totalorder %s9, 6
    %s16 = sphi 0, %s28
    %s17 = sphi 0, %s24
    %s18 = sphi 0, %s16
    %s19 = sphi 0, %s17
    %s20 = sphi 0, %s18
    %s21 = sphi 0, %s19
    %s31 = sphi 0, %s33
    %s34 = sphi 0, %s31
    %s35 = sphi 0, %s34
    %s51 = sphi 0, %s35
    %s57 = sphi 0, %s59
    %s60 = sphi 0, %s57
    %s61 = sphi 0, %s60
    %s77 = sphi 0, %s61
    %s83 = sphi 0, %s85
    %s86 = sphi 0, %s83
    %s87 = sphi 0, %s86
    %s103 = sphi 0, %s87
    %s111 = sphi 0, %s113
    %s114 = sphi 0, %s111
    %s115 = sphi 0, %s114
    %s131 = sphi 0, %s115
  $region4: #{_disc_p_forward.6} parent=0 // loop_header_branch
    %12 = sbr.rel (%p10) target = $region8
  $region5: #{_disc_p_forward.6} parent=0 // loop_body
    %s14 = ssub.s32 %s9, 1
    %s15 = ssub.s32 %s9, 2
    %s22 = sadd.s32 1, %s17
    %p23 = scmp.ge.s32.totalorder %s22, 1
    %s24 = scalar_select %p23, 0, %s22
    %s25 = sadd.s32 1, %s16
    %s26 = scalar_select %p23, %s25, %s16
    %p27 = scmp.ge.s32.totalorder %s26, 4
    %s28 = scalar_select %p27, 0, %s26
    %s29 = ssub.s32 %s16, %s28
    %p30 = scmp.eq.s32.totalorder %s29, 0
    %s32 = sadd.s32 %s31, 1
    %s33 = scalar_select %p30, %s31, %s32
    %p36 = pneg %p30
    %p37 = scmp.eq.s32.totalorder %s9, 3
    %p38 = por %p36, %p37
    %p39 = scmp.ne.s32.totalorder %s31, %s34
    %p40 = scmp.eq.s32.totalorder %s9, 0
    %p41 = por %p39, %p40
    %p42 = scmp.ne.s32.totalorder %s31, %s34
    %p43 = scmp.eq.s32.totalorder %s14, 3
    %p44 = por %p42, %p43
    %p45 = scmp.ne.s32.totalorder %s34, %s35
    %p46 = scmp.eq.s32.totalorder %s14, 0
    %p47 = por %p45, %p46
    %p48 = scmp.ne.s32.totalorder %s34, %s35
    %p49 = scmp.eq.s32.totalorder %s15, 3
    %p50 = por %p48, %p49
    %p52 = scmp.ne.s32.totalorder %s35, %s51
    %p53 = scmp.eq.s32.totalorder %s15, 0
    %p54 = por %p52, %p53
    %s55 = ssub.s32 %s17, %s24
    %p56 = scmp.eq.s32.totalorder %s55, 0
    %s58 = sadd.s32 %s57, 1
    %s59 = scalar_select %p56, %s57, %s58
    %p62 = pneg %p56
    %p63 = scmp.eq.s32.totalorder %s9, 3
    %p64 = por %p62, %p63
    %p65 = scmp.ne.s32.totalorder %s57, %s60
    %p66 = scmp.eq.s32.totalorder %s9, 0
    %p67 = por %p65, %p66
    %p68 = scmp.ne.s32.totalorder %s57, %s60
    %p69 = scmp.eq.s32.totalorder %s14, 3
    %p70 = por %p68, %p69
    %p71 = scmp.ne.s32.totalorder %s60, %s61
    %p72 = scmp.eq.s32.totalorder %s14, 0
    %p73 = por %p71, %p72
    %p74 = scmp.ne.s32.totalorder %s60, %s61
    %p75 = scmp.eq.s32.totalorder %s15, 3
    %p76 = por %p74, %p75
    %p78 = scmp.ne.s32.totalorder %s61, %s77
    %p79 = scmp.eq.s32.totalorder %s15, 0
    %p80 = por %p78, %p79
    %s81 = ssub.s32 %s17, %s24
    %p82 = scmp.eq.s32.totalorder %s81, 0
    %s84 = sadd.s32 %s83, 1
    %s85 = scalar_select %p82, %s83, %s84
    %p88 = pneg %p82
    %p89 = scmp.eq.s32.totalorder %s9, 3
    %p90 = por %p88, %p89
    %p91 = scmp.ne.s32.totalorder %s83, %s86
    %p92 = scmp.eq.s32.totalorder %s9, 0
    %p93 = por %p91, %p92
    %p94 = scmp.ne.s32.totalorder %s83, %s86
    %p95 = scmp.eq.s32.totalorder %s14, 3
    %p96 = por %p94, %p95
    %p97 = scmp.ne.s32.totalorder %s86, %s87
    %p98 = scmp.eq.s32.totalorder %s14, 0
    %p99 = por %p97, %p98
    %p100 = scmp.ne.s32.totalorder %s86, %s87
    %p101 = scmp.eq.s32.totalorder %s15, 3
    %p102 = por %p100, %p101
    %p104 = scmp.ne.s32.totalorder %s87, %s103
    %p105 = scmp.eq.s32.totalorder %s15, 0
    %p106 = por %p104, %p105
    %s107 = ssub.s32 %s16, %s28
    %s108 = ssub.s32 %s17, %s24
    %s109 = sor.u32 %s107, %s108
    %p110 = scmp.eq.s32.totalorder %s109, 0
    %s112 = sadd.s32 %s111, 1
    %s113 = scalar_select %p110, %s111, %s112
    %p116 = pneg %p110
    %p117 = scmp.eq.s32.totalorder %s9, 3
    %p118 = por %p116, %p117
    %p119 = scmp.ne.s32.totalorder %s111, %s114
    %p120 = scmp.eq.s32.totalorder %s9, 0
    %p121 = por %p119, %p120
    %p122 = scmp.ne.s32.totalorder %s111, %s114
    %p123 = scmp.eq.s32.totalorder %s14, 3
    %p124 = por %p122, %p123
    %p125 = scmp.ne.s32.totalorder %s114, %s115
    %p126 = scmp.eq.s32.totalorder %s14, 0
    %p127 = por %p125, %p126
    %p128 = scmp.ne.s32.totalorder %s114, %s115
    %p129 = scmp.eq.s32.totalorder %s15, 3
    %p130 = por %p128, %p129
    %p132 = scmp.ne.s32.totalorder %s115, %s131
    %p133 = scmp.eq.s32.totalorder %s15, 0
    %p134 = por %p132, %p133
    %p135 = scmp.le.s32.totalorder 1, %s9
    %p136 = scmp.lt.s32.totalorder %s9, 5
    %p137 = pnand %p135, %p136
    %p138 = pneg %p137
    // Predicated region
    $region9: #{_disc_p_forward.6} parent=5 // pred_check
      _
    $region10: #{_disc_p_forward.6} parent=5 // pred_check_branch
      %140 = sbr.rel (%p137) target = $region12
    $region11: #{_disc_p_forward.6} parent=5 // pred_region
      %s141 = ssub.s32 %s9, 1
      // Predicated region
      $region13: #{_disc_p_forward.6} parent=11 // pred_check
        %p142 = pneg %p73
      $region14: #{_disc_p_forward.6} parent=11 // pred_check_branch
        %144 = sbr.rel (%p142) target = $region16
      $region15: #{_disc_p_forward.6} parent=11 // pred_region
        %p145 = scmp.lt.s32.totalorder %s19, 0
        %s146 = scalar_select %p145, %s19, 0
        %s147 = smul.addr %s146, 2
        %s148 = scalar_lea.vmem %s1, %s147
      $region16: #{_disc_p_forward.6} parent=11 // pred_fallthru
        _
      // Predicated region
      $region17: #{_disc_p_forward.6} parent=11 // pred_check
        %p149 = pneg %p99
      $region18: #{_disc_p_forward.6} parent=11 // pred_check_branch
        %151 = sbr.rel (%p149) target = $region20
      $region19: #{_disc_p_forward.6} parent=11 // pred_region
        %p152 = scmp.lt.s32.totalorder %s19, 0
        %s153 = scalar_select %p152, %s19, 0
        %s154 = scalar_lea.vmem %s2, %s153
      $region20: #{_disc_p_forward.6} parent=11 // pred_fallthru
        _
    $region12: #{_disc_p_forward.6} parent=5 // pred_fallthru
      _
    %p155 = scmp.lt.s32.totalorder %s9, 4
    // Predicated region
    $region21: #{_disc_p_forward.6} parent=5 // pred_check
      %p156 = pneg %p155
    $region22: #{_disc_p_forward.6} parent=5 // pred_check_branch
      %158 = sbr.rel (%p156) target = $region24
    $region23: #{_disc_p_forward.6} parent=5 // pred_region
      // Predicated region
      $region25: #{_disc_p_forward.6} parent=23 // pred_check
        %p159 = pneg %p41
      $region26: #{_disc_p_forward.6} parent=23 // pred_check_branch
        %161 = sbr.rel (%p159) target = $region28
      $region27: #{_disc_p_forward.6} parent=23 // pred_region
        %p162 = scmp.lt.s32.totalorder %s16, 3
        %s163 = scalar_select %p162, %s16, 3
        %s164 = smul.addr %s163, 4
        %s165 = scalar_lea.vmem %s0, %s164
      $region28: #{_disc_p_forward.6} parent=23 // pred_fallthru
        _
    $region24: #{_disc_p_forward.6} parent=5 // pred_fallthru
      _
    %p166 = scmp.le.s32.totalorder 1, %s9
    %p167 = scmp.lt.s32.totalorder %s9, 5
    %p168 = pnand %p166, %p167
    %p169 = pneg %p168
    // Predicated region
    $region29: #{_disc_p_forward.6} parent=5 // pred_check
      _
    $region30: #{_disc_p_forward.6} parent=5 // pred_check_branch
      %171 = sbr.rel (%p168) target = $region32
    $region31: #{_disc_p_forward.6} parent=5 // pred_region
      %s172 = ssub.s32 %s9, 1
      %p173 = scmp.lt.s32.totalorder %s18, 3
      %s174 = scalar_select %p173, %s18, 3
      %s175 = smul.addr %s174, 4
      %s176 = scalar_lea.vmem %s0, %s175
      %p177 = pneg %p47
      %p178 = pneg %p44
      %p179 = scmp.lt.s32.totalorder %s19, 0
      %s180 = scalar_select %p179, %s19, 0
      %s181 = smul.addr %s180, 2
      %s182 = scalar_lea.vmem %s1, %s181
      %p183 = pneg %p73
      %p184 = pneg %p70
      %p185 = scmp.lt.s32.totalorder %s19, 0
      %s186 = scalar_select %p185, %s19, 0
      %s187 = scalar_lea.vmem %s2, %s186
      %p188 = pneg %p99
      %p189 = pneg %p96
      %p190 = pneg %p127
      %p191 = pneg %p124
      %p192 = scmp.lt.s32.totalorder %s18, 3
      %s193 = scalar_select %p192, %s18, 3
      %p194 = scmp.lt.s32.totalorder %s19, 0
      %s195 = scalar_select %p194, %s19, 0
      %s196 = sadd.s32 %s195, %s193
      %s197 = smul.addr %s196, 2
      %s198 = scalar_lea.vmem %s3, %s197
      %p199 = scmp.lt.s32.totalorder %s18, 3
      %s200 = scalar_select %p199, %s18, 3
      %s201 = smul.addr %s200, 4
      %s202 = scalar_lea.vmem %s0, %s201
      %p203 = scmp.lt.s32.totalorder %s19, 0
      %s204 = scalar_select %p203, %s19, 0
      %s205 = smul.addr %s204, 2
      %s206 = scalar_lea.vmem %s1, %s205
      %p207 = scmp.lt.s32.totalorder %s19, 0
      %s208 = scalar_select %p207, %s19, 0
      %s209 = scalar_lea.vmem %s2, %s208
      %p210 = scmp.lt.s32.totalorder %s18, 3
      %s211 = scalar_select %p210, %s18, 3
      %p212 = scmp.lt.s32.totalorder %s19, 0
      %s213 = scalar_select %p212, %s19, 0
      %s214 = sadd.s32 %s213, %s211
      %s215 = smul.addr %s214, 2
      %s216 = scalar_lea.vmem %s3, %s215
      %v219 = vld [vmem:[%s202] sm:$0x3]
      %v220 = vmul.bf16 %v219, 1045249613
      %v221 = vmax.bf16 %v219, %v220
      %v222 = vld [vmem:[%s206] sm:$0x3]
      %s223 = scalar_lea.vmem %s206, 2
      %v224 = vld [vmem:[%s223] sm:$0x3]
      %v226 = vunpack.c.l.b16 %v221
      %v227 = vpack.c.b16 %v226, %v226
      %228 = vrot.lane.b32.xlu0 %v227, 124
      %v229 = vpop.permute.xlu0 %228
      %vm230 = vcmask 31744
      %v232 = vsel %vm230, %v229, 0
      %vm234 = vcmask 1041408
      %v236 = vsel %vm234, %v224, 0
      %238 = vmatprep.subr.bf16.mxu0 0
      %239 = vmatpush1.bf16.msra.mxu0 %v236
      %240 = vmatprep.subr.bf16.mxu0 0
      %241 = vmatpush1.bf16.msra.mxu0 0
      %242 = vmatprep.subr.bf16.mxu0 0
      %243 = vmatpush1.bf16.msra.mxu0 0
      %244 = vmatprep.subr.bf16.mxu0 0
      %245 = vmatpush1.bf16.msra.mxu0 0
      %246 = vmatprep.subr.bf16.mxu0 0
      %247 = vmatpush1.bf16.msra.mxu0 0
      %248 = vmatprep.subr.bf16.mxu0 0
      %249 = vmatpush1.bf16.msra.mxu0 0
      %250 = vmatprep.subr.bf16.mxu0 0
      %251 = vmatpush1.bf16.msra.mxu0 0
      %252 = vmatprep.subr.bf16.mxu0 0
      %253 = vmatpush1.bf16.msra.mxu0 0
      %254 = vmatprep.subr.bf16.mxu0 0
      %255 = vmatpush1.bf16.msra.mxu0 0
      %256 = vmatprep.subr.bf16.mxu0 0
      %257 = vmatpush1.bf16.msra.mxu0 0
      %258 = vmatprep.subr.bf16.mxu0 0
      %259 = vmatpush1.bf16.msra.mxu0 0
      %260 = vmatprep.subr.bf16.mxu0 0
      %261 = vmatpush1.bf16.msra.mxu0 0
      %262 = vmatprep.subr.bf16.mxu0 0
      %263 = vmatpush1.bf16.msra.mxu0 0
      %264 = vmatprep.subr.bf16.mxu0 0
      %265 = vmatpush1.bf16.msra.mxu0 0
      %266 = vmatprep.subr.bf16.mxu0 0
      %267 = vmatpush1.bf16.msra.mxu0 0
      %268 = vmatprep.subr.bf16.mxu0 0
      %269 = vmatpush1.bf16.msra.mxu0 0
      %270 = vmatprep.mubr.bf16.mxu0 0
      %271 = vmatmul.mubr.bf16.gmra.mrb[0].mxu0 %v232
      %v272 = vpop.f32.mrb[0].mxu0
      %v273 = vadd.f32 0.0, %v272
      %v274 = vpop.f32.mrb[0].mxu0
      %v275 = vpop.f32.mrb[0].mxu0
      %v276 = vpop.f32.mrb[0].mxu0
      %277 = vdwg.mxu0
      %v279 = vsel %vm230, %v221, 0
      %v282 = vsel %vm234, %v222, 0
      %284 = vmatprep.subr.bf16.mxu0 0
      %285 = vmatpush1.bf16.msra.mxu0 %v282
      %286 = vmatprep.subr.bf16.mxu0 0
      %287 = vmatpush1.bf16.msra.mxu0 0
      %288 = vmatprep.subr.bf16.mxu0 0
      %289 = vmatpush1.bf16.msra.mxu0 0
      %290 = vmatprep.subr.bf16.mxu0 0
      %291 = vmatpush1.bf16.msra.mxu0 0
      %292 = vmatprep.subr.bf16.mxu0 0
      %293 = vmatpush1.bf16.msra.mxu0 0
      %294 = vmatprep.subr.bf16.mxu0 0
      %295 = vmatpush1.bf16.msra.mxu0 0
      %296 = vmatprep.subr.bf16.mxu0 0
      %297 = vmatpush1.bf16.msra.mxu0 0
      %298 = vmatprep.subr.bf16.mxu0 0
      %299 = vmatpush1.bf16.msra.mxu0 0
      %300 = vmatprep.subr.bf16.mxu0 0
      %301 = vmatpush1.bf16.msra.mxu0 0
      %302 = vmatprep.subr.bf16.mxu0 0
      %303 = vmatpush1.bf16.msra.mxu0 0
      %304 = vmatprep.subr.bf16.mxu0 0
      %305 = vmatpush1.bf16.msra.mxu0 0
      %306 = vmatprep.subr.bf16.mxu0 0
      %307 = vmatpush1.bf16.msra.mxu0 0
      %308 = vmatprep.subr.bf16.mxu0 0
      %309 = vmatpush1.bf16.msra.mxu0 0
      %310 = vmatprep.subr.bf16.mxu0 0
      %311 = vmatpush1.bf16.msra.mxu0 0
      %312 = vmatprep.subr.bf16.mxu0 0
      %313 = vmatpush1.bf16.msra.mxu0 0
      %314 = vmatprep.subr.bf16.mxu0 0
      %315 = vmatpush1.bf16.msra.mxu0 0
      %316 = vmatprep.mubr.bf16.mxu0 0
      %317 = vmatmul.mubr.bf16.gmra.mrb[0].mxu0 %v279
      %v318 = vpop.f32.mrb[0].mxu0
      %v319 = vadd.f32 %v273, %v318
      %v320 = vpop.f32.mrb[0].mxu0
      %v321 = vpop.f32.mrb[0].mxu0
      %v322 = vpop.f32.mrb[0].mxu0
      %323 = vdwg.mxu0
      %s324 = scalar_lea.vmem %s206, 4
      %v325 = vld [vmem:[%s324] sm:$0x3]
      %326 = vrot.lane.b32.xlu0 %v227, 120
      %v327 = vpop.permute.xlu0 %326
      %v329 = vsel %vm230, %v327, 0
      %v332 = vsel %vm234, %v325, 0
      %334 = vmatprep.subr.bf16.mxu0 0
      %335 = vmatpush1.bf16.msra.mxu0 %v332
      %336 = vmatprep.subr.bf16.mxu0 0
      %337 = vmatpush1.bf16.msra.mxu0 0
      %338 = vmatprep.subr.bf16.mxu0 0
      %339 = vmatpush1.bf16.msra.mxu0 0
      %340 = vmatprep.subr.bf16.mxu0 0
      %341 = vmatpush1.bf16.msra.mxu0 0
      %342 = vmatprep.subr.bf16.mxu0 0
      %343 = vmatpush1.bf16.msra.mxu0 0
      %344 = vmatprep.subr.bf16.mxu0 0
      %345 = vmatpush1.bf16.msra.mxu0 0
      %346 = vmatprep.subr.bf16.mxu0 0
      %347 = vmatpush1.bf16.msra.mxu0 0
      %348 = vmatprep.subr.bf16.mxu0 0
      %349 = vmatpush1.bf16.msra.mxu0 0
      %350 = vmatprep.subr.bf16.mxu0 0
      %351 = vmatpush1.bf16.msra.mxu0 0
      %352 = vmatprep.subr.bf16.mxu0 0
      %353 = vmatpush1.bf16.msra.mxu0 0
      %354 = vmatprep.subr.bf16.mxu0 0
      %355 = vmatpush1.bf16.msra.mxu0 0
      %356 = vmatprep.subr.bf16.mxu0 0
      %357 = vmatpush1.bf16.msra.mxu0 0
      %358 = vmatprep.subr.bf16.mxu0 0
      %359 = vmatpush1.bf16.msra.mxu0 0
      %360 = vmatprep.subr.bf16.mxu0 0
      %361 = vmatpush1.bf16.msra.mxu0 0
      %362 = vmatprep.subr.bf16.mxu0 0
      %363 = vmatpush1.bf16.msra.mxu0 0
      %364 = vmatprep.subr.bf16.mxu0 0
      %365 = vmatpush1.bf16.msra.mxu0 0
      %366 = vmatprep.mubr.bf16.mxu0 0
      %367 = vmatmul.mubr.bf16.gmra.mrb[0].mxu0 %v329
      %v368 = vpop.f32.mrb[0].mxu0
      %v369 = vadd.f32 0.0, %v368
      %v370 = vpop.f32.mrb[0].mxu0
      %v371 = vpop.f32.mrb[0].mxu0
      %v372 = vpop.f32.mrb[0].mxu0
      %373 = vdwg.mxu0
      %v374 = vadd.f32 %v319, %v369
      %v375 = vld [vmem:[%s202] sm:$0x7]
      %v376 = vmul.bf16 %v375, 1045249613
      %v377 = vmax.bf16 %v375, %v376
      %s378 = scalar_lea.vmem %s206, 6
      %v379 = vld [vmem:[%s378] sm:$0x3]
      %v381 = vunpack.c.l.b16 %v377
      %v382 = vpack.c.b16 %v381, %v381
      %v384 = vshrl.u32 %v382, 16
      %v386 = vshll.u32 %v382, 16
      %v388 = vrot.slane %v386, 1
      %v389 = vor.u32 %v384, %v388
      %v391 = vsel %vm230, %v389, 0
      %v394 = vsel %vm234, %v379, 0
      %396 = vmatprep.subr.bf16.mxu0 0
      %397 = vmatpush1.bf16.msra.mxu0 %v394
      %398 = vmatprep.subr.bf16.mxu0 0
      %399 = vmatpush1.bf16.msra.mxu0 0
      %400 = vmatprep.subr.bf16.mxu0 0
      %401 = vmatpush1.bf16.msra.mxu0 0
      %402 = vmatprep.subr.bf16.mxu0 0
      %403 = vmatpush1.bf16.msra.mxu0 0
      %404 = vmatprep.subr.bf16.mxu0 0
      %405 = vmatpush1.bf16.msra.mxu0 0
      %406 = vmatprep.subr.bf16.mxu0 0
      %407 = vmatpush1.bf16.msra.mxu0 0
      %408 = vmatprep.subr.bf16.mxu0 0
      %409 = vmatpush1.bf16.msra.mxu0 0
      %410 = vmatprep.subr.bf16.mxu0 0
      %411 = vmatpush1.bf16.msra.mxu0 0
      %412 = vmatprep.subr.bf16.mxu0 0
      %413 = vmatpush1.bf16.msra.mxu0 0
      %414 = vmatprep.subr.bf16.mxu0 0
      %415 = vmatpush1.bf16.msra.mxu0 0
      %416 = vmatprep.subr.bf16.mxu0 0
      %417 = vmatpush1.bf16.msra.mxu0 0
      %418 = vmatprep.subr.bf16.mxu0 0
      %419 = vmatpush1.bf16.msra.mxu0 0
      %420 = vmatprep.subr.bf16.mxu0 0
      %421 = vmatpush1.bf16.msra.mxu0 0
      %422 = vmatprep.subr.bf16.mxu0 0
      %423 = vmatpush1.bf16.msra.mxu0 0
      %424 = vmatprep.subr.bf16.mxu0 0
      %425 = vmatpush1.bf16.msra.mxu0 0
      %426 = vmatprep.subr.bf16.mxu0 0
      %427 = vmatpush1.bf16.msra.mxu0 0
      %428 = vmatprep.mubr.bf16.mxu0 0
      %429 = vmatmul.mubr.bf16.gmra.mrb[0].mxu0 %v391
      %v430 = vpop.f32.mrb[0].mxu0
      %v431 = vadd.f32 0.0, %v430
      %v432 = vpop.f32.mrb[0].mxu0
      %v433 = vpop.f32.mrb[0].mxu0
      %v434 = vpop.f32.mrb[0].mxu0
      %435 = vdwg.mxu0
      %v436 = vadd.f32 %v374, %v431
      %s437 = scalar_lea.vmem %s206, 8
      %v438 = vld [vmem:[%s437] sm:$0x3]
      %439 = vrot.lane.b32.xlu0 %v389, 124
      %v440 = vpop.permute.xlu0 %439
      %v442 = vsel %vm230, %v440, 0
      %v445 = vsel %vm234, %v438, 0
      %447 = vmatprep.subr.bf16.mxu0 0
      %448 = vmatpush1.bf16.msra.mxu0 %v445
      %449 = vmatprep.subr.bf16.mxu0 0
      %450 = vmatpush1.bf16.msra.mxu0 0
      %451 = vmatprep.subr.bf16.mxu0 0
      %452 = vmatpush1.bf16.msra.mxu0 0
      %453 = vmatprep.subr.bf16.mxu0 0
      %454 = vmatpush1.bf16.msra.mxu0 0
      %455 = vmatprep.subr.bf16.mxu0 0
      %456 = vmatpush1.bf16.msra.mxu0 0
      %457 = vmatprep.subr.bf16.mxu0 0
      %458 = vmatpush1.bf16.msra.mxu0 0
      %459 = vmatprep.subr.bf16.mxu0 0
      %460 = vmatpush1.bf16.msra.mxu0 0
      %461 = vmatprep.subr.bf16.mxu0 0
      %462 = vmatpush1.bf16.msra.mxu0 0
      %463 = vmatprep.subr.bf16.mxu0 0
      %464 = vmatpush1.bf16.msra.mxu0 0
      %465 = vmatprep.subr.bf16.mxu0 0
      %466 = vmatpush1.bf16.msra.mxu0 0
      %467 = vmatprep.subr.bf16.mxu0 0
      %468 = vmatpush1.bf16.msra.mxu0 0
      %469 = vmatprep.subr.bf16.mxu0 0
      %470 = vmatpush1.bf16.msra.mxu0 0
      %471 = vmatprep.subr.bf16.mxu0 0
      %472 = vmatpush1.bf16.msra.mxu0 0
      %473 = vmatprep.subr.bf16.mxu0 0
      %474 = vmatpush1.bf16.msra.mxu0 0
      %475 = vmatprep.subr.bf16.mxu0 0
      %476 = vmatpush1.bf16.msra.mxu0 0
      %477 = vmatprep.subr.bf16.mxu0 0
      %478 = vmatpush1.bf16.msra.mxu0 0
      %479 = vmatprep.mubr.bf16.mxu0 0
      %480 = vmatmul.mubr.bf16.gmra.mrb[0].mxu0 %v442
      %v481 = vpop.f32.mrb[0].mxu0
      %v482 = vadd.f32 0.0, %v481
      %v483 = vpop.f32.mrb[0].mxu0
      %v484 = vpop.f32.mrb[0].mxu0
      %v485 = vpop.f32.mrb[0].mxu0
      %486 = vdwg.mxu0
      %v487 = vadd.f32 %v436, %v482
      %v488 = vld [vmem:[%s209] sm:$0x1]
      %v490 = vlaneseq
      %v491 = vshrl.u32 %v490, 7
      %v492 = vsub.s32 0, %v491
      %v493 = vrot.slane %v488, %v492
      %v495 = vadd.f32 %v487, %v493
      %v496 = vpack.c.bf16 %v495, %v495
      %vm497 = vcmask 123904
      %498 = vst.msk [vmem:[%s216] sm:$0x3] %vm497, %v496
      %p499 = scmp.lt.s32.totalorder %s18, 3
      %s500 = scalar_select %p499, %s18, 3
      %p501 = scmp.lt.s32.totalorder %s19, 0
      %s502 = scalar_select %p501, %s19, 0
      %s503 = sadd.s32 %s502, %s500
      %s504 = smul.addr %s503, 2
      %s505 = scalar_lea.vmem %s3, %s504
      // Predicated region
      $region33: #{_disc_p_forward.6} parent=31 // pred_check
        %p506 = pneg %p124
      $region34: #{_disc_p_forward.6} parent=31 // pred_check_branch
        %508 = sbr.rel (%p506) target = $region36
      $region35: #{_disc_p_forward.6} parent=31 // pred_region
        _
      $region36: #{_disc_p_forward.6} parent=31 // pred_fallthru
        _
    $region32: #{_disc_p_forward.6} parent=5 // pred_fallthru
      _
    %p509 = scmp.le.s32.totalorder 2, %s9
    // Predicated region
    $region37: #{_disc_p_forward.6} parent=5 // pred_check
      %p510 = pneg %p509
    $region38: #{_disc_p_forward.6} parent=5 // pred_check_branch
      %512 = sbr.rel (%p510) target = $region40
    $region39: #{_disc_p_forward.6} parent=5 // pred_region
      %s513 = ssub.s32 %s9, 2
      // Predicated region
      $region41: #{_disc_p_forward.6} parent=39 // pred_check
        %p514 = pneg %p130
      $region42: #{_disc_p_forward.6} parent=39 // pred_check_branch
        %516 = sbr.rel (%p514) target = $region44
      $region43: #{_disc_p_forward.6} parent=39 // pred_region
        %p517 = scmp.lt.s32.totalorder %s20, 3
        %s518 = scalar_select %p517, %s20, 3
        %p519 = scmp.lt.s32.totalorder %s21, 0
        %s520 = scalar_select %p519, %s21, 0
        %s521 = sadd.s32 %s520, %s518
        %s522 = smul.addr %s521, 2
        %s523 = scalar_lea.vmem %s3, %s522
      $region44: #{_disc_p_forward.6} parent=39 // pred_fallthru
        _
    $region40: #{_disc_p_forward.6} parent=5 // pred_fallthru
      _
  $region6: #{_disc_p_forward.6} parent=0 // loop_footer
    %s13 = sadd.s32 1, %s9
  $region7: #{_disc_p_forward.6} parent=0 // loop_footer_branch
    %8 = sbr.rel target = $region3
  $region8: #{_disc_p_forward.6} parent=0 // loop_exit
    _

// kernel: _disc_p_forward.7
$region0: #{_disc_p_forward.7}
  #allocation0 [shape = 'u32[]', space=smem, size = 0x4, offset = 0x4, fixed_abs, tag = 'smem constant byte address 0x4 - core index']
  #allocation1 [shape = 'u32[144,128]{1,0:T(1,128)}', space=vmem, size = 0x12000, scoped, tag = 'internal scratch']
  %s0 = inlined_call_operand.vmem [shape: bf16[4,3,48], index: 0, kind: input, shape index: {}]
  %s1 = inlined_call_operand.vmem [shape: bf16[5,16,16], index: 1, kind: input, shape index: {}]
  %s2 = inlined_call_operand.vmem [shape: f32[1,16], index: 2, kind: input, shape index: {}]
  %s3 = inlined_call_operand.vmem [shape: bf16[4,2,16], index: 3, kind: output, shape index: {}]
  %s4 = sld [smem:[#allocation0]]
  $region45: #{_disc_p_forward.7} parent=0
    _
  %s6 = ssub.s32 1, %s4
  %s7 = scalar_select 0, %s6, %s4
  loop: start=0, step=1, limit=6
  $region2: #{_disc_p_forward.7} parent=0 // loop_pre_header
    _
  $region3: #{_disc_p_forward.7} parent=0 // loop_header
    %s9 = sphi 0, %s13
    %p10 = scmp.ge.s32.totalorder %s9, 6
    %s16 = sphi 0, %s28
    %s17 = sphi 0, %s24
    %s18 = sphi 0, %s16
    %s19 = sphi 0, %s17
    %s20 = sphi 0, %s18
    %s21 = sphi 0, %s19
    %s31 = sphi 0, %s33
    %s34 = sphi 0, %s31
    %s35 = sphi 0, %s34
    %s51 = sphi 0, %s35
    %s57 = sphi 0, %s59
    %s60 = sphi 0, %s57
    %s61 = sphi 0, %s60
    %s77 = sphi 0, %s61
    %s83 = sphi 0, %s85
    %s86 = sphi 0, %s83
    %s87 = sphi 0, %s86
    %s103 = sphi 0, %s87
    %s111 = sphi 0, %s113
    %s114 = sphi 0, %s111
    %s115 = sphi 0, %s114
    %s131 = sphi 0, %s115
  $region4: #{_disc_p_forward.7} parent=0 // loop_header_branch
    %12 = sbr.rel (%p10) target = $region8
  $region5: #{_disc_p_forward.7} parent=0 // loop_body
    %s14 = ssub.s32 %s9, 1
    %s15 = ssub.s32 %s9, 2
    %s22 = sadd.s32 1, %s17
    %p23 = scmp.ge.s32.totalorder %s22, 1
    %s24 = scalar_select %p23, 0, %s22
    %s25 = sadd.s32 1, %s16
    %s26 = scalar_select %p23, %s25, %s16
    %p27 = scmp.ge.s32.totalorder %s26, 4
    %s28 = scalar_select %p27, 0, %s26
    %s29 = ssub.s32 %s16, %s28
    %p30 = scmp.eq.s32.totalorder %s29, 0
    %s32 = sadd.s32 %s31, 1
    %s33 = scalar_select %p30, %s31, %s32
    %p36 = pneg %p30
    %p37 = scmp.eq.s32.totalorder %s9, 3
    %p38 = por %p36, %p37
    %p39 = scmp.ne.s32.totalorder %s31, %s34
    %p40 = scmp.eq.s32.totalorder %s9, 0
    %p41 = por %p39, %p40
    %p42 = scmp.ne.s32.totalorder %s31, %s34
    %p43 = scmp.eq.s32.totalorder %s14, 3
    %p44 = por %p42, %p43
    %p45 = scmp.ne.s32.totalorder %s34, %s35
    %p46 = scmp.eq.s32.totalorder %s14, 0
    %p47 = por %p45, %p46
    %p48 = scmp.ne.s32.totalorder %s34, %s35
    %p49 = scmp.eq.s32.totalorder %s15, 3
    %p50 = por %p48, %p49
    %p52 = scmp.ne.s32.totalorder %s35, %s51
    %p53 = scmp.eq.s32.totalorder %s15, 0
    %p54 = por %p52, %p53
    %s55 = ssub.s32 %s17, %s24
    %p56 = scmp.eq.s32.totalorder %s55, 0
    %s58 = sadd.s32 %s57, 1
    %s59 = scalar_select %p56, %s57, %s58
    %p62 = pneg %p56
    %p63 = scmp.eq.s32.totalorder %s9, 3
    %p64 = por %p62, %p63
    %p65 = scmp.ne.s32.totalorder %s57, %s60
    %p66 = scmp.eq.s32.totalorder %s9, 0
    %p67 = por %p65, %p66
    %p68 = scmp.ne.s32.totalorder %s57, %s60
    %p69 = scmp.eq.s32.totalorder %s14, 3
    %p70 = por %p68, %p69
    %p71 = scmp.ne.s32.totalorder %s60, %s61
    %p72 = scmp.eq.s32.totalorder %s14, 0
    %p73 = por %p71, %p72
    %p74 = scmp.ne.s32.totalorder %s60, %s61
    %p75 = scmp.eq.s32.totalorder %s15, 3
    %p76 = por %p74, %p75
    %p78 = scmp.ne.s32.totalorder %s61, %s77
    %p79 = scmp.eq.s32.totalorder %s15, 0
    %p80 = por %p78, %p79
    %s81 = ssub.s32 %s17, %s24
    %p82 = scmp.eq.s32.totalorder %s81, 0
    %s84 = sadd.s32 %s83, 1
    %s85 = scalar_select %p82, %s83, %s84
    %p88 = pneg %p82
    %p89 = scmp.eq.s32.totalorder %s9, 3
    %p90 = por %p88, %p89
    %p91 = scmp.ne.s32.totalorder %s83, %s86
    %p92 = scmp.eq.s32.totalorder %s9, 0
    %p93 = por %p91, %p92
    %p94 = scmp.ne.s32.totalorder %s83, %s86
    %p95 = scmp.eq.s32.totalorder %s14, 3
    %p96 = por %p94, %p95
    %p97 = scmp.ne.s32.totalorder %s86, %s87
    %p98 = scmp.eq.s32.totalorder %s14, 0
    %p99 = por %p97, %p98
    %p100 = scmp.ne.s32.totalorder %s86, %s87
    %p101 = scmp.eq.s32.totalorder %s15, 3
    %p102 = por %p100, %p101
    %p104 = scmp.ne.s32.totalorder %s87, %s103
    %p105 = scmp.eq.s32.totalorder %s15, 0
    %p106 = por %p104, %p105
    %s107 = ssub.s32 %s16, %s28
    %s108 = ssub.s32 %s17, %s24
    %s109 = sor.u32 %s107, %s108
    %p110 = scmp.eq.s32.totalorder %s109, 0
    %s112 = sadd.s32 %s111, 1
    %s113 = scalar_select %p110, %s111, %s112
    %p116 = pneg %p110
    %p117 = scmp.eq.s32.totalorder %s9, 3
    %p118 = por %p116, %p117
    %p119 = scmp.ne.s32.totalorder %s111, %s114
    %p120 = scmp.eq.s32.totalorder %s9, 0
    %p121 = por %p119, %p120
    %p122 = scmp.ne.s32.totalorder %s111, %s114
    %p123 = scmp.eq.s32.totalorder %s14, 3
    %p124 = por %p122, %p123
    %p125 = scmp.ne.s32.totalorder %s114, %s115
    %p126 = scmp.eq.s32.totalorder %s14, 0
    %p127 = por %p125, %p126
    %p128 = scmp.ne.s32.totalorder %s114, %s115
    %p129 = scmp.eq.s32.totalorder %s15, 3
    %p130 = por %p128, %p129
    %p132 = scmp.ne.s32.totalorder %s115, %s131
    %p133 = scmp.eq.s32.totalorder %s15, 0
    %p134 = por %p132, %p133
    %p135 = scmp.le.s32.totalorder 1, %s9
    %p136 = scmp.lt.s32.totalorder %s9, 5
    %p137 = pnand %p135, %p136
    %p138 = pneg %p137
    // Predicated region
    $region9: #{_disc_p_forward.7} parent=5 // pred_check
      _
    $region10: #{_disc_p_forward.7} parent=5 // pred_check_branch
      %140 = sbr.rel (%p137) target = $region12
    $region11: #{_disc_p_forward.7} parent=5 // pred_region
      %s141 = ssub.s32 %s9, 1
      // Predicated region
      $region13: #{_disc_p_forward.7} parent=11 // pred_check
        %p142 = pneg %p73
      $region14: #{_disc_p_forward.7} parent=11 // pred_check_branch
        %144 = sbr.rel (%p142) target = $region16
      $region15: #{_disc_p_forward.7} parent=11 // pred_region
        %p145 = scmp.lt.s32.totalorder %s19, 0
        %s146 = scalar_select %p145, %s19, 0
        %s147 = smul.addr %s146, 4
        %s148 = scalar_lea.vmem %s1, %s147
      $region16: #{_disc_p_forward.7} parent=11 // pred_fallthru
        _
      // Predicated region
      $region17: #{_disc_p_forward.7} parent=11 // pred_check
        %p149 = pneg %p99
      $region18: #{_disc_p_forward.7} parent=11 // pred_check_branch
        %151 = sbr.rel (%p149) target = $region20
      $region19: #{_disc_p_forward.7} parent=11 // pred_region
        %p152 = scmp.lt.s32.totalorder %s19, 0
        %s153 = scalar_select %p152, %s19, 0
        %s154 = scalar_lea.vmem %s2, %s153
      $region20: #{_disc_p_forward.7} parent=11 // pred_fallthru
        _
    $region12: #{_disc_p_forward.7} parent=5 // pred_fallthru
      _
    %p155 = scmp.lt.s32.totalorder %s9, 4
    // Predicated region
    $region21: #{_disc_p_forward.7} parent=5 // pred_check
      %p156 = pneg %p155
    $region22: #{_disc_p_forward.7} parent=5 // pred_check_branch
      %158 = sbr.rel (%p156) target = $region24
    $region23: #{_disc_p_forward.7} parent=5 // pred_region
      // Predicated region
      $region25: #{_disc_p_forward.7} parent=23 // pred_check
        %p159 = pneg %p41
      $region26: #{_disc_p_forward.7} parent=23 // pred_check_branch
        %161 = sbr.rel (%p159) target = $region28
      $region27: #{_disc_p_forward.7} parent=23 // pred_region
        %p162 = scmp.lt.s32.totalorder %s16, 3
        %s163 = scalar_select %p162, %s16, 3
        %s164 = smul.addr %s163, 2
        %s165 = scalar_lea.vmem %s0, %s164
      $region28: #{_disc_p_forward.7} parent=23 // pred_fallthru
        _
    $region24: #{_disc_p_forward.7} parent=5 // pred_fallthru
      _
    %p166 = scmp.le.s32.totalorder 1, %s9
    %p167 = scmp.lt.s32.totalorder %s9, 5
    %p168 = pnand %p166, %p167
    %p169 = pneg %p168
    // Predicated region
    $region29: #{_disc_p_forward.7} parent=5 // pred_check
      _
    $region30: #{_disc_p_forward.7} parent=5 // pred_check_branch
      %171 = sbr.rel (%p168) target = $region32
    $region31: #{_disc_p_forward.7} parent=5 // pred_region
      %s172 = ssub.s32 %s9, 1
      %p173 = scmp.lt.s32.totalorder %s18, 3
      %s174 = scalar_select %p173, %s18, 3
      %s175 = smul.addr %s174, 2
      %s176 = scalar_lea.vmem %s0, %s175
      %p177 = pneg %p47
      %p178 = pneg %p44
      %p179 = scmp.lt.s32.totalorder %s19, 0
      %s180 = scalar_select %p179, %s19, 0
      %s181 = smul.addr %s180, 4
      %s182 = scalar_lea.vmem %s1, %s181
      %p183 = pneg %p73
      %p184 = pneg %p70
      %p185 = scmp.lt.s32.totalorder %s19, 0
      %s186 = scalar_select %p185, %s19, 0
      %s187 = scalar_lea.vmem %s2, %s186
      %p188 = pneg %p99
      %p189 = pneg %p96
      %p190 = pneg %p127
      %p191 = pneg %p124
      %p192 = scmp.lt.s32.totalorder %s18, 3
      %s193 = scalar_select %p192, %s18, 3
      %p194 = scmp.lt.s32.totalorder %s19, 0
      %s195 = scalar_select %p194, %s19, 0
      %s196 = sadd.s32 %s195, %s193
      %s197 = scalar_lea.vmem %s3, %s196
      %p198 = scmp.lt.s32.totalorder %s18, 3
      %s199 = scalar_select %p198, %s18, 3
      %s200 = smul.addr %s199, 2
      %s201 = scalar_lea.vmem %s0, %s200
      %p202 = scmp.lt.s32.totalorder %s19, 0
      %s203 = scalar_select %p202, %s19, 0
      %s204 = smul.addr %s203, 4
      %s205 = scalar_lea.vmem %s1, %s204
      %p206 = scmp.lt.s32.totalorder %s19, 0
      %s207 = scalar_select %p206, %s19, 0
      %s208 = scalar_lea.vmem %s2, %s207
      %p209 = scmp.lt.s32.totalorder %s18, 3
      %s210 = scalar_select %p209, %s18, 3
      %p211 = scmp.lt.s32.totalorder %s19, 0
      %s212 = scalar_select %p211, %s19, 0
      %s213 = sadd.s32 %s212, %s210
      %s214 = scalar_lea.vmem %s3, %s213
      %v217 = vld [vmem:[%s201] sm:$0x1]
      %v218 = vmul.bf16 %v217, 1045249613
      %v219 = vmax.bf16 %v217, %v218
      %v220 = vld [vmem:[%s205] sm:$0xf]
      %v221 = vld [vmem:[%s205 + $0x4] sm:$0xf]
      %s222 = scalar_lea.vmem %s205, 8
      %v223 = vld [vmem:[%s222] sm:$0xf]
      %v224 = vld [vmem:[%s222 + $0x4] sm:$0xf]
      %v227 = vunpack.c.l.s4 1983009808
      %v228 = vunpack.c.0.s8 %v227
      %v229 = vlaneseq
      %v230 = vshrl.u32 %v229, 7
      %v231 = vsub.s32 %v228, %v230
      %v232 = vrot.slane %v219, %v231
      %233 = vrot.lane.b32.xlu0 %v232, 112
      %v234 = vpop.permute.xlu0 %233
      %v237 = vunpack.c.l.b16 %v223
      %v238 = vunpack.c.l.b16 %v224
      %v239 = vpack.c.b16 %v238, %v237
      %vm241 = vcmask 130048
      %v243 = vsel %vm241, %v234, 0
      %245 = vmatprep.subr.bf16.mxu0 0
      %246 = vmatpush1.bf16.msra.mxu0 %v239
      %247 = vmatprep.subr.bf16.mxu0 0
      %248 = vmatpush1.bf16.msra.mxu0 0
      %249 = vmatprep.subr.bf16.mxu0 0
      %250 = vmatpush1.bf16.msra.mxu0 0
      %251 = vmatprep.subr.bf16.mxu0 0
      %252 = vmatpush1.bf16.msra.mxu0 0
      %253 = vmatprep.subr.bf16.mxu0 0
      %254 = vmatpush1.bf16.msra.mxu0 0
      %255 = vmatprep.subr.bf16.mxu0 0
      %256 = vmatpush1.bf16.msra.mxu0 0
      %257 = vmatprep.subr.bf16.mxu0 0
      %258 = vmatpush1.bf16.msra.mxu0 0
      %259 = vmatprep.subr.bf16.mxu0 0
      %260 = vmatpush1.bf16.msra.mxu0 0
      %261 = vmatprep.subr.bf16.mxu0 0
      %262 = vmatpush1.bf16.msra.mxu0 0
      %263 = vmatprep.subr.bf16.mxu0 0
      %264 = vmatpush1.bf16.msra.mxu0 0
      %265 = vmatprep.subr.bf16.mxu0 0
      %266 = vmatpush1.bf16.msra.mxu0 0
      %267 = vmatprep.subr.bf16.mxu0 0
      %268 = vmatpush1.bf16.msra.mxu0 0
      %269 = vmatprep.subr.bf16.mxu0 0
      %270 = vmatpush1.bf16.msra.mxu0 0
      %271 = vmatprep.subr.bf16.mxu0 0
      %272 = vmatpush1.bf16.msra.mxu0 0
      %273 = vmatprep.subr.bf16.mxu0 0
      %274 = vmatpush1.bf16.msra.mxu0 0
      %275 = vmatprep.subr.bf16.mxu0 0
      %276 = vmatpush1.bf16.msra.mxu0 0
      %277 = vmatprep.mubr.bf16.mxu0 0
      %278 = vmatmul.mubr.bf16.gmra.mrb[0].mxu0 %v243
      %v279 = vpop.f32.mrb[0].mxu0
      %v280 = vadd.f32 0.0, %v279
      %v281 = vpop.f32.mrb[0].mxu0
      %v282 = vpop.f32.mrb[0].mxu0
      %v283 = vpop.f32.mrb[0].mxu0
      %284 = vdwg.mxu0
      %v287 = vunpack.c.l.b16 %v220
      %v288 = vunpack.c.l.b16 %v221
      %v289 = vpack.c.b16 %v288, %v287
      %v292 = vsel %vm241, %v219, 0
      %294 = vmatprep.subr.bf16.mxu0 0
      %295 = vmatpush1.bf16.msra.mxu0 %v289
      %296 = vmatprep.subr.bf16.mxu0 0
      %297 = vmatpush1.bf16.msra.mxu0 0
      %298 = vmatprep.subr.bf16.mxu0 0
      %299 = vmatpush1.bf16.msra.mxu0 0
      %300 = vmatprep.subr.bf16.mxu0 0
      %301 = vmatpush1.bf16.msra.mxu0 0
      %302 = vmatprep.subr.bf16.mxu0 0
      %303 = vmatpush1.bf16.msra.mxu0 0
      %304 = vmatprep.subr.bf16.mxu0 0
      %305 = vmatpush1.bf16.msra.mxu0 0
      %306 = vmatprep.subr.bf16.mxu0 0
      %307 = vmatpush1.bf16.msra.mxu0 0
      %308 = vmatprep.subr.bf16.mxu0 0
      %309 = vmatpush1.bf16.msra.mxu0 0
      %310 = vmatprep.subr.bf16.mxu0 0
      %311 = vmatpush1.bf16.msra.mxu0 0
      %312 = vmatprep.subr.bf16.mxu0 0
      %313 = vmatpush1.bf16.msra.mxu0 0
      %314 = vmatprep.subr.bf16.mxu0 0
      %315 = vmatpush1.bf16.msra.mxu0 0
      %316 = vmatprep.subr.bf16.mxu0 0
      %317 = vmatpush1.bf16.msra.mxu0 0
      %318 = vmatprep.subr.bf16.mxu0 0
      %319 = vmatpush1.bf16.msra.mxu0 0
      %320 = vmatprep.subr.bf16.mxu0 0
      %321 = vmatpush1.bf16.msra.mxu0 0
      %322 = vmatprep.subr.bf16.mxu0 0
      %323 = vmatpush1.bf16.msra.mxu0 0
      %324 = vmatprep.subr.bf16.mxu0 0
      %325 = vmatpush1.bf16.msra.mxu0 0
      %326 = vmatprep.mubr.bf16.mxu0 0
      %327 = vmatmul.mubr.bf16.gmra.mrb[0].mxu0 %v292
      %v328 = vpop.f32.mrb[0].mxu0
      %v329 = vadd.f32 %v280, %v328
      %v330 = vpop.f32.mrb[0].mxu0
      %v331 = vpop.f32.mrb[0].mxu0
      %v332 = vpop.f32.mrb[0].mxu0
      %333 = vdwg.mxu0
      %v334 = vld [vmem:[%s201] sm:$0x1]
      %v335 = vmul.bf16 %v334, 1045249613
      %v336 = vmax.bf16 %v334, %v335
      %s337 = scalar_lea.vmem %s205, 16
      %v338 = vld [vmem:[%s337] sm:$0xf]
      %v339 = vld [vmem:[%s337 + $0x4] sm:$0xf]
      %v342 = vunpack.c.l.s4 1983009808
      %v343 = vunpack.c.0.s8 %v342
      %v344 = vlaneseq
      %v345 = vshrl.u32 %v344, 7
      %v346 = vsub.s32 %v343, %v345
      %v347 = vrot.slane %v336, %v346
      %348 = vrot.lane.b32.xlu0 %v347, 96
      %v349 = vpop.permute.xlu0 %348
      %v352 = vunpack.c.l.b16 %v338
      %v353 = vunpack.c.l.b16 %v339
      %v354 = vpack.c.b16 %v353, %v352
      %v357 = vsel %vm241, %v349, 0
      %359 = vmatprep.subr.bf16.mxu0 0
      %360 = vmatpush1.bf16.msra.mxu0 %v354
      %361 = vmatprep.subr.bf16.mxu0 0
      %362 = vmatpush1.bf16.msra.mxu0 0
      %363 = vmatprep.subr.bf16.mxu0 0
      %364 = vmatpush1.bf16.msra.mxu0 0
      %365 = vmatprep.subr.bf16.mxu0 0
      %366 = vmatpush1.bf16.msra.mxu0 0
      %367 = vmatprep.subr.bf16.mxu0 0
      %368 = vmatpush1.bf16.msra.mxu0 0
      %369 = vmatprep.subr.bf16.mxu0 0
      %370 = vmatpush1.bf16.msra.mxu0 0
      %371 = vmatprep.subr.bf16.mxu0 0
      %372 = vmatpush1.bf16.msra.mxu0 0
      %373 = vmatprep.subr.bf16.mxu0 0
      %374 = vmatpush1.bf16.msra.mxu0 0
      %375 = vmatprep.subr.bf16.mxu0 0
      %376 = vmatpush1.bf16.msra.mxu0 0
      %377 = vmatprep.subr.bf16.mxu0 0
      %378 = vmatpush1.bf16.msra.mxu0 0
      %379 = vmatprep.subr.bf16.mxu0 0
      %380 = vmatpush1.bf16.msra.mxu0 0
      %381 = vmatprep.subr.bf16.mxu0 0
      %382 = vmatpush1.bf16.msra.mxu0 0
      %383 = vmatprep.subr.bf16.mxu0 0
      %384 = vmatpush1.bf16.msra.mxu0 0
      %385 = vmatprep.subr.bf16.mxu0 0
      %386 = vmatpush1.bf16.msra.mxu0 0
      %387 = vmatprep.subr.bf16.mxu0 0
      %388 = vmatpush1.bf16.msra.mxu0 0
      %389 = vmatprep.subr.bf16.mxu0 0
      %390 = vmatpush1.bf16.msra.mxu0 0
      %391 = vmatprep.mubr.bf16.mxu0 0
      %392 = vmatmul.mubr.bf16.gmra.mrb[0].mxu0 %v357
      %v393 = vpop.f32.mrb[0].mxu0
      %v394 = vadd.f32 0.0, %v393
      %v395 = vpop.f32.mrb[0].mxu0
      %v396 = vpop.f32.mrb[0].mxu0
      %v397 = vpop.f32.mrb[0].mxu0
      %398 = vdwg.mxu0
      %v399 = vadd.f32 %v329, %v394
      %v400 = vld [vmem:[%s201] sm:$0x3]
      %v401 = vmul.bf16 %v400, 1045249613
      %v402 = vmax.bf16 %v400, %v401
      %s403 = scalar_lea.vmem %s205, 24
      %v404 = vld [vmem:[%s403] sm:$0xf]
      %v405 = vld [vmem:[%s403 + $0x4] sm:$0xf]
      %v408 = vunpack.c.l.s4 1983009808
      %v409 = vunpack.c.0.s8 %v408
      %v410 = vlaneseq
      %v411 = vshrl.u32 %v410, 7
      %v412 = vsub.s32 %v409, %v411
      %v413 = vrot.slane %v402, %v412
      %v415 = vshrl.u32 %v413, 16
      %v417 = vshll.u32 %v413, 16
      %v419 = vrot.slane %v417, 1
      %v420 = vor.u32 %v415, %v419
      %v423 = vunpack.c.l.b16 %v404
      %v424 = vunpack.c.l.b16 %v405
      %v425 = vpack.c.b16 %v424, %v423
      %v428 = vsel %vm241, %v420, 0
      %430 = vmatprep.subr.bf16.mxu0 0
      %431 = vmatpush1.bf16.msra.mxu0 %v425
      %432 = vmatprep.subr.bf16.mxu0 0
      %433 = vmatpush1.bf16.msra.mxu0 0
      %434 = vmatprep.subr.bf16.mxu0 0
      %435 = vmatpush1.bf16.msra.mxu0 0
      %436 = vmatprep.subr.bf16.mxu0 0
      %437 = vmatpush1.bf16.msra.mxu0 0
      %438 = vmatprep.subr.bf16.mxu0 0
      %439 = vmatpush1.bf16.msra.mxu0 0
      %440 = vmatprep.subr.bf16.mxu0 0
      %441 = vmatpush1.bf16.msra.mxu0 0
      %442 = vmatprep.subr.bf16.mxu0 0
      %443 = vmatpush1.bf16.msra.mxu0 0
      %444 = vmatprep.subr.bf16.mxu0 0
      %445 = vmatpush1.bf16.msra.mxu0 0
      %446 = vmatprep.subr.bf16.mxu0 0
      %447 = vmatpush1.bf16.msra.mxu0 0
      %448 = vmatprep.subr.bf16.mxu0 0
      %449 = vmatpush1.bf16.msra.mxu0 0
      %450 = vmatprep.subr.bf16.mxu0 0
      %451 = vmatpush1.bf16.msra.mxu0 0
      %452 = vmatprep.subr.bf16.mxu0 0
      %453 = vmatpush1.bf16.msra.mxu0 0
      %454 = vmatprep.subr.bf16.mxu0 0
      %455 = vmatpush1.bf16.msra.mxu0 0
      %456 = vmatprep.subr.bf16.mxu0 0
      %457 = vmatpush1.bf16.msra.mxu0 0
      %458 = vmatprep.subr.bf16.mxu0 0
      %459 = vmatpush1.bf16.msra.mxu0 0
      %460 = vmatprep.subr.bf16.mxu0 0
      %461 = vmatpush1.bf16.msra.mxu0 0
      %462 = vmatprep.mubr.bf16.mxu0 0
      %463 = vmatmul.mubr.bf16.gmra.mrb[0].mxu0 %v428
      %v464 = vpop.f32.mrb[0].mxu0
      %v465 = vadd.f32 0.0, %v464
      %v466 = vpop.f32.mrb[0].mxu0
      %v467 = vpop.f32.mrb[0].mxu0
      %v468 = vpop.f32.mrb[0].mxu0
      %469 = vdwg.mxu0
      %v470 = vadd.f32 %v399, %v465
      %v471 = vld [vmem:[%s201] sm:$0x3]
      %v472 = vmul.bf16 %v471, 1045249613
      %v473 = vmax.bf16 %v471, %v472
      %s474 = scalar_lea.vmem %s205, 32
      %v475 = vld [vmem:[%s474] sm:$0xf]
      %v476 = vld [vmem:[%s474 + $0x4] sm:$0xf]
      %v479 = vunpack.c.l.s4 1983009808
      %v480 = vunpack.c.0.s8 %v479
      %v481 = vlaneseq
      %v482 = vshrl.u32 %v481, 7
      %v483 = vsub.s32 %v480, %v482
      %v484 = vrot.slane %v473, %v483
      %v486 = vshrl.u32 %v484, 16
      %v488 = vshll.u32 %v484, 16
      %v490 = vrot.slane %v488, 1
      %v491 = vor.u32 %v486, %v490
      %492 = vrot.lane.b32.xlu0 %v491, 112
      %v493 = vpop.permute.xlu0 %492
      %v496 = vunpack.c.l.b16 %v475
      %v497 = vunpack.c.l.b16 %v476
      %v498 = vpack.c.b16 %v497, %v496
      %v501 = vsel %vm241, %v493, 0
      %503 = vmatprep.subr.bf16.mxu0 0
      %504 = vmatpush1.bf16.msra.mxu0 %v498
      %505 = vmatprep.subr.bf16.mxu0 0
      %506 = vmatpush1.bf16.msra.mxu0 0
      %507 = vmatprep.subr.bf16.mxu0 0
      %508 = vmatpush1.bf16.msra.mxu0 0
      %509 = vmatprep.subr.bf16.mxu0 0
      %510 = vmatpush1.bf16.msra.mxu0 0
      %511 = vmatprep.subr.bf16.mxu0 0
      %512 = vmatpush1.bf16.msra.mxu0 0
      %513 = vmatprep.subr.bf16.mxu0 0
      %514 = vmatpush1.bf16.msra.mxu0 0
      %515 = vmatprep.subr.bf16.mxu0 0
      %516 = vmatpush1.bf16.msra.mxu0 0
      %517 = vmatprep.subr.bf16.mxu0 0
      %518 = vmatpush1.bf16.msra.mxu0 0
      %519 = vmatprep.subr.bf16.mxu0 0
      %520 = vmatpush1.bf16.msra.mxu0 0
      %521 = vmatprep.subr.bf16.mxu0 0
      %522 = vmatpush1.bf16.msra.mxu0 0
      %523 = vmatprep.subr.bf16.mxu0 0
      %524 = vmatpush1.bf16.msra.mxu0 0
      %525 = vmatprep.subr.bf16.mxu0 0
      %526 = vmatpush1.bf16.msra.mxu0 0
      %527 = vmatprep.subr.bf16.mxu0 0
      %528 = vmatpush1.bf16.msra.mxu0 0
      %529 = vmatprep.subr.bf16.mxu0 0
      %530 = vmatpush1.bf16.msra.mxu0 0
      %531 = vmatprep.subr.bf16.mxu0 0
      %532 = vmatpush1.bf16.msra.mxu0 0
      %533 = vmatprep.subr.bf16.mxu0 0
      %534 = vmatpush1.bf16.msra.mxu0 0
      %535 = vmatprep.mubr.bf16.mxu0 0
      %536 = vmatmul.mubr.bf16.gmra.mrb[0].mxu0 %v501
      %v537 = vpop.f32.mrb[0].mxu0
      %v538 = vadd.f32 0.0, %v537
      %v539 = vpop.f32.mrb[0].mxu0
      %v540 = vpop.f32.mrb[0].mxu0
      %v541 = vpop.f32.mrb[0].mxu0
      %542 = vdwg.mxu0
      %v543 = vadd.f32 %v470, %v538
      %v544 = vld [vmem:[%s208] sm:$0x1]
      %v546 = vlaneseq
      %v547 = vshrl.u32 %v546, 7
      %v548 = vsub.s32 0, %v547
      %v549 = vrot.slane %v544, %v548
      %v551 = vadd.f32 %v543, %v549
      %v552 = vpack.c.bf16 %v551, %v551
      %vm553 = vcmask 122880
      %554 = vst.msk [vmem:[%s214] sm:$0x1] %vm553, %v552
      %p555 = scmp.lt.s32.totalorder %s18, 3
      %s556 = scalar_select %p555, %s18, 3
      %p557 = scmp.lt.s32.totalorder %s19, 0
      %s558 = scalar_select %p557, %s19, 0
      %s559 = sadd.s32 %s558, %s556
      %s560 = scalar_lea.vmem %s3, %s559
      // Predicated region
      $region33: #{_disc_p_forward.7} parent=31 // pred_check
        %p561 = pneg %p124
      $region34: #{_disc_p_forward.7} parent=31 // pred_check_branch
        %563 = sbr.rel (%p561) target = $region36
      $region35: #{_disc_p_forward.7} parent=31 // pred_region
        _
      $region36: #{_disc_p_forward.7} parent=31 // pred_fallthru
        _
    $region32: #{_disc_p_forward.7} parent=5 // pred_fallthru
      _
    %p564 = scmp.le.s32.totalorder 2, %s9
    // Predicated region
    $region37: #{_disc_p_forward.7} parent=5 // pred_check
      %p565 = pneg %p564
    $region38: #{_disc_p_forward.7} parent=5 // pred_check_branch
      %567 = sbr.rel (%p565) target = $region40
    $region39: #{_disc_p_forward.7} parent=5 // pred_region
      %s568 = ssub.s32 %s9, 2
      // Predicated region
      $region41: #{_disc_p_forward.7} parent=39 // pred_check
        %p569 = pneg %p130
      $region42: #{_disc_p_forward.7} parent=39 // pred_check_branch
        %571 = sbr.rel (%p569) target = $region44
      $region43: #{_disc_p_forward.7} parent=39 // pred_region
        %p572 = scmp.lt.s32.totalorder %s20, 3
        %s573 = scalar_select %p572, %s20, 3
        %p574 = scmp.lt.s32.totalorder %s21, 0
        %s575 = scalar_select %p574, %s21, 0
        %s576 = sadd.s32 %s575, %s573
        %s577 = scalar_lea.vmem %s3, %s576
      $region44: #{_disc_p_forward.7} parent=39 // pred_fallthru
        _
    $region40: #{_disc_p_forward.7} parent=5 // pred_fallthru
      _
  $region6: #{_disc_p_forward.7} parent=0 // loop_footer
    %s13 = sadd.s32 1, %s9
  $region7: #{_disc_p_forward.7} parent=0 // loop_footer_branch
    %8 = sbr.rel target = $region3
  $region8: #{_disc_p_forward.7} parent=0 // loop_exit
    _

// kernel: _disc_p_forward.8
$region0: #{_disc_p_forward.8}
  #allocation0 [shape = 'u32[]', space=smem, size = 0x4, offset = 0x4, fixed_abs, tag = 'smem constant byte address 0x4 - core index']
  #allocation1 [shape = 'u32[144,128]{1,0:T(1,128)}', space=vmem, size = 0x12000, scoped, tag = 'internal scratch']
  %s0 = inlined_call_operand.vmem [shape: bf16[4,2,48], index: 0, kind: input, shape index: {}]
  %s1 = inlined_call_operand.vmem [shape: bf16[5,16,16], index: 1, kind: input, shape index: {}]
  %s2 = inlined_call_operand.vmem [shape: f32[1,16], index: 2, kind: input, shape index: {}]
  %s3 = inlined_call_operand.vmem [shape: bf16[4,1,16], index: 3, kind: output, shape index: {}]
  %s4 = sld [smem:[#allocation0]]
  $region45: #{_disc_p_forward.8} parent=0
    _
  %s6 = ssub.s32 1, %s4
  %s7 = scalar_select 0, %s6, %s4
  loop: start=0, step=1, limit=6
  $region2: #{_disc_p_forward.8} parent=0 // loop_pre_header
    _
  $region3: #{_disc_p_forward.8} parent=0 // loop_header
    %s9 = sphi 0, %s13
    %p10 = scmp.ge.s32.totalorder %s9, 6
    %s16 = sphi 0, %s28
    %s17 = sphi 0, %s24
    %s18 = sphi 0, %s16
    %s19 = sphi 0, %s17
    %s20 = sphi 0, %s18
    %s21 = sphi 0, %s19
    %s31 = sphi 0, %s33
    %s34 = sphi 0, %s31
    %s35 = sphi 0, %s34
    %s51 = sphi 0, %s35
    %s57 = sphi 0, %s59
    %s60 = sphi 0, %s57
    %s61 = sphi 0, %s60
    %s77 = sphi 0, %s61
    %s83 = sphi 0, %s85
    %s86 = sphi 0, %s83
    %s87 = sphi 0, %s86
    %s103 = sphi 0, %s87
    %s111 = sphi 0, %s113
    %s114 = sphi 0, %s111
    %s115 = sphi 0, %s114
    %s131 = sphi 0, %s115
  $region4: #{_disc_p_forward.8} parent=0 // loop_header_branch
    %12 = sbr.rel (%p10) target = $region8
  $region5: #{_disc_p_forward.8} parent=0 // loop_body
    %s14 = ssub.s32 %s9, 1
    %s15 = ssub.s32 %s9, 2
    %s22 = sadd.s32 1, %s17
    %p23 = scmp.ge.s32.totalorder %s22, 1
    %s24 = scalar_select %p23, 0, %s22
    %s25 = sadd.s32 1, %s16
    %s26 = scalar_select %p23, %s25, %s16
    %p27 = scmp.ge.s32.totalorder %s26, 4
    %s28 = scalar_select %p27, 0, %s26
    %s29 = ssub.s32 %s16, %s28
    %p30 = scmp.eq.s32.totalorder %s29, 0
    %s32 = sadd.s32 %s31, 1
    %s33 = scalar_select %p30, %s31, %s32
    %p36 = pneg %p30
    %p37 = scmp.eq.s32.totalorder %s9, 3
    %p38 = por %p36, %p37
    %p39 = scmp.ne.s32.totalorder %s31, %s34
    %p40 = scmp.eq.s32.totalorder %s9, 0
    %p41 = por %p39, %p40
    %p42 = scmp.ne.s32.totalorder %s31, %s34
    %p43 = scmp.eq.s32.totalorder %s14, 3
    %p44 = por %p42, %p43
    %p45 = scmp.ne.s32.totalorder %s34, %s35
    %p46 = scmp.eq.s32.totalorder %s14, 0
    %p47 = por %p45, %p46
    %p48 = scmp.ne.s32.totalorder %s34, %s35
    %p49 = scmp.eq.s32.totalorder %s15, 3
    %p50 = por %p48, %p49
    %p52 = scmp.ne.s32.totalorder %s35, %s51
    %p53 = scmp.eq.s32.totalorder %s15, 0
    %p54 = por %p52, %p53
    %s55 = ssub.s32 %s17, %s24
    %p56 = scmp.eq.s32.totalorder %s55, 0
    %s58 = sadd.s32 %s57, 1
    %s59 = scalar_select %p56, %s57, %s58
    %p62 = pneg %p56
    %p63 = scmp.eq.s32.totalorder %s9, 3
    %p64 = por %p62, %p63
    %p65 = scmp.ne.s32.totalorder %s57, %s60
    %p66 = scmp.eq.s32.totalorder %s9, 0
    %p67 = por %p65, %p66
    %p68 = scmp.ne.s32.totalorder %s57, %s60
    %p69 = scmp.eq.s32.totalorder %s14, 3
    %p70 = por %p68, %p69
    %p71 = scmp.ne.s32.totalorder %s60, %s61
    %p72 = scmp.eq.s32.totalorder %s14, 0
    %p73 = por %p71, %p72
    %p74 = scmp.ne.s32.totalorder %s60, %s61
    %p75 = scmp.eq.s32.totalorder %s15, 3
    %p76 = por %p74, %p75
    %p78 = scmp.ne.s32.totalorder %s61, %s77
    %p79 = scmp.eq.s32.totalorder %s15, 0
    %p80 = por %p78, %p79
    %s81 = ssub.s32 %s17, %s24
    %p82 = scmp.eq.s32.totalorder %s81, 0
    %s84 = sadd.s32 %s83, 1
    %s85 = scalar_select %p82, %s83, %s84
    %p88 = pneg %p82
    %p89 = scmp.eq.s32.totalorder %s9, 3
    %p90 = por %p88, %p89
    %p91 = scmp.ne.s32.totalorder %s83, %s86
    %p92 = scmp.eq.s32.totalorder %s9, 0
    %p93 = por %p91, %p92
    %p94 = scmp.ne.s32.totalorder %s83, %s86
    %p95 = scmp.eq.s32.totalorder %s14, 3
    %p96 = por %p94, %p95
    %p97 = scmp.ne.s32.totalorder %s86, %s87
    %p98 = scmp.eq.s32.totalorder %s14, 0
    %p99 = por %p97, %p98
    %p100 = scmp.ne.s32.totalorder %s86, %s87
    %p101 = scmp.eq.s32.totalorder %s15, 3
    %p102 = por %p100, %p101
    %p104 = scmp.ne.s32.totalorder %s87, %s103
    %p105 = scmp.eq.s32.totalorder %s15, 0
    %p106 = por %p104, %p105
    %s107 = ssub.s32 %s16, %s28
    %s108 = ssub.s32 %s17, %s24
    %s109 = sor.u32 %s107, %s108
    %p110 = scmp.eq.s32.totalorder %s109, 0
    %s112 = sadd.s32 %s111, 1
    %s113 = scalar_select %p110, %s111, %s112
    %p116 = pneg %p110
    %p117 = scmp.eq.s32.totalorder %s9, 3
    %p118 = por %p116, %p117
    %p119 = scmp.ne.s32.totalorder %s111, %s114
    %p120 = scmp.eq.s32.totalorder %s9, 0
    %p121 = por %p119, %p120
    %p122 = scmp.ne.s32.totalorder %s111, %s114
    %p123 = scmp.eq.s32.totalorder %s14, 3
    %p124 = por %p122, %p123
    %p125 = scmp.ne.s32.totalorder %s114, %s115
    %p126 = scmp.eq.s32.totalorder %s14, 0
    %p127 = por %p125, %p126
    %p128 = scmp.ne.s32.totalorder %s114, %s115
    %p129 = scmp.eq.s32.totalorder %s15, 3
    %p130 = por %p128, %p129
    %p132 = scmp.ne.s32.totalorder %s115, %s131
    %p133 = scmp.eq.s32.totalorder %s15, 0
    %p134 = por %p132, %p133
    %p135 = scmp.le.s32.totalorder 1, %s9
    %p136 = scmp.lt.s32.totalorder %s9, 5
    %p137 = pnand %p135, %p136
    %p138 = pneg %p137
    // Predicated region
    $region9: #{_disc_p_forward.8} parent=5 // pred_check
      _
    $region10: #{_disc_p_forward.8} parent=5 // pred_check_branch
      %140 = sbr.rel (%p137) target = $region12
    $region11: #{_disc_p_forward.8} parent=5 // pred_region
      %s141 = ssub.s32 %s9, 1
      // Predicated region
      $region13: #{_disc_p_forward.8} parent=11 // pred_check
        %p142 = pneg %p73
      $region14: #{_disc_p_forward.8} parent=11 // pred_check_branch
        %144 = sbr.rel (%p142) target = $region16
      $region15: #{_disc_p_forward.8} parent=11 // pred_region
        %p145 = scmp.lt.s32.totalorder %s19, 0
        %s146 = scalar_select %p145, %s19, 0
        %s147 = smul.addr %s146, 4
        %s148 = scalar_lea.vmem %s1, %s147
      $region16: #{_disc_p_forward.8} parent=11 // pred_fallthru
        _
      // Predicated region
      $region17: #{_disc_p_forward.8} parent=11 // pred_check
        %p149 = pneg %p99
      $region18: #{_disc_p_forward.8} parent=11 // pred_check_branch
        %151 = sbr.rel (%p149) target = $region20
      $region19: #{_disc_p_forward.8} parent=11 // pred_region
        %p152 = scmp.lt.s32.totalorder %s19, 0
        %s153 = scalar_select %p152, %s19, 0
        %s154 = scalar_lea.vmem %s2, %s153
      $region20: #{_disc_p_forward.8} parent=11 // pred_fallthru
        _
    $region12: #{_disc_p_forward.8} parent=5 // pred_fallthru
      _
    %p155 = scmp.lt.s32.totalorder %s9, 4
    // Predicated region
    $region21: #{_disc_p_forward.8} parent=5 // pred_check
      %p156 = pneg %p155
    $region22: #{_disc_p_forward.8} parent=5 // pred_check_branch
      %158 = sbr.rel (%p156) target = $region24
    $region23: #{_disc_p_forward.8} parent=5 // pred_region
      // Predicated region
      $region25: #{_disc_p_forward.8} parent=23 // pred_check
        %p159 = pneg %p41
      $region26: #{_disc_p_forward.8} parent=23 // pred_check_branch
        %161 = sbr.rel (%p159) target = $region28
      $region27: #{_disc_p_forward.8} parent=23 // pred_region
        %p162 = scmp.lt.s32.totalorder %s16, 3
        %s163 = scalar_select %p162, %s16, 3
        %s164 = scalar_lea.vmem %s0, %s163
      $region28: #{_disc_p_forward.8} parent=23 // pred_fallthru
        _
    $region24: #{_disc_p_forward.8} parent=5 // pred_fallthru
      _
    %p165 = scmp.le.s32.totalorder 1, %s9
    %p166 = scmp.lt.s32.totalorder %s9, 5
    %p167 = pnand %p165, %p166
    %p168 = pneg %p167
    // Predicated region
    $region29: #{_disc_p_forward.8} parent=5 // pred_check
      _
    $region30: #{_disc_p_forward.8} parent=5 // pred_check_branch
      %170 = sbr.rel (%p167) target = $region32
    $region31: #{_disc_p_forward.8} parent=5 // pred_region
      %s171 = ssub.s32 %s9, 1
      %p172 = scmp.lt.s32.totalorder %s18, 3
      %s173 = scalar_select %p172, %s18, 3
      %s174 = scalar_lea.vmem %s0, %s173
      %p175 = pneg %p47
      %p176 = pneg %p44
      %p177 = scmp.lt.s32.totalorder %s19, 0
      %s178 = scalar_select %p177, %s19, 0
      %s179 = smul.addr %s178, 4
      %s180 = scalar_lea.vmem %s1, %s179
      %p181 = pneg %p73
      %p182 = pneg %p70
      %p183 = scmp.lt.s32.totalorder %s19, 0
      %s184 = scalar_select %p183, %s19, 0
      %s185 = scalar_lea.vmem %s2, %s184
      %p186 = pneg %p99
      %p187 = pneg %p96
      %p188 = pneg %p127
      %p189 = pneg %p124
      %p190 = scmp.lt.s32.totalorder %s18, 3
      %s191 = scalar_select %p190, %s18, 3
      %p192 = scmp.lt.s32.totalorder %s19, 0
      %s193 = scalar_select %p192, %s19, 0
      %s194 = sadd.s32 %s193, %s191
      %s195 = scalar_lea.vmem %s3, %s194
      %p196 = scmp.lt.s32.totalorder %s18, 3
      %s197 = scalar_select %p196, %s18, 3
      %s198 = scalar_lea.vmem %s0, %s197
      %p199 = scmp.lt.s32.totalorder %s19, 0
      %s200 = scalar_select %p199, %s19, 0
      %s201 = smul.addr %s200, 4
      %s202 = scalar_lea.vmem %s1, %s201
      %p203 = scmp.lt.s32.totalorder %s19, 0
      %s204 = scalar_select %p203, %s19, 0
      %s205 = scalar_lea.vmem %s2, %s204
      %p206 = scmp.lt.s32.totalorder %s18, 3
      %s207 = scalar_select %p206, %s18, 3
      %p208 = scmp.lt.s32.totalorder %s19, 0
      %s209 = scalar_select %p208, %s19, 0
      %s210 = sadd.s32 %s209, %s207
      %s211 = scalar_lea.vmem %s3, %s210
      %v214 = vld [vmem:[%s198] sm:$0x1]
      %v215 = vmul.bf16 %v214, 1045249613
      %v216 = vmax.bf16 %v214, %v215
      %v217 = vld [vmem:[%s202] sm:$0xf]
      %v218 = vld [vmem:[%s202 + $0x4] sm:$0xf]
      %s219 = scalar_lea.vmem %s202, 8
      %v220 = vld [vmem:[%s219] sm:$0xf]
      %v221 = vld [vmem:[%s219 + $0x4] sm:$0xf]
      %v224 = vunpack.c.l.s4 1966171168
      %v225 = vunpack.c.0.s8 %v224
      %v226 = vlaneseq
      %v227 = vshrl.u32 %v226, 7
      %v228 = vsub.s32 %v225, %v227
      %v229 = vrot.slane %v216, %v228
      %v231 = vunpack.c.l.s4 1966171168
      %v232 = vunpack.c.0.s8 %v231
      %v233 = vlaneseq
      %v234 = vshrl.u32 %v233, 7
      %v235 = vsub.s32 %v232, %v234
      %v236 = vrot.slane %v229, %v235
      %237 = vrot.lane.b32.xlu0 %v236, 112
      %v238 = vpop.permute.xlu0 %237
      %v241 = vunpack.c.l.b16 %v220
      %v242 = vunpack.c.l.b16 %v221
      %v243 = vpack.c.b16 %v242, %v241
      %vm245 = vcmask 130048
      %v247 = vsel %vm245, %v238, 0
      %249 = vmatprep.subr.bf16.mxu0 0
      %250 = vmatpush1.bf16.msra.mxu0 %v243
      %251 = vmatprep.subr.bf16.mxu0 0
      %252 = vmatpush1.bf16.msra.mxu0 0
      %253 = vmatprep.subr.bf16.mxu0 0
      %254 = vmatpush1.bf16.msra.mxu0 0
      %255 = vmatprep.subr.bf16.mxu0 0
      %256 = vmatpush1.bf16.msra.mxu0 0
      %257 = vmatprep.subr.bf16.mxu0 0
      %258 = vmatpush1.bf16.msra.mxu0 0
      %259 = vmatprep.subr.bf16.mxu0 0
      %260 = vmatpush1.bf16.msra.mxu0 0
      %261 = vmatprep.subr.bf16.mxu0 0
      %262 = vmatpush1.bf16.msra.mxu0 0
      %263 = vmatprep.subr.bf16.mxu0 0
      %264 = vmatpush1.bf16.msra.mxu0 0
      %265 = vmatprep.subr.bf16.mxu0 0
      %266 = vmatpush1.bf16.msra.mxu0 0
      %267 = vmatprep.subr.bf16.mxu0 0
      %268 = vmatpush1.bf16.msra.mxu0 0
      %269 = vmatprep.subr.bf16.mxu0 0
      %270 = vmatpush1.bf16.msra.mxu0 0
      %271 = vmatprep.subr.bf16.mxu0 0
      %272 = vmatpush1.bf16.msra.mxu0 0
      %273 = vmatprep.subr.bf16.mxu0 0
      %274 = vmatpush1.bf16.msra.mxu0 0
      %275 = vmatprep.subr.bf16.mxu0 0
      %276 = vmatpush1.bf16.msra.mxu0 0
      %277 = vmatprep.subr.bf16.mxu0 0
      %278 = vmatpush1.bf16.msra.mxu0 0
      %279 = vmatprep.subr.bf16.mxu0 0
      %280 = vmatpush1.bf16.msra.mxu0 0
      %281 = vmatprep.mubr.bf16.mxu0 0
      %282 = vmatmul.mubr.bf16.gmra.mrb[0].mxu0 %v247
      %v283 = vpop.f32.mrb[0].mxu0
      %v284 = vadd.f32 0.0, %v283
      %v285 = vpop.f32.mrb[0].mxu0
      %v286 = vpop.f32.mrb[0].mxu0
      %v287 = vpop.f32.mrb[0].mxu0
      %288 = vdwg.mxu0
      %v291 = vunpack.c.l.b16 %v217
      %v292 = vunpack.c.l.b16 %v218
      %v293 = vpack.c.b16 %v292, %v291
      %v296 = vsel %vm245, %v216, 0
      %298 = vmatprep.subr.bf16.mxu0 0
      %299 = vmatpush1.bf16.msra.mxu0 %v293
      %300 = vmatprep.subr.bf16.mxu0 0
      %301 = vmatpush1.bf16.msra.mxu0 0
      %302 = vmatprep.subr.bf16.mxu0 0
      %303 = vmatpush1.bf16.msra.mxu0 0
      %304 = vmatprep.subr.bf16.mxu0 0
      %305 = vmatpush1.bf16.msra.mxu0 0
      %306 = vmatprep.subr.bf16.mxu0 0
      %307 = vmatpush1.bf16.msra.mxu0 0
      %308 = vmatprep.subr.bf16.mxu0 0
      %309 = vmatpush1.bf16.msra.mxu0 0
      %310 = vmatprep.subr.bf16.mxu0 0
      %311 = vmatpush1.bf16.msra.mxu0 0
      %312 = vmatprep.subr.bf16.mxu0 0
      %313 = vmatpush1.bf16.msra.mxu0 0
      %314 = vmatprep.subr.bf16.mxu0 0
      %315 = vmatpush1.bf16.msra.mxu0 0
      %316 = vmatprep.subr.bf16.mxu0 0
      %317 = vmatpush1.bf16.msra.mxu0 0
      %318 = vmatprep.subr.bf16.mxu0 0
      %319 = vmatpush1.bf16.msra.mxu0 0
      %320 = vmatprep.subr.bf16.mxu0 0
      %321 = vmatpush1.bf16.msra.mxu0 0
      %322 = vmatprep.subr.bf16.mxu0 0
      %323 = vmatpush1.bf16.msra.mxu0 0
      %324 = vmatprep.subr.bf16.mxu0 0
      %325 = vmatpush1.bf16.msra.mxu0 0
      %326 = vmatprep.subr.bf16.mxu0 0
      %327 = vmatpush1.bf16.msra.mxu0 0
      %328 = vmatprep.subr.bf16.mxu0 0
      %329 = vmatpush1.bf16.msra.mxu0 0
      %330 = vmatprep.mubr.bf16.mxu0 0
      %331 = vmatmul.mubr.bf16.gmra.mrb[0].mxu0 %v296
      %v332 = vpop.f32.mrb[0].mxu0
      %v333 = vadd.f32 %v284, %v332
      %v334 = vpop.f32.mrb[0].mxu0
      %v335 = vpop.f32.mrb[0].mxu0
      %v336 = vpop.f32.mrb[0].mxu0
      %337 = vdwg.mxu0
      %v338 = vld [vmem:[%s198] sm:$0x1]
      %v339 = vmul.bf16 %v338, 1045249613
      %v340 = vmax.bf16 %v338, %v339
      %s341 = scalar_lea.vmem %s202, 16
      %v342 = vld [vmem:[%s341] sm:$0xf]
      %v343 = vld [vmem:[%s341 + $0x4] sm:$0xf]
      %v346 = vunpack.c.l.s4 1966171168
      %v347 = vunpack.c.0.s8 %v346
      %v348 = vlaneseq
      %v349 = vshrl.u32 %v348, 7
      %v350 = vsub.s32 %v347, %v349
      %v351 = vrot.slane %v340, %v350
      %v353 = vunpack.c.l.s4 1966171168
      %v354 = vunpack.c.0.s8 %v353
      %v355 = vlaneseq
      %v356 = vshrl.u32 %v355, 7
      %v357 = vsub.s32 %v354, %v356
      %v358 = vrot.slane %v351, %v357
      %359 = vrot.lane.b32.xlu0 %v358, 96
      %v360 = vpop.permute.xlu0 %359
      %v363 = vunpack.c.l.b16 %v342
      %v364 = vunpack.c.l.b16 %v343
      %v365 = vpack.c.b16 %v364, %v363
      %v368 = vsel %vm245, %v360, 0
      %370 = vmatprep.subr.bf16.mxu0 0
      %371 = vmatpush1.bf16.msra.mxu0 %v365
      %372 = vmatprep.subr.bf16.mxu0 0
      %373 = vmatpush1.bf16.msra.mxu0 0
      %374 = vmatprep.subr.bf16.mxu0 0
      %375 = vmatpush1.bf16.msra.mxu0 0
      %376 = vmatprep.subr.bf16.mxu0 0
      %377 = vmatpush1.bf16.msra.mxu0 0
      %378 = vmatprep.subr.bf16.mxu0 0
      %379 = vmatpush1.bf16.msra.mxu0 0
      %380 = vmatprep.subr.bf16.mxu0 0
      %381 = vmatpush1.bf16.msra.mxu0 0
      %382 = vmatprep.subr.bf16.mxu0 0
      %383 = vmatpush1.bf16.msra.mxu0 0
      %384 = vmatprep.subr.bf16.mxu0 0
      %385 = vmatpush1.bf16.msra.mxu0 0
      %386 = vmatprep.subr.bf16.mxu0 0
      %387 = vmatpush1.bf16.msra.mxu0 0
      %388 = vmatprep.subr.bf16.mxu0 0
      %389 = vmatpush1.bf16.msra.mxu0 0
      %390 = vmatprep.subr.bf16.mxu0 0
      %391 = vmatpush1.bf16.msra.mxu0 0
      %392 = vmatprep.subr.bf16.mxu0 0
      %393 = vmatpush1.bf16.msra.mxu0 0
      %394 = vmatprep.subr.bf16.mxu0 0
      %395 = vmatpush1.bf16.msra.mxu0 0
      %396 = vmatprep.subr.bf16.mxu0 0
      %397 = vmatpush1.bf16.msra.mxu0 0
      %398 = vmatprep.subr.bf16.mxu0 0
      %399 = vmatpush1.bf16.msra.mxu0 0
      %400 = vmatprep.subr.bf16.mxu0 0
      %401 = vmatpush1.bf16.msra.mxu0 0
      %402 = vmatprep.mubr.bf16.mxu0 0
      %403 = vmatmul.mubr.bf16.gmra.mrb[0].mxu0 %v368
      %v404 = vpop.f32.mrb[0].mxu0
      %v405 = vadd.f32 0.0, %v404
      %v406 = vpop.f32.mrb[0].mxu0
      %v407 = vpop.f32.mrb[0].mxu0
      %v408 = vpop.f32.mrb[0].mxu0
      %409 = vdwg.mxu0
      %v410 = vadd.f32 %v333, %v405
      %v411 = vld [vmem:[%s198] sm:$0x1]
      %v412 = vmul.bf16 %v411, 1045249613
      %v413 = vmax.bf16 %v411, %v412
      %s414 = scalar_lea.vmem %s202, 24
      %v415 = vld [vmem:[%s414] sm:$0xf]
      %v416 = vld [vmem:[%s414 + $0x4] sm:$0xf]
      %v419 = vunpack.c.l.s4 1966171168
      %v420 = vunpack.c.0.s8 %v419
      %v421 = vlaneseq
      %v422 = vshrl.u32 %v421, 7
      %v423 = vsub.s32 %v420, %v422
      %v424 = vrot.slane %v413, %v423
      %v426 = vunpack.c.l.s4 1966171168
      %v427 = vunpack.c.0.s8 %v426
      %v428 = vlaneseq
      %v429 = vshrl.u32 %v428, 7
      %v430 = vsub.s32 %v427, %v429
      %v431 = vrot.slane %v424, %v430
      %v433 = vshrl.u32 %v431, 16
      %v437 = vunpack.c.l.b16 %v415
      %v438 = vunpack.c.l.b16 %v416
      %v439 = vpack.c.b16 %v438, %v437
      %v442 = vsel %vm245, %v433, 0
      %444 = vmatprep.subr.bf16.mxu0 0
      %445 = vmatpush1.bf16.msra.mxu0 %v439
      %446 = vmatprep.subr.bf16.mxu0 0
      %447 = vmatpush1.bf16.msra.mxu0 0
      %448 = vmatprep.subr.bf16.mxu0 0
      %449 = vmatpush1.bf16.msra.mxu0 0
      %450 = vmatprep.subr.bf16.mxu0 0
      %451 = vmatpush1.bf16.msra.mxu0 0
      %452 = vmatprep.subr.bf16.mxu0 0
      %453 = vmatpush1.bf16.msra.mxu0 0
      %454 = vmatprep.subr.bf16.mxu0 0
      %455 = vmatpush1.bf16.msra.mxu0 0
      %456 = vmatprep.subr.bf16.mxu0 0
      %457 = vmatpush1.bf16.msra.mxu0 0
      %458 = vmatprep.subr.bf16.mxu0 0
      %459 = vmatpush1.bf16.msra.mxu0 0
      %460 = vmatprep.subr.bf16.mxu0 0
      %461 = vmatpush1.bf16.msra.mxu0 0
      %462 = vmatprep.subr.bf16.mxu0 0
      %463 = vmatpush1.bf16.msra.mxu0 0
      %464 = vmatprep.subr.bf16.mxu0 0
      %465 = vmatpush1.bf16.msra.mxu0 0
      %466 = vmatprep.subr.bf16.mxu0 0
      %467 = vmatpush1.bf16.msra.mxu0 0
      %468 = vmatprep.subr.bf16.mxu0 0
      %469 = vmatpush1.bf16.msra.mxu0 0
      %470 = vmatprep.subr.bf16.mxu0 0
      %471 = vmatpush1.bf16.msra.mxu0 0
      %472 = vmatprep.subr.bf16.mxu0 0
      %473 = vmatpush1.bf16.msra.mxu0 0
      %474 = vmatprep.subr.bf16.mxu0 0
      %475 = vmatpush1.bf16.msra.mxu0 0
      %476 = vmatprep.mubr.bf16.mxu0 0
      %477 = vmatmul.mubr.bf16.gmra.mrb[0].mxu0 %v442
      %v478 = vpop.f32.mrb[0].mxu0
      %v479 = vadd.f32 0.0, %v478
      %v480 = vpop.f32.mrb[0].mxu0
      %v481 = vpop.f32.mrb[0].mxu0
      %v482 = vpop.f32.mrb[0].mxu0
      %483 = vdwg.mxu0
      %v484 = vadd.f32 %v410, %v479
      %v485 = vld [vmem:[%s198] sm:$0x1]
      %v486 = vmul.bf16 %v485, 1045249613
      %v487 = vmax.bf16 %v485, %v486
      %s488 = scalar_lea.vmem %s202, 32
      %v489 = vld [vmem:[%s488] sm:$0xf]
      %v490 = vld [vmem:[%s488 + $0x4] sm:$0xf]
      %v493 = vunpack.c.l.s4 1966171168
      %v494 = vunpack.c.0.s8 %v493
      %v495 = vlaneseq
      %v496 = vshrl.u32 %v495, 7
      %v497 = vsub.s32 %v494, %v496
      %v498 = vrot.slane %v487, %v497
      %v500 = vunpack.c.l.s4 1966171168
      %v501 = vunpack.c.0.s8 %v500
      %v502 = vlaneseq
      %v503 = vshrl.u32 %v502, 7
      %v504 = vsub.s32 %v501, %v503
      %v505 = vrot.slane %v498, %v504
      %v507 = vshrl.u32 %v505, 16
      %509 = vrot.lane.b32.xlu0 %v507, 112
      %v510 = vpop.permute.xlu0 %509
      %v513 = vunpack.c.l.b16 %v489
      %v514 = vunpack.c.l.b16 %v490
      %v515 = vpack.c.b16 %v514, %v513
      %v518 = vsel %vm245, %v510, 0
      %520 = vmatprep.subr.bf16.mxu0 0
      %521 = vmatpush1.bf16.msra.mxu0 %v515
      %522 = vmatprep.subr.bf16.mxu0 0
      %523 = vmatpush1.bf16.msra.mxu0 0
      %524 = vmatprep.subr.bf16.mxu0 0
      %525 = vmatpush1.bf16.msra.mxu0 0
      %526 = vmatprep.subr.bf16.mxu0 0
      %527 = vmatpush1.bf16.msra.mxu0 0
      %528 = vmatprep.subr.bf16.mxu0 0
      %529 = vmatpush1.bf16.msra.mxu0 0
      %530 = vmatprep.subr.bf16.mxu0 0
      %531 = vmatpush1.bf16.msra.mxu0 0
      %532 = vmatprep.subr.bf16.mxu0 0
      %533 = vmatpush1.bf16.msra.mxu0 0
      %534 = vmatprep.subr.bf16.mxu0 0
      %535 = vmatpush1.bf16.msra.mxu0 0
      %536 = vmatprep.subr.bf16.mxu0 0
      %537 = vmatpush1.bf16.msra.mxu0 0
      %538 = vmatprep.subr.bf16.mxu0 0
      %539 = vmatpush1.bf16.msra.mxu0 0
      %540 = vmatprep.subr.bf16.mxu0 0
      %541 = vmatpush1.bf16.msra.mxu0 0
      %542 = vmatprep.subr.bf16.mxu0 0
      %543 = vmatpush1.bf16.msra.mxu0 0
      %544 = vmatprep.subr.bf16.mxu0 0
      %545 = vmatpush1.bf16.msra.mxu0 0
      %546 = vmatprep.subr.bf16.mxu0 0
      %547 = vmatpush1.bf16.msra.mxu0 0
      %548 = vmatprep.subr.bf16.mxu0 0
      %549 = vmatpush1.bf16.msra.mxu0 0
      %550 = vmatprep.subr.bf16.mxu0 0
      %551 = vmatpush1.bf16.msra.mxu0 0
      %552 = vmatprep.mubr.bf16.mxu0 0
      %553 = vmatmul.mubr.bf16.gmra.mrb[0].mxu0 %v518
      %v554 = vpop.f32.mrb[0].mxu0
      %v555 = vadd.f32 0.0, %v554
      %v556 = vpop.f32.mrb[0].mxu0
      %v557 = vpop.f32.mrb[0].mxu0
      %v558 = vpop.f32.mrb[0].mxu0
      %559 = vdwg.mxu0
      %v560 = vadd.f32 %v484, %v555
      %v561 = vld [vmem:[%s205] sm:$0x1]
      %v562 = vadd.f32 %v560, %v561
      %v563 = vpack.c.bf16 %v562, %v562
      %vm564 = vcmask 122880
      %vm565 = vsmask.f32 256
      %vm566 = vmand %vm564, %vm565
      %v567 = vld [vmem:[%s211] sm:$0x1]
      %v568 = vsel %vm566, %v563, %v567
      %569 = vst [vmem:[%s211] sm:$0x1] %v568
      %p570 = scmp.lt.s32.totalorder %s18, 3
      %s571 = scalar_select %p570, %s18, 3
      %p572 = scmp.lt.s32.totalorder %s19, 0
      %s573 = scalar_select %p572, %s19, 0
      %s574 = sadd.s32 %s573, %s571
      %s575 = scalar_lea.vmem %s3, %s574
      // Predicated region
      $region33: #{_disc_p_forward.8} parent=31 // pred_check
        %p576 = pneg %p124
      $region34: #{_disc_p_forward.8} parent=31 // pred_check_branch
        %578 = sbr.rel (%p576) target = $region36
      $region35: #{_disc_p_forward.8} parent=31 // pred_region
        _
      $region36: #{_disc_p_forward.8} parent=31 // pred_fallthru
        _
    $region32: #{_disc_p_forward.8} parent=5 // pred_fallthru
      _
    %p579 = scmp.le.s32.totalorder 2, %s9
    // Predicated region
    $region37: #{_disc_p_forward.8} parent=5 // pred_check
      %p580 = pneg %p579
    $region38: #{_disc_p_forward.8} parent=5 // pred_check_branch
      %582 = sbr.rel (%p580) target = $region40
    $region39: #{_disc_p_forward.8} parent=5 // pred_region
      %s583 = ssub.s32 %s9, 2
      // Predicated region
      $region41: #{_disc_p_forward.8} parent=39 // pred_check
        %p584 = pneg %p130
      $region42: #{_disc_p_forward.8} parent=39 // pred_check_branch
        %586 = sbr.rel (%p584) target = $region44
      $region43: #{_disc_p_forward.8} parent=39 // pred_region
        %p587 = scmp.lt.s32.totalorder %s20, 3
        %s588 = scalar_select %p587, %s20, 3
        %p589 = scmp.lt.s32.totalorder %s21, 0
        %s590 = scalar_select %p589, %s21, 0
        %s591 = sadd.s32 %s590, %s588
        %s592 = scalar_lea.vmem %s3, %s591
      $region44: #{_disc_p_forward.8} parent=39 // pred_fallthru
        _
    $region40: #{_disc_p_forward.8} parent=5 // pred_fallthru
      _
  $region6: #{_disc_p_forward.8} parent=0 // loop_footer
    %s13 = sadd.s32 1, %s9
  $region7: #{_disc_p_forward.8} parent=0 // loop_footer_branch
    %8 = sbr.rel target = $region3
  $region8: #{_disc_p_forward.8} parent=0 // loop_exit
    _

// kernel: _disc_p_forward.9
$region0: #{_disc_p_forward.9}
  #allocation0 [shape = 'u32[]', space=smem, size = 0x4, offset = 0x4, fixed_abs, tag = 'smem constant byte address 0x4 - core index']
  #allocation1 [shape = 'u32[144,128]{1,0:T(1,128)}', space=vmem, size = 0x12000, scoped, tag = 'internal scratch']
  #allocation2 [shape = 'f32[1,1]{1,0:T(1,128)S(1)}', space=vmem, size = 0x200, scoped, tag = 'scoped memory for _disc_p_forward.9']
  %s0 = inlined_call_operand.vmem [shape: bf16[4,5,16], index: 0, kind: input, shape index: {}]
  %s1 = inlined_call_operand.vmem [shape: bf16[5,16,16], index: 1, kind: input, shape index: {}]
  %s2 = inlined_call_operand.vmem [shape: f32[1,16], index: 2, kind: input, shape index: {}]
  %s3 = inlined_call_operand.vmem [shape: f32[3,1,16], index: 3, kind: input, shape index: {}]
  %s4 = inlined_call_operand.<no memory space> [shape: f32[1,1], index: 4, kind: input, shape index: {}]
  %s5 = inlined_call_operand.vmem [shape: bf16[4,1,16], index: 5, kind: output, shape index: {0}]
  %s6 = inlined_call_operand.vmem [shape: f32[4,1,1], index: 6, kind: output, shape index: {1}]
  %7 = xla_tuple %s5, %s6
  %s8 = sld [smem:[#allocation0]]
  $region61: #{_disc_p_forward.9} parent=0
    _
  %s10 = ssub.s32 1, %s8
  %s11 = scalar_select 0, %s10, %s8
  %v12 = vstv %s4
  %13 = vst [vmem:[#allocation2] sm:$0x1] %v12
  loop: start=0, step=1, limit=6
  $region2: #{_disc_p_forward.9} parent=0 // loop_pre_header
    _
  $region3: #{_disc_p_forward.9} parent=0 // loop_header
    %s15 = sphi 0, %s19
    %p16 = scmp.ge.s32.totalorder %s15, 6
    %s25 = sphi 0, %s27
    %s28 = sphi 0, %s25
    %s29 = sphi 0, %s28
    %s45 = sphi 0, %s29
    %s49 = sphi 0, %s49
    %s51 = sphi 0, %s49
    %s52 = sphi 0, %s51
    %s66 = sphi 0, %s52
    %s70 = sphi 0, %s70
    %s72 = sphi 0, %s70
    %s73 = sphi 0, %s72
    %s87 = sphi 0, %s73
    %s91 = sphi 0, %s91
    %s93 = sphi 0, %s91
    %s94 = sphi 0, %s93
    %s108 = sphi 0, %s94
    %s112 = sphi 0, %s112
    %s114 = sphi 0, %s112
    %s115 = sphi 0, %s114
    %s129 = sphi 0, %s115
    %s135 = sphi 0, %s137
    %s138 = sphi 0, %s135
    %s139 = sphi 0, %s138
    %s155 = sphi 0, %s139
    %s161 = sphi 0, %s163
    %s164 = sphi 0, %s161
    %s165 = sphi 0, %s164
    %s181 = sphi 0, %s165
  $region4: #{_disc_p_forward.9} parent=0 // loop_header_branch
    %18 = sbr.rel (%p16) target = $region8
  $region5: #{_disc_p_forward.9} parent=0 // loop_body
    %s20 = ssub.s32 %s15, 1
    %s21 = ssub.s32 %s15, 2
    %s22 = sadd.s32 %s15, 1
    %s23 = ssub.s32 %s15, %s22
    %p24 = scmp.eq.s32.totalorder %s23, 0
    %s26 = sadd.s32 %s25, 1
    %s27 = scalar_select %p24, %s25, %s26
    %p30 = pneg %p24
    %p31 = scmp.eq.s32.totalorder %s15, 3
    %p32 = por %p30, %p31
    %p33 = scmp.ne.s32.totalorder %s25, %s28
    %p34 = scmp.eq.s32.totalorder %s15, 0
    %p35 = por %p33, %p34
    %p36 = scmp.ne.s32.totalorder %s25, %s28
    %p37 = scmp.eq.s32.totalorder %s20, 3
    %p38 = por %p36, %p37
    %p39 = scmp.ne.s32.totalorder %s28, %s29
    %p40 = scmp.eq.s32.totalorder %s20, 0
    %p41 = por %p39, %p40
    %p42 = scmp.ne.s32.totalorder %s28, %s29
    %p43 = scmp.eq.s32.totalorder %s21, 3
    %p44 = por %p42, %p43
    %p46 = scmp.ne.s32.totalorder %s29, %s45
    %p47 = scmp.eq.s32.totalorder %s21, 0
    %p48 = por %p46, %p47
    %s50 = sadd.s32 %s49, 1
    %p53 = scmp.eq.s32.totalorder %s15, 3
    %p54 = scmp.ne.s32.totalorder %s49, %s51
    %p55 = scmp.eq.s32.totalorder %s15, 0
    %p56 = por %p54, %p55
    %p57 = scmp.ne.s32.totalorder %s49, %s51
    %p58 = scmp.eq.s32.totalorder %s20, 3
    %p59 = por %p57, %p58
    %p60 = scmp.ne.s32.totalorder %s51, %s52
    %p61 = scmp.eq.s32.totalorder %s20, 0
    %p62 = por %p60, %p61
    %p63 = scmp.ne.s32.totalorder %s51, %s52
    %p64 = scmp.eq.s32.totalorder %s21, 3
    %p65 = por %p63, %p64
    %p67 = scmp.ne.s32.totalorder %s52, %s66
    %p68 = scmp.eq.s32.totalorder %s21, 0
    %p69 = por %p67, %p68
    %s71 = sadd.s32 %s70, 1
    %p74 = scmp.eq.s32.totalorder %s15, 3
    %p75 = scmp.ne.s32.totalorder %s70, %s72
    %p76 = scmp.eq.s32.totalorder %s15, 0
    %p77 = por %p75, %p76
    %p78 = scmp.ne.s32.totalorder %s70, %s72
    %p79 = scmp.eq.s32.totalorder %s20, 3
    %p80 = por %p78, %p79
    %p81 = scmp.ne.s32.totalorder %s72, %s73
    %p82 = scmp.eq.s32.totalorder %s20, 0
    %p83 = por %p81, %p82
    %p84 = scmp.ne.s32.totalorder %s72, %s73
    %p85 = scmp.eq.s32.totalorder %s21, 3
    %p86 = por %p84, %p85
    %p88 = scmp.ne.s32.totalorder %s73, %s87
    %p89 = scmp.eq.s32.totalorder %s21, 0
    %p90 = por %p88, %p89
    %s92 = sadd.s32 %s91, 1
    %p95 = scmp.eq.s32.totalorder %s15, 3
    %p96 = scmp.ne.s32.totalorder %s91, %s93
    %p97 = scmp.eq.s32.totalorder %s15, 0
    %p98 = por %p96, %p97
    %p99 = scmp.ne.s32.totalorder %s91, %s93
    %p100 = scmp.eq.s32.totalorder %s20, 3
    %p101 = por %p99, %p100
    %p102 = scmp.ne.s32.totalorder %s93, %s94
    %p103 = scmp.eq.s32.totalorder %s20, 0
    %p104 = por %p102, %p103
    %p105 = scmp.ne.s32.totalorder %s93, %s94
    %p106 = scmp.eq.s32.totalorder %s21, 3
    %p107 = por %p105, %p106
    %p109 = scmp.ne.s32.totalorder %s94, %s108
    %p110 = scmp.eq.s32.totalorder %s21, 0
    %p111 = por %p109, %p110
    %s113 = sadd.s32 %s112, 1
    %p116 = scmp.eq.s32.totalorder %s15, 3
    %p117 = scmp.ne.s32.totalorder %s112, %s114
    %p118 = scmp.eq.s32.totalorder %s15, 0
    %p119 = por %p117, %p118
    %p120 = scmp.ne.s32.totalorder %s112, %s114
    %p121 = scmp.eq.s32.totalorder %s20, 3
    %p122 = por %p120, %p121
    %p123 = scmp.ne.s32.totalorder %s114, %s115
    %p124 = scmp.eq.s32.totalorder %s20, 0
    %p125 = por %p123, %p124
    %p126 = scmp.ne.s32.totalorder %s114, %s115
    %p127 = scmp.eq.s32.totalorder %s21, 3
    %p128 = por %p126, %p127
    %p130 = scmp.ne.s32.totalorder %s115, %s129
    %p131 = scmp.eq.s32.totalorder %s21, 0
    %p132 = por %p130, %p131
    %s133 = ssub.s32 %s15, %s22
    %p134 = scmp.eq.s32.totalorder %s133, 0
    %s136 = sadd.s32 %s135, 1
    %s137 = scalar_select %p134, %s135, %s136
    %p140 = pneg %p134
    %p141 = scmp.eq.s32.totalorder %s15, 3
    %p142 = por %p140, %p141
    %p143 = scmp.ne.s32.totalorder %s135, %s138
    %p144 = scmp.eq.s32.totalorder %s15, 0
    %p145 = por %p143, %p144
    %p146 = scmp.ne.s32.totalorder %s135, %s138
    %p147 = scmp.eq.s32.totalorder %s20, 3
    %p148 = por %p146, %p147
    %p149 = scmp.ne.s32.totalorder %s138, %s139
    %p150 = scmp.eq.s32.totalorder %s20, 0
    %p151 = por %p149, %p150
    %p152 = scmp.ne.s32.totalorder %s138, %s139
    %p153 = scmp.eq.s32.totalorder %s21, 3
    %p154 = por %p152, %p153
    %p156 = scmp.ne.s32.totalorder %s139, %s155
    %p157 = scmp.eq.s32.totalorder %s21, 0
    %p158 = por %p156, %p157
    %s159 = ssub.s32 %s15, %s22
    %p160 = scmp.eq.s32.totalorder %s159, 0
    %s162 = sadd.s32 %s161, 1
    %s163 = scalar_select %p160, %s161, %s162
    %p166 = pneg %p160
    %p167 = scmp.eq.s32.totalorder %s15, 3
    %p168 = por %p166, %p167
    %p169 = scmp.ne.s32.totalorder %s161, %s164
    %p170 = scmp.eq.s32.totalorder %s15, 0
    %p171 = por %p169, %p170
    %p172 = scmp.ne.s32.totalorder %s161, %s164
    %p173 = scmp.eq.s32.totalorder %s20, 3
    %p174 = por %p172, %p173
    %p175 = scmp.ne.s32.totalorder %s164, %s165
    %p176 = scmp.eq.s32.totalorder %s20, 0
    %p177 = por %p175, %p176
    %p178 = scmp.ne.s32.totalorder %s164, %s165
    %p179 = scmp.eq.s32.totalorder %s21, 3
    %p180 = por %p178, %p179
    %p182 = scmp.ne.s32.totalorder %s165, %s181
    %p183 = scmp.eq.s32.totalorder %s21, 0
    %p184 = por %p182, %p183
    %p185 = scmp.le.s32.totalorder 1, %s15
    %p186 = scmp.lt.s32.totalorder %s15, 5
    %p187 = pnand %p185, %p186
    %p188 = pneg %p187
    // Predicated region
    $region9: #{_disc_p_forward.9} parent=5 // pred_check
      _
    $region10: #{_disc_p_forward.9} parent=5 // pred_check_branch
      %190 = sbr.rel (%p187) target = $region12
    $region11: #{_disc_p_forward.9} parent=5 // pred_region
      %s191 = ssub.s32 %s15, 1
      // Predicated region
      $region13: #{_disc_p_forward.9} parent=11 // pred_check
        %p192 = pneg %p62
      $region14: #{_disc_p_forward.9} parent=11 // pred_check_branch
        %194 = sbr.rel (%p192) target = $region16
      $region15: #{_disc_p_forward.9} parent=11 // pred_region
        _
      $region16: #{_disc_p_forward.9} parent=11 // pred_fallthru
        _
      // Predicated region
      $region17: #{_disc_p_forward.9} parent=11 // pred_check
        %p195 = pneg %p83
      $region18: #{_disc_p_forward.9} parent=11 // pred_check_branch
        %197 = sbr.rel (%p195) target = $region20
      $region19: #{_disc_p_forward.9} parent=11 // pred_region
        _
      $region20: #{_disc_p_forward.9} parent=11 // pred_fallthru
        _
      // Predicated region
      $region21: #{_disc_p_forward.9} parent=11 // pred_check
        %p198 = pneg %p104
      $region22: #{_disc_p_forward.9} parent=11 // pred_check_branch
        %200 = sbr.rel (%p198) target = $region24
      $region23: #{_disc_p_forward.9} parent=11 // pred_region
        _
      $region24: #{_disc_p_forward.9} parent=11 // pred_fallthru
        _
      // Predicated region
      $region25: #{_disc_p_forward.9} parent=11 // pred_check
        %p201 = pneg %p125
      $region26: #{_disc_p_forward.9} parent=11 // pred_check_branch
        %203 = sbr.rel (%p201) target = $region28
      $region27: #{_disc_p_forward.9} parent=11 // pred_region
        _
      $region28: #{_disc_p_forward.9} parent=11 // pred_fallthru
        _
    $region12: #{_disc_p_forward.9} parent=5 // pred_fallthru
      _
    %p204 = scmp.lt.s32.totalorder %s15, 4
    // Predicated region
    $region29: #{_disc_p_forward.9} parent=5 // pred_check
      %p205 = pneg %p204
    $region30: #{_disc_p_forward.9} parent=5 // pred_check_branch
      %207 = sbr.rel (%p205) target = $region32
    $region31: #{_disc_p_forward.9} parent=5 // pred_region
      // Predicated region
      $region33: #{_disc_p_forward.9} parent=31 // pred_check
        %p208 = pneg %p35
      $region34: #{_disc_p_forward.9} parent=31 // pred_check_branch
        %210 = sbr.rel (%p208) target = $region36
      $region35: #{_disc_p_forward.9} parent=31 // pred_region
        %p211 = scmp.lt.s32.totalorder %s15, 3
        %s212 = scalar_select %p211, %s15, 3
        %s213 = smul.addr %s212, 4
        %s214 = scalar_lea.vmem %s0, %s213
      $region36: #{_disc_p_forward.9} parent=31 // pred_fallthru
        _
    $region32: #{_disc_p_forward.9} parent=5 // pred_fallthru
      _
    %p215 = scmp.le.s32.totalorder 1, %s15
    %p216 = scmp.lt.s32.totalorder %s15, 5
    %p217 = pnand %p215, %p216
    %p218 = pneg %p217
    // Predicated region
    $region37: #{_disc_p_forward.9} parent=5 // pred_check
      _
    $region38: #{_disc_p_forward.9} parent=5 // pred_check_branch
      %220 = sbr.rel (%p217) target = $region40
    $region39: #{_disc_p_forward.9} parent=5 // pred_region
      %s221 = ssub.s32 %s15, 1
      %p222 = scmp.lt.s32.totalorder %s20, 3
      %s223 = scalar_select %p222, %s20, 3
      %s224 = smul.addr %s223, 4
      %s225 = scalar_lea.vmem %s0, %s224
      %p226 = pneg %p41
      %p227 = pneg %p38
      %p228 = pneg %p62
      %p229 = pneg %p59
      %p230 = pneg %p83
      %p231 = pneg %p80
      %p232 = pneg %p104
      %p233 = pneg %p101
      %p234 = pneg %p125
      %p235 = pneg %p122
      %p236 = pneg %p151
      %p237 = pneg %p148
      %p238 = scmp.lt.s32.totalorder %s20, 3
      %s239 = scalar_select %p238, %s20, 3
      %s240 = scalar_lea.vmem %s5, %s239
      %p241 = pneg %p177
      %p242 = pneg %p174
      %p243 = scmp.lt.s32.totalorder %s20, 3
      %s244 = scalar_select %p243, %s20, 3
      %s245 = scalar_lea.vmem %s6, %s244
      %p246 = scmp.lt.s32.totalorder %s20, 3
      %s247 = scalar_select %p246, %s20, 3
      %s248 = smul.addr %s247, 4
      %s249 = scalar_lea.vmem %s0, %s248
      %p250 = scmp.lt.s32.totalorder %s20, 3
      %s251 = scalar_select %p250, %s20, 3
      %s252 = scalar_lea.vmem %s5, %s251
      %p253 = scmp.lt.s32.totalorder %s20, 3
      %s254 = scalar_select %p253, %s20, 3
      %s255 = scalar_lea.vmem %s6, %s254
      %v258 = vld [vmem:[%s249] sm:$0x1]
      %v259 = vmul.bf16 %v258, 1045249613
      %v260 = vmax.bf16 %v258, %v259
      %v261 = vld [vmem:[%s1] sm:$0xf]
      %v262 = vld [vmem:[%s1 + $0x4] sm:$0xf]
      %s263 = scalar_lea.vmem %s1, 8
      %v264 = vld [vmem:[%s263] sm:$0xf]
      %v265 = vld [vmem:[%s263 + $0x4] sm:$0xf]
      %v267 = vunpack.c.l.b16 %v260
      %v268 = vpack.c.b16 %v267, %v267
      %v270 = vshrl.u32 %v268, 16
      %v274 = vunpack.c.l.b16 %v264
      %v275 = vunpack.c.l.b16 %v265
      %v276 = vpack.c.b16 %v275, %v274
      %vm278 = vcmask 130048
      %v280 = vsel %vm278, %v270, 0
      %282 = vmatprep.subr.bf16.mxu0 0
      %283 = vmatpush1.bf16.msra.mxu0 %v276
      %284 = vmatprep.subr.bf16.mxu0 0
      %285 = vmatpush1.bf16.msra.mxu0 0
      %286 = vmatprep.subr.bf16.mxu0 0
      %287 = vmatpush1.bf16.msra.mxu0 0
      %288 = vmatprep.subr.bf16.mxu0 0
      %289 = vmatpush1.bf16.msra.mxu0 0
      %290 = vmatprep.subr.bf16.mxu0 0
      %291 = vmatpush1.bf16.msra.mxu0 0
      %292 = vmatprep.subr.bf16.mxu0 0
      %293 = vmatpush1.bf16.msra.mxu0 0
      %294 = vmatprep.subr.bf16.mxu0 0
      %295 = vmatpush1.bf16.msra.mxu0 0
      %296 = vmatprep.subr.bf16.mxu0 0
      %297 = vmatpush1.bf16.msra.mxu0 0
      %298 = vmatprep.subr.bf16.mxu0 0
      %299 = vmatpush1.bf16.msra.mxu0 0
      %300 = vmatprep.subr.bf16.mxu0 0
      %301 = vmatpush1.bf16.msra.mxu0 0
      %302 = vmatprep.subr.bf16.mxu0 0
      %303 = vmatpush1.bf16.msra.mxu0 0
      %304 = vmatprep.subr.bf16.mxu0 0
      %305 = vmatpush1.bf16.msra.mxu0 0
      %306 = vmatprep.subr.bf16.mxu0 0
      %307 = vmatpush1.bf16.msra.mxu0 0
      %308 = vmatprep.subr.bf16.mxu0 0
      %309 = vmatpush1.bf16.msra.mxu0 0
      %310 = vmatprep.subr.bf16.mxu0 0
      %311 = vmatpush1.bf16.msra.mxu0 0
      %312 = vmatprep.subr.bf16.mxu0 0
      %313 = vmatpush1.bf16.msra.mxu0 0
      %314 = vmatprep.mubr.bf16.mxu0 0
      %315 = vmatmul.mubr.bf16.gmra.mrb[0].mxu0 %v280
      %v316 = vpop.f32.mrb[0].mxu0
      %v317 = vadd.f32 0.0, %v316
      %v318 = vpop.f32.mrb[0].mxu0
      %v319 = vpop.f32.mrb[0].mxu0
      %v320 = vpop.f32.mrb[0].mxu0
      %321 = vdwg.mxu0
      %v324 = vunpack.c.l.b16 %v261
      %v325 = vunpack.c.l.b16 %v262
      %v326 = vpack.c.b16 %v325, %v324
      %v329 = vsel %vm278, %v260, 0
      %331 = vmatprep.subr.bf16.mxu0 0
      %332 = vmatpush1.bf16.msra.mxu0 %v326
      %333 = vmatprep.subr.bf16.mxu0 0
      %334 = vmatpush1.bf16.msra.mxu0 0
      %335 = vmatprep.subr.bf16.mxu0 0
      %336 = vmatpush1.bf16.msra.mxu0 0
      %337 = vmatprep.subr.bf16.mxu0 0
      %338 = vmatpush1.bf16.msra.mxu0 0
      %339 = vmatprep.subr.bf16.mxu0 0
      %340 = vmatpush1.bf16.msra.mxu0 0
      %341 = vmatprep.subr.bf16.mxu0 0
      %342 = vmatpush1.bf16.msra.mxu0 0
      %343 = vmatprep.subr.bf16.mxu0 0
      %344 = vmatpush1.bf16.msra.mxu0 0
      %345 = vmatprep.subr.bf16.mxu0 0
      %346 = vmatpush1.bf16.msra.mxu0 0
      %347 = vmatprep.subr.bf16.mxu0 0
      %348 = vmatpush1.bf16.msra.mxu0 0
      %349 = vmatprep.subr.bf16.mxu0 0
      %350 = vmatpush1.bf16.msra.mxu0 0
      %351 = vmatprep.subr.bf16.mxu0 0
      %352 = vmatpush1.bf16.msra.mxu0 0
      %353 = vmatprep.subr.bf16.mxu0 0
      %354 = vmatpush1.bf16.msra.mxu0 0
      %355 = vmatprep.subr.bf16.mxu0 0
      %356 = vmatpush1.bf16.msra.mxu0 0
      %357 = vmatprep.subr.bf16.mxu0 0
      %358 = vmatpush1.bf16.msra.mxu0 0
      %359 = vmatprep.subr.bf16.mxu0 0
      %360 = vmatpush1.bf16.msra.mxu0 0
      %361 = vmatprep.subr.bf16.mxu0 0
      %362 = vmatpush1.bf16.msra.mxu0 0
      %363 = vmatprep.mubr.bf16.mxu0 0
      %364 = vmatmul.mubr.bf16.gmra.mrb[0].mxu0 %v329
      %v365 = vpop.f32.mrb[0].mxu0
      %v366 = vadd.f32 %v317, %v365
      %v367 = vpop.f32.mrb[0].mxu0
      %v368 = vpop.f32.mrb[0].mxu0
      %v369 = vpop.f32.mrb[0].mxu0
      %370 = vdwg.mxu0
      %v371 = vld [vmem:[%s249] sm:$0x2]
      %v372 = vmul.bf16 %v371, 1045249613
      %v373 = vmax.bf16 %v371, %v372
      %s374 = scalar_lea.vmem %s1, 16
      %v375 = vld [vmem:[%s374] sm:$0xf]
      %v376 = vld [vmem:[%s374 + $0x4] sm:$0xf]
      %v378 = vunpack.c.l.b16 %v373
      %v379 = vpack.c.b16 %v378, %v378
      %v380 = vrot.slane %v379, 1
      %v383 = vunpack.c.l.b16 %v375
      %v384 = vunpack.c.l.b16 %v376
      %v385 = vpack.c.b16 %v384, %v383
      %v388 = vsel %vm278, %v380, 0
      %390 = vmatprep.subr.bf16.mxu0 0
      %391 = vmatpush1.bf16.msra.mxu0 %v385
      %392 = vmatprep.subr.bf16.mxu0 0
      %393 = vmatpush1.bf16.msra.mxu0 0
      %394 = vmatprep.subr.bf16.mxu0 0
      %395 = vmatpush1.bf16.msra.mxu0 0
      %396 = vmatprep.subr.bf16.mxu0 0
      %397 = vmatpush1.bf16.msra.mxu0 0
      %398 = vmatprep.subr.bf16.mxu0 0
      %399 = vmatpush1.bf16.msra.mxu0 0
      %400 = vmatprep.subr.bf16.mxu0 0
      %401 = vmatpush1.bf16.msra.mxu0 0
      %402 = vmatprep.subr.bf16.mxu0 0
      %403 = vmatpush1.bf16.msra.mxu0 0
      %404 = vmatprep.subr.bf16.mxu0 0
      %405 = vmatpush1.bf16.msra.mxu0 0
      %406 = vmatprep.subr.bf16.mxu0 0
      %407 = vmatpush1.bf16.msra.mxu0 0
      %408 = vmatprep.subr.bf16.mxu0 0
      %409 = vmatpush1.bf16.msra.mxu0 0
      %410 = vmatprep.subr.bf16.mxu0 0
      %411 = vmatpush1.bf16.msra.mxu0 0
      %412 = vmatprep.subr.bf16.mxu0 0
      %413 = vmatpush1.bf16.msra.mxu0 0
      %414 = vmatprep.subr.bf16.mxu0 0
      %415 = vmatpush1.bf16.msra.mxu0 0
      %416 = vmatprep.subr.bf16.mxu0 0
      %417 = vmatpush1.bf16.msra.mxu0 0
      %418 = vmatprep.subr.bf16.mxu0 0
      %419 = vmatpush1.bf16.msra.mxu0 0
      %420 = vmatprep.subr.bf16.mxu0 0
      %421 = vmatpush1.bf16.msra.mxu0 0
      %422 = vmatprep.mubr.bf16.mxu0 0
      %423 = vmatmul.mubr.bf16.gmra.mrb[0].mxu0 %v388
      %v424 = vpop.f32.mrb[0].mxu0
      %v425 = vadd.f32 0.0, %v424
      %v426 = vpop.f32.mrb[0].mxu0
      %v427 = vpop.f32.mrb[0].mxu0
      %v428 = vpop.f32.mrb[0].mxu0
      %429 = vdwg.mxu0
      %v430 = vadd.f32 %v366, %v425
      %s431 = scalar_lea.vmem %s1, 24
      %v432 = vld [vmem:[%s431] sm:$0xf]
      %v433 = vld [vmem:[%s431 + $0x4] sm:$0xf]
      %v435 = vshrl.u32 %v379, 16
      %v437 = vrot.slane %v435, 1
      %v440 = vunpack.c.l.b16 %v432
      %v441 = vunpack.c.l.b16 %v433
      %v442 = vpack.c.b16 %v441, %v440
      %v445 = vsel %vm278, %v437, 0
      %447 = vmatprep.subr.bf16.mxu0 0
      %448 = vmatpush1.bf16.msra.mxu0 %v442
      %449 = vmatprep.subr.bf16.mxu0 0
      %450 = vmatpush1.bf16.msra.mxu0 0
      %451 = vmatprep.subr.bf16.mxu0 0
      %452 = vmatpush1.bf16.msra.mxu0 0
      %453 = vmatprep.subr.bf16.mxu0 0
      %454 = vmatpush1.bf16.msra.mxu0 0
      %455 = vmatprep.subr.bf16.mxu0 0
      %456 = vmatpush1.bf16.msra.mxu0 0
      %457 = vmatprep.subr.bf16.mxu0 0
      %458 = vmatpush1.bf16.msra.mxu0 0
      %459 = vmatprep.subr.bf16.mxu0 0
      %460 = vmatpush1.bf16.msra.mxu0 0
      %461 = vmatprep.subr.bf16.mxu0 0
      %462 = vmatpush1.bf16.msra.mxu0 0
      %463 = vmatprep.subr.bf16.mxu0 0
      %464 = vmatpush1.bf16.msra.mxu0 0
      %465 = vmatprep.subr.bf16.mxu0 0
      %466 = vmatpush1.bf16.msra.mxu0 0
      %467 = vmatprep.subr.bf16.mxu0 0
      %468 = vmatpush1.bf16.msra.mxu0 0
      %469 = vmatprep.subr.bf16.mxu0 0
      %470 = vmatpush1.bf16.msra.mxu0 0
      %471 = vmatprep.subr.bf16.mxu0 0
      %472 = vmatpush1.bf16.msra.mxu0 0
      %473 = vmatprep.subr.bf16.mxu0 0
      %474 = vmatpush1.bf16.msra.mxu0 0
      %475 = vmatprep.subr.bf16.mxu0 0
      %476 = vmatpush1.bf16.msra.mxu0 0
      %477 = vmatprep.subr.bf16.mxu0 0
      %478 = vmatpush1.bf16.msra.mxu0 0
      %479 = vmatprep.mubr.bf16.mxu0 0
      %480 = vmatmul.mubr.bf16.gmra.mrb[0].mxu0 %v445
      %v481 = vpop.f32.mrb[0].mxu0
      %v482 = vadd.f32 0.0, %v481
      %v483 = vpop.f32.mrb[0].mxu0
      %v484 = vpop.f32.mrb[0].mxu0
      %v485 = vpop.f32.mrb[0].mxu0
      %486 = vdwg.mxu0
      %v487 = vadd.f32 %v430, %v482
      %v488 = vld [vmem:[%s249] sm:$0x4]
      %v489 = vmul.bf16 %v488, 1045249613
      %v490 = vmax.bf16 %v488, %v489
      %s491 = scalar_lea.vmem %s1, 32
      %v492 = vld [vmem:[%s491] sm:$0xf]
      %v493 = vld [vmem:[%s491 + $0x4] sm:$0xf]
      %v495 = vunpack.c.l.b16 %v490
      %v496 = vpack.c.b16 %v495, %v495
      %v497 = vrot.slane %v496, 2
      %v500 = vunpack.c.l.b16 %v492
      %v501 = vunpack.c.l.b16 %v493
      %v502 = vpack.c.b16 %v501, %v500
      %v505 = vsel %vm278, %v497, 0
      %507 = vmatprep.subr.bf16.mxu0 0
      %508 = vmatpush1.bf16.msra.mxu0 %v502
      %509 = vmatprep.subr.bf16.mxu0 0
      %510 = vmatpush1.bf16.msra.mxu0 0
      %511 = vmatprep.subr.bf16.mxu0 0
      %512 = vmatpush1.bf16.msra.mxu0 0
      %513 = vmatprep.subr.bf16.mxu0 0
      %514 = vmatpush1.bf16.msra.mxu0 0
      %515 = vmatprep.subr.bf16.mxu0 0
      %516 = vmatpush1.bf16.msra.mxu0 0
      %517 = vmatprep.subr.bf16.mxu0 0
      %518 = vmatpush1.bf16.msra.mxu0 0
      %519 = vmatprep.subr.bf16.mxu0 0
      %520 = vmatpush1.bf16.msra.mxu0 0
      %521 = vmatprep.subr.bf16.mxu0 0
      %522 = vmatpush1.bf16.msra.mxu0 0
      %523 = vmatprep.subr.bf16.mxu0 0
      %524 = vmatpush1.bf16.msra.mxu0 0
      %525 = vmatprep.subr.bf16.mxu0 0
      %526 = vmatpush1.bf16.msra.mxu0 0
      %527 = vmatprep.subr.bf16.mxu0 0
      %528 = vmatpush1.bf16.msra.mxu0 0
      %529 = vmatprep.subr.bf16.mxu0 0
      %530 = vmatpush1.bf16.msra.mxu0 0
      %531 = vmatprep.subr.bf16.mxu0 0
      %532 = vmatpush1.bf16.msra.mxu0 0
      %533 = vmatprep.subr.bf16.mxu0 0
      %534 = vmatpush1.bf16.msra.mxu0 0
      %535 = vmatprep.subr.bf16.mxu0 0
      %536 = vmatpush1.bf16.msra.mxu0 0
      %537 = vmatprep.subr.bf16.mxu0 0
      %538 = vmatpush1.bf16.msra.mxu0 0
      %539 = vmatprep.mubr.bf16.mxu0 0
      %540 = vmatmul.mubr.bf16.gmra.mrb[0].mxu0 %v505
      %v541 = vpop.f32.mrb[0].mxu0
      %v542 = vadd.f32 0.0, %v541
      %v543 = vpop.f32.mrb[0].mxu0
      %v544 = vpop.f32.mrb[0].mxu0
      %v545 = vpop.f32.mrb[0].mxu0
      %546 = vdwg.mxu0
      %v547 = vadd.f32 %v487, %v542
      %v548 = vld [vmem:[%s2] sm:$0x1]
      %v549 = vadd.f32 %v547, %v548
      %v550 = vpack.c.bf16 %v549, %v549
      %vm551 = vcmask 122880
      %vm552 = vsmask.f32 256
      %vm553 = vmand %vm551, %vm552
      %v554 = vld [vmem:[%s252] sm:$0x1]
      %v555 = vsel %vm553, %v550, %v554
      %556 = vst [vmem:[%s252] sm:$0x1] %v555
      %v557 = vmul.f32 %v549, 0.2
      %v558 = vmax.f32 %v549, %v557
      %s559 = scalar_lea.vmem %s3, 1
      %v560 = vld [vmem:[%s559] sm:$0x1]
      %v561 = vmul.f32 %v558, %v560
      %vm562 = vcmask 122880
      %v563 = vsel %vm562, %v561, 0.0
      %564 = vadd.xlane.f32.xlu0 %v563
      %v565 = vpop.xlane.xlu0 %564
      %v566 = vld [vmem:[#allocation2] sm:$0x1]
      %v567 = vadd.f32 %v565, %v566
      %vm568 = vcmask 0
      %569 = vst.msk [vmem:[%s255] sm:$0x1] %vm568, %v567
      %p570 = scmp.lt.s32.totalorder %s20, 3
      %s571 = scalar_select %p570, %s20, 3
      %s572 = scalar_lea.vmem %s5, %s571
      %p573 = scmp.lt.s32.totalorder %s20, 3
      %s574 = scalar_select %p573, %s20, 3
      %s575 = scalar_lea.vmem %s6, %s574
      // Predicated region
      $region41: #{_disc_p_forward.9} parent=39 // pred_check
        %p576 = pneg %p148
      $region42: #{_disc_p_forward.9} parent=39 // pred_check_branch
        %578 = sbr.rel (%p576) target = $region44
      $region43: #{_disc_p_forward.9} parent=39 // pred_region
        _
      $region44: #{_disc_p_forward.9} parent=39 // pred_fallthru
        _
      // Predicated region
      $region45: #{_disc_p_forward.9} parent=39 // pred_check
        %p579 = pneg %p174
      $region46: #{_disc_p_forward.9} parent=39 // pred_check_branch
        %581 = sbr.rel (%p579) target = $region48
      $region47: #{_disc_p_forward.9} parent=39 // pred_region
        _
      $region48: #{_disc_p_forward.9} parent=39 // pred_fallthru
        _
    $region40: #{_disc_p_forward.9} parent=5 // pred_fallthru
      _
    %p582 = scmp.le.s32.totalorder 2, %s15
    // Predicated region
    $region49: #{_disc_p_forward.9} parent=5 // pred_check
      %p583 = pneg %p582
    $region50: #{_disc_p_forward.9} parent=5 // pred_check_branch
      %585 = sbr.rel (%p583) target = $region52
    $region51: #{_disc_p_forward.9} parent=5 // pred_region
      %s586 = ssub.s32 %s15, 2
      // Predicated region
      $region53: #{_disc_p_forward.9} parent=51 // pred_check
        %p587 = pneg %p154
      $region54: #{_disc_p_forward.9} parent=51 // pred_check_branch
        %589 = sbr.rel (%p587) target = $region56
      $region55: #{_disc_p_forward.9} parent=51 // pred_region
        %p590 = scmp.lt.s32.totalorder %s21, 3
        %s591 = scalar_select %p590, %s21, 3
        %s592 = scalar_lea.vmem %s5, %s591
      $region56: #{_disc_p_forward.9} parent=51 // pred_fallthru
        _
      // Predicated region
      $region57: #{_disc_p_forward.9} parent=51 // pred_check
        %p593 = pneg %p180
      $region58: #{_disc_p_forward.9} parent=51 // pred_check_branch
        %595 = sbr.rel (%p593) target = $region60
      $region59: #{_disc_p_forward.9} parent=51 // pred_region
        %p596 = scmp.lt.s32.totalorder %s21, 3
        %s597 = scalar_select %p596, %s21, 3
        %s598 = scalar_lea.vmem %s6, %s597
      $region60: #{_disc_p_forward.9} parent=51 // pred_fallthru
        _
    $region52: #{_disc_p_forward.9} parent=5 // pred_fallthru
      _
  $region6: #{_disc_p_forward.9} parent=0 // loop_footer
    %s19 = sadd.s32 1, %s15
  $region7: #{_disc_p_forward.9} parent=0 // loop_footer_branch
    %14 = sbr.rel target = $region3
  $region8: #{_disc_p_forward.9} parent=0 // loop_exit
    _

</llo_original>
